<compile_context>
chip_gen: v6e
topology: v6e:2x2x1
jax: 0.10.0
libtpu: 0.0.40
codegen_flags: <defaults>
</compile_context>

<pallas_src>
import functools

import jax
import jax.numpy as jnp
import numpy as np
from jax.experimental import pallas as pl
from jax.experimental.pallas import tpu as pltpu

BN_EPS = 1e-05
_PREC = jax.lax.Precision.HIGHEST      # reference only
_COMPUTE_DTYPE = jnp.bfloat16          # MXU-native on v5e / v6e / v7x
_PAD_OFF = 16                          # sublane-aligned interior column offset in halo buffer


def _fold_bn(gamma, beta, mean, var):
    """Eval-mode BatchNorm folded to per-channel scale/bias, shaped (1, C) for lane broadcast."""
    g = gamma.astype(jnp.float32)
    b = beta.astype(jnp.float32)
    m = mean.astype(jnp.float32)
    v = var.astype(jnp.float32)
    s = g / jnp.sqrt(v + BN_EPS)
    return s.reshape(1, -1), (b - m * s).reshape(1, -1)


def prepare_block_params(p):
    """One-time per-block weight prep: matmul layout (K, Cout) in bf16, folded BN in f32."""
    cdt = _COMPUTE_DTYPE
    Wb = int(p["a_w"].shape[0])
    q = {
        "wa": jnp.transpose(p["a_w"][:, :, 0, 0]).astype(cdt),                        # (Cin, Wb)
        "wb": jnp.transpose(p["b_w"], (2, 3, 1, 0)).reshape(9 * Wb, Wb).astype(cdt),  # (9*Wb, Wb)
        "wc": jnp.transpose(p["c_w"][:, :, 0, 0]).astype(cdt),                        # (Wb, Wout)
    }
    q["sa"], q["ba"] = _fold_bn(*p["a_bn"])
    q["sb"], q["bb"] = _fold_bn(*p["b_bn"])
    q["sc"], q["bc"] = _fold_bn(*p["c_bn"])
    if "p_w" in p:
        q["wp"] = jnp.transpose(p["p_w"][:, :, 0, 0]).astype(cdt)                     # (Cin, Wout)
        q["sp"], q["bp"] = _fold_bn(*p["p_bn"])
    return q


# ---------------------------------------------------------------------------
# Kernel: one bottleneck ResBlock, one batch image per grid step (NHWC).
# ---------------------------------------------------------------------------
def _make_block_kernel(H, W, Ho, Wo, Cin, Wb, Wout, stride, proj, alpha_in, alpha_out):
    f32 = jnp.float32
    cdt = _COMPUTE_DTYPE
    OFF = _PAD_OFF          # buffer column of padded col 1 (interior start), sublane aligned
    c_lo = OFF - 1          # buffer column of padded col 0   (left halo)
    c_hi = OFF + W          # buffer column of padded col W+1 (right halo)

    def kernel(*refs):
        if proj:
            (x_ref, wa_ref, wb_ref, wc_ref, wp_ref,
             sa_ref, ba_ref, sb_ref, bb_ref, sc_ref, bc_ref, sp_ref, bp_ref,
             o_ref, pad_ref) = refs
        else:
            (x_ref, wa_ref, wb_ref, wc_ref,
             sa_ref, ba_ref, sb_ref, bb_ref, sc_ref, bc_ref,
             o_ref, pad_ref) = refs
            wp_ref = sp_ref = bp_ref = None

        # Zero only the 1-element halo the taps can read; interior is fully overwritten
        # below.  (Kept per-step on purpose: with a "parallel" batch axis on a dual-core
        # chip only one core ever sees program_id==0, so zero-once would be unsafe.)
        pad_ref[0:1, c_lo:c_hi + 1, :] = jnp.zeros((1, W + 2, Wb), f32)
        pad_ref[H + 1:H + 2, c_lo:c_hi + 1, :] = jnp.zeros((1, W + 2, Wb), f32)
        pad_ref[:, c_lo:c_lo + 1, :] = jnp.zeros((H + 2, 1, Wb), f32)
        pad_ref[:, c_hi:c_hi + 1, :] = jnp.zeros((H + 2, 1, Wb), f32)

        x = x_ref[...]                                                # (H, W, Cin)

        # ---- a: 1x1 conv + BN + relup  (single big-K bf16 MXU matmul, K = Cin) ----
        ya = jnp.dot(x.reshape(H * W, Cin).astype(cdt), wa_ref[...],
                     preferred_element_type=f32)                      # (H*W, Wb) f32
        ya = jnp.maximum(ya * sa_ref[...] + ba_ref[...], alpha_in)

        # ---- b: 3x3 conv (stride s, pad 1) + BN + relup ----
        # Sublane-aligned interior store; 9 taps accumulated as an SSA sum of bf16 dots.
        pad_ref[1:H + 1, OFF:OFF + W, :] = ya.reshape(H, W, Wb)
        acc = None
        for kh in range(3):
            for kw in range(3):
                c0 = c_lo + kw
                if stride == 1:
                    patch = pad_ref[kh:kh + Ho, c0:c0 + Wo, :]
                else:
                    patch = pad_ref[pl.ds(kh, Ho, stride), pl.ds(c0, Wo, stride), :]
                t = kh * 3 + kw
                tap = jnp.dot(patch.reshape(Ho * Wo, Wb).astype(cdt),
                              wb_ref[t * Wb:(t + 1) * Wb, :],
                              preferred_element_type=f32)             # (Ho*Wo, Wb)
                acc = tap if acc is None else acc + tap
        yb = jnp.maximum(acc * sb_ref[...] + bb_ref[...], alpha_in)

        # ---- c: 1x1 conv + BN ----
        yc = jnp.dot(yb.astype(cdt), wc_ref[...],
                     preferred_element_type=f32)                      # (Ho*Wo, Wout)
        yc = yc * sc_ref[...] + bc_ref[...]

        # ---- residual branch ----
        if proj:
            if stride == 1:
                xs = x
            else:
                xs = x_ref[pl.ds(0, Ho, stride), pl.ds(0, Wo, stride), :]
            res = jnp.dot(xs.reshape(Ho * Wo, Cin).astype(cdt), wp_ref[...],
                          preferred_element_type=f32)
            res = res * sp_ref[...] + bp_ref[...]
        else:
            res = x.reshape(Ho * Wo, Cin).astype(f32)     # Cin == Wout, stride == 1 here

        out = jnp.maximum(res + yc, alpha_out)
        o_ref[...] = out.reshape(Ho, Wo, Wout).astype(o_ref.dtype)

    return kernel


# ---------------------------------------------------------------------------
# Wrapper for one ResBlock (NHWC in / NHWC out, bf16 activations out).
# ---------------------------------------------------------------------------
def _bottleneck_block(x_nhwc, q, *, stride, relup_):
    N, H, W, Cin = (int(s) for s in x_nhwc.shape)
    Wb = int(q["wa"].shape[1])
    Wout = int(q["wc"].shape[1])
    Ho = (H - 1) // stride + 1
    Wo = (W - 1) // stride + 1
    proj = "wp" in q
    assert proj == ((Cin != Wout) or (stride != 1))

    alpha_in = 0.014 if (relup_ and Wout == 256) else 0.0
    alpha_out = 0.014 if (relup_ and Wout != 2048) else 0.0

    # Keep strided sublane reads (stride-2 taps / residual) on 32-bit refs.
    in_dtype = _COMPUTE_DTYPE if stride == 1 else jnp.float32
    x_nhwc = x_nhwc.astype(in_dtype)

    def _const_spec(arr):
        # Constant-index operand: single-buffered (weights / folded BN never change).
        shape = tuple(int(s) for s in arr.shape)
        nd = len(shape)
        return pl.BlockSpec(shape, lambda *_: (0,) * nd, pipeline_mode=pl.Buffered(1))

    inputs = [x_nhwc, q["wa"], q["wb"], q["wc"]]
    in_specs = [
        pl.BlockSpec((None, H, W, Cin), lambda n: (n, 0, 0, 0)),
        _const_spec(q["wa"]), _const_spec(q["wb"]), _const_spec(q["wc"]),
    ]
    if proj:
        inputs.append(q["wp"])
        in_specs.append(_const_spec(q["wp"]))
        sb_names = ("sa", "ba", "sb", "bb", "sc", "bc", "sp", "bp")
    else:
        sb_names = ("sa", "ba", "sb", "bb", "sc", "bc")
    for name in sb_names:
        inputs.append(q[name])
        in_specs.append(_const_spec(q[name]))

    kernel = _make_block_kernel(H, W, Ho, Wo, Cin, Wb, Wout, stride, proj,
                                alpha_in, alpha_out)

    return pl.pallas_call(
        kernel,
        out_shape=jax.ShapeDtypeStruct((N, Ho, Wo, Wout), _COMPUTE_DTYPE),
        grid_spec=pltpu.PrefetchScalarGridSpec(
            num_scalar_prefetch=0,
            grid=(N,),
            in_specs=in_specs,
            out_specs=pl.BlockSpec((None, Ho, Wo, Wout), lambda n: (n, 0, 0, 0)),
            scratch_shapes=[
                pltpu.VMEM((H + 2, W + _PAD_OFF + 1, Wb), jnp.float32),  # zero-halo 3x3 buffer
            ],
        ),
        compiler_params=pltpu.CompilerParams(
            dimension_semantics=("parallel",),
            vmem_limit_bytes=64 * 1024 * 1024,
        ),
    )(*inputs)


def res_stage(x_nchw, blocks, *, stride, relup_=False):
    """ResStage forward (eval-mode BN). x_nchw: (N, w_in, H, W); blocks: per-block param dicts."""
    prepared = [prepare_block_params(p) for p in blocks]   # one-time weight prep (hoistable)
    x = jnp.transpose(x_nchw, (0, 2, 3, 1))                # NHWC: channels on lanes
    for i, q in enumerate(prepared):
        b_stride = stride if i == 0 else 1
        x = _bottleneck_block(x, q, stride=b_stride, relup_=relup_)
    return jnp.transpose(x, (0, 3, 1, 2)).astype(jnp.float32)   # back to NCHW, f32


# ---------------------------------------------------------------------------
# Pure-JAX reference mirroring the PyTorch module (eval-mode BN, f32 HIGHEST).
# ---------------------------------------------------------------------------
def _reference_stage(x, blocks, *, stride, relup_=False):
    def conv(a, w, s, pad):
        return jax.lax.conv_general_dilated(
            a, w, (s, s), ((pad, pad), (pad, pad)),
            dimension_numbers=("NCHW", "OIHW", "NCHW"), precision=_PREC)

    def bn(a, params):
        g, b, m, v = params
        s = g / jnp.sqrt(v + BN_EPS)
        return a * s.reshape(1, -1, 1, 1) + (b - m * s).reshape(1, -1, 1, 1)

    for i, p in enumerate(blocks):
        s_blk = stride if i == 0 else 1
        Cin = x.shape[1]
        Wout = p["c_w"].shape[0]
        a_in = 0.014 if (relup_ and Wout == 256) else 0.0
        a_out = 0.014 if (relup_ and Wout != 2048) else 0.0
        y = jnp.maximum(bn(conv(x, p["a_w"], 1, 0), p["a_bn"]), a_in)
        y = jnp.maximum(bn(conv(y, p["b_w"], s_blk, 1), p["b_bn"]), a_in)
        y = bn(conv(y, p["c_w"], 1, 0), p["c_bn"])
        if (Cin != Wout) or (s_blk != 1):
            r = bn(conv(x, p["p_w"], s_blk, 0), p["p_bn"])
        else:
            r = x
        x = jnp.maximum(r + y, a_out)
    return x


if __name__ == "__main__":
    N, H, W = 2, 16, 16
    w_in, w_out, w_b = 16, 32, 8
    stride, d, relup_ = 2, 2, False

    key = jax.random.PRNGKey(0)

    def bn_params(k, C):
        k1, k2, k3, k4 = jax.random.split(k, 4)
        return (1.0 + 0.1 * jax.random.normal(k1, (C,), jnp.float32),
                0.1 * jax.random.normal(k2, (C,), jnp.float32),
                0.1 * jax.random.normal(k3, (C,), jnp.float32),
                jax.random.uniform(k4, (C,), jnp.float32, minval=0.5, maxval=1.5))

    def conv_w(k, cout, cin, ks):
        return 0.1 * jax.random.normal(k, (cout, cin, ks, ks), jnp.float32)

    blocks = []
    for i in range(d):
        b_in = w_in if i == 0 else w_out
        b_stride = stride if i == 0 else 1
        key, ka, kb, kc, kp, kba, kbb, kbc, kbp = jax.random.split(key, 9)
        p = {
            "a_w": conv_w(ka, w_b, b_in, 1), "a_bn": bn_params(kba, w_b),
            "b_w": conv_w(kb, w_b, w_b, 3), "b_bn": bn_params(kbb, w_b),
            "c_w": conv_w(kc, w_out, w_b, 1), "c_bn": bn_params(kbc, w_out),
        }
        if (b_in != w_out) or (b_stride != 1):
            p["p_w"] = conv_w(kp, w_out, b_in, 1)
            p["p_bn"] = bn_params(kbp, w_out)
        blocks.append(p)

    key, kx = jax.random.split(key)
    x = jax.random.normal(kx, (N, w_in, H, W), jnp.float32)

    run = jax.jit(functools.partial(res_stage, stride=stride, relup_=relup_))
    out = jax.block_until_ready(run(x, blocks))
    assert out.shape == (N, w_out, H // stride, W // stride), out.shape

    ref = _reference_stage(x, blocks, stride=stride, relup_=relup_)
    # bf16 MXU matmuls (f32 accumulation) vs. f32 HIGHEST reference -> looser tolerance.
    np.testing.assert_allclose(np.asarray(out), np.asarray(ref), rtol=5e-2, atol=5e-2)

    print("KERNEL_OK")
</pallas_src>

<mosaic_0001>
module attributes {stable_mosaic.version = 11 : i64} {
  func.func @kernel(%arg0: i32, %arg1: memref<1x8x8x32xbf16, #tpu.memory_space<vmem>>, %arg2: memref<32x8xbf16, #tpu.memory_space<vmem>>, %arg3: memref<72x8xbf16, #tpu.memory_space<vmem>>, %arg4: memref<8x32xbf16, #tpu.memory_space<vmem>>, %arg5: memref<1x8xf32, #tpu.memory_space<vmem>>, %arg6: memref<1x8xf32, #tpu.memory_space<vmem>>, %arg7: memref<1x8xf32, #tpu.memory_space<vmem>>, %arg8: memref<1x8xf32, #tpu.memory_space<vmem>>, %arg9: memref<1x32xf32, #tpu.memory_space<vmem>>, %arg10: memref<1x32xf32, #tpu.memory_space<vmem>>, %arg11: memref<1x8x8x32xbf16, #tpu.memory_space<vmem>>, %arg12: memref<10x25x8xf32, #tpu.memory_space<vmem>>) attributes {dimension_semantics = [#tpu.dimension_semantics<parallel>], iteration_bounds = array<i64: 2>, scalar_prefetch = 0 : i64, scratch_operands = 1 : i64, tpu.core_type = #tpu.core_type<tc>, window_params = [{transform_indices = @transform_0, window_bounds = array<i64: 1, 8, 8, 32>}, {pipeline_mode = #tpu.pipeline_mode<synchronous>, transform_indices = @transform_1, window_bounds = array<i64: 32, 8>}, {pipeline_mode = #tpu.pipeline_mode<synchronous>, transform_indices = @transform_2, window_bounds = array<i64: 72, 8>}, {pipeline_mode = #tpu.pipeline_mode<synchronous>, transform_indices = @transform_3, window_bounds = array<i64: 8, 32>}, {pipeline_mode = #tpu.pipeline_mode<synchronous>, transform_indices = @transform_4, window_bounds = array<i64: 1, 8>}, {pipeline_mode = #tpu.pipeline_mode<synchronous>, transform_indices = @transform_5, window_bounds = array<i64: 1, 8>}, {pipeline_mode = #tpu.pipeline_mode<synchronous>, transform_indices = @transform_6, window_bounds = array<i64: 1, 8>}, {pipeline_mode = #tpu.pipeline_mode<synchronous>, transform_indices = @transform_7, window_bounds = array<i64: 1, 8>}, {pipeline_mode = #tpu.pipeline_mode<synchronous>, transform_indices = @transform_8, window_bounds = array<i64: 1, 32>}, {pipeline_mode = #tpu.pipeline_mode<synchronous>, transform_indices = @transform_9, window_bounds = array<i64: 1, 32>}, {transform_indices = @transform_10, window_bounds = array<i64: 1, 8, 8, 32>}]} {
    %cst = arith.constant 0.000000e+00 : f32
    %0 = vector.broadcast %cst : f32 to vector<1x10x8xf32>
    %c0 = arith.constant 0 : index
    %c15 = arith.constant 15 : index
    %c0_0 = arith.constant 0 : index
    %1 = vector.load %arg12[%c0, %c15, %c0_0] : memref<10x25x8xf32, #tpu.memory_space<vmem>>, vector<1x10x8xf32>
    tpu.vector_store %arg12[%c0, %c15, %c0_0], %0 {strides = array<i32>} : memref<10x25x8xf32, #tpu.memory_space<vmem>>, vector<1x10x8xf32>,
    %cst_1 = arith.constant 0.000000e+00 : f32
    %2 = vector.broadcast %cst_1 : f32 to vector<1x10x8xf32>
    %c9 = arith.constant 9 : index
    %c15_2 = arith.constant 15 : index
    %c0_3 = arith.constant 0 : index
    %3 = vector.load %arg12[%c9, %c15_2, %c0_3] : memref<10x25x8xf32, #tpu.memory_space<vmem>>, vector<1x10x8xf32>
    tpu.vector_store %arg12[%c9, %c15_2, %c0_3], %2 {strides = array<i32>} : memref<10x25x8xf32, #tpu.memory_space<vmem>>, vector<1x10x8xf32>,
    %cst_4 = arith.constant 0.000000e+00 : f32
    %4 = vector.broadcast %cst_4 : f32 to vector<10x1x8xf32>
    %c0_5 = arith.constant 0 : index
    %c15_6 = arith.constant 15 : index
    %c0_7 = arith.constant 0 : index
    %5 = vector.load %arg12[%c0_5, %c15_6, %c0_7] : memref<10x25x8xf32, #tpu.memory_space<vmem>>, vector<10x1x8xf32>
    tpu.vector_store %arg12[%c0_5, %c15_6, %c0_7], %4 {strides = array<i32>} : memref<10x25x8xf32, #tpu.memory_space<vmem>>, vector<10x1x8xf32>,
    %cst_8 = arith.constant 0.000000e+00 : f32
    %6 = vector.broadcast %cst_8 : f32 to vector<10x1x8xf32>
    %c0_9 = arith.constant 0 : index
    %c24 = arith.constant 24 : index
    %c0_10 = arith.constant 0 : index
    %7 = vector.load %arg12[%c0_9, %c24, %c0_10] : memref<10x25x8xf32, #tpu.memory_space<vmem>>, vector<10x1x8xf32>
    tpu.vector_store %arg12[%c0_9, %c24, %c0_10], %6 {strides = array<i32>} : memref<10x25x8xf32, #tpu.memory_space<vmem>>, vector<10x1x8xf32>,
    %c0_11 = arith.constant 0 : index
    %c0_12 = arith.constant 0 : index
    %c0_13 = arith.constant 0 : index
    %c0_14 = arith.constant 0 : index
    %8 = vector.load %arg1[%c0_11, %c0_12, %c0_13, %c0_14] : memref<1x8x8x32xbf16, #tpu.memory_space<vmem>>, vector<1x8x8x32xbf16>
    %9 = vector.shape_cast %8 : vector<1x8x8x32xbf16> to vector<8x8x32xbf16>
    %10 = vector.shape_cast %9 : vector<8x8x32xbf16> to vector<64x32xbf16>
    %c0_15 = arith.constant 0 : index
    %c0_16 = arith.constant 0 : index
    %11 = vector.load %arg2[%c0_15, %c0_16] : memref<32x8xbf16, #tpu.memory_space<vmem>>, vector<32x8xbf16>
    %cst_17 = arith.constant dense<0.000000e+00> : vector<64x8xf32>
    %12 = tpu.matmul %10, %11, %cst_17 {dimension_numbers = #tpu.dot_dimension_numbers<[1], [0], [0], [1], [0, 0, 1, 1], [], []>} : vector<64x32xbf16>, vector<32x8xbf16>, vector<64x8xf32> -> vector<64x8xf32>
    %c0_18 = arith.constant 0 : index
    %c0_19 = arith.constant 0 : index
    %13 = vector.load %arg5[%c0_18, %c0_19] : memref<1x8xf32, #tpu.memory_space<vmem>>, vector<1x8xf32>
    %14 = vector.broadcast %13 : vector<1x8xf32> to vector<64x8xf32>
    %15 = arith.mulf %12, %14 : vector<64x8xf32>
    %c0_20 = arith.constant 0 : index
    %c0_21 = arith.constant 0 : index
    %16 = vector.load %arg6[%c0_20, %c0_21] : memref<1x8xf32, #tpu.memory_space<vmem>>, vector<1x8xf32>
    %17 = vector.broadcast %16 : vector<1x8xf32> to vector<64x8xf32>
    %18 = arith.addf %15, %17 : vector<64x8xf32>
    %cst_22 = arith.constant 0.000000e+00 : f32
    %19 = vector.broadcast %cst_22 : f32 to vector<64x8xf32>
    %20 = arith.maximumf %18, %19 : vector<64x8xf32>
    %21 = vector.shape_cast %20 : vector<64x8xf32> to vector<8x8x8xf32>
    %c1 = arith.constant 1 : index
    %c16 = arith.constant 16 : index
    %c0_23 = arith.constant 0 : index
    %22 = vector.load %arg12[%c1, %c16, %c0_23] : memref<10x25x8xf32, #tpu.memory_space<vmem>>, vector<8x8x8xf32>
    tpu.vector_store %arg12[%c1, %c16, %c0_23], %21 {strides = array<i32>} : memref<10x25x8xf32, #tpu.memory_space<vmem>>, vector<8x8x8xf32>,
    %c0_24 = arith.constant 0 : index
    %c15_25 = arith.constant 15 : index
    %c0_26 = arith.constant 0 : index
    %23 = vector.load %arg12[%c0_24, %c15_25, %c0_26] : memref<10x25x8xf32, #tpu.memory_space<vmem>>, vector<8x8x8xf32>
    %24 = vector.shape_cast %23 : vector<8x8x8xf32> to vector<64x8xf32>
    %25 = arith.truncf %24 : vector<64x8xf32> to vector<64x8xbf16>
    %c0_27 = arith.constant 0 : index
    %c0_28 = arith.constant 0 : index
    %26 = vector.load %arg3[%c0_27, %c0_28] : memref<72x8xbf16, #tpu.memory_space<vmem>>, vector<8x8xbf16>
    %cst_29 = arith.constant dense<0.000000e+00> : vector<64x8xf32>
    %27 = tpu.matmul %25, %26, %cst_29 {dimension_numbers = #tpu.dot_dimension_numbers<[1], [0], [0], [1], [0, 0, 1, 1], [], []>} : vector<64x8xbf16>, vector<8x8xbf16>, vector<64x8xf32> -> vector<64x8xf32>
    %c0_30 = arith.constant 0 : index
    %c16_31 = arith.constant 16 : index
    %c0_32 = arith.constant 0 : index
    %28 = vector.load %arg12[%c0_30, %c16_31, %c0_32] : memref<10x25x8xf32, #tpu.memory_space<vmem>>, vector<8x8x8xf32>
    %29 = vector.shape_cast %28 : vector<8x8x8xf32> to vector<64x8xf32>
    %30 = arith.truncf %29 : vector<64x8xf32> to vector<64x8xbf16>
    %c8 = arith.constant 8 : index
    %c0_33 = arith.constant 0 : index
    %31 = vector.load %arg3[%c8, %c0_33] : memref<72x8xbf16, #tpu.memory_space<vmem>>, vector<8x8xbf16>
    %cst_34 = arith.constant dense<0.000000e+00> : vector<64x8xf32>
    %32 = tpu.matmul %30, %31, %cst_34 {dimension_numbers = #tpu.dot_dimension_numbers<[1], [0], [0], [1], [0, 0, 1, 1], [], []>} : vector<64x8xbf16>, vector<8x8xbf16>, vector<64x8xf32> -> vector<64x8xf32>
    %33 = arith.addf %27, %32 : vector<64x8xf32>
    %c0_35 = arith.constant 0 : index
    %c17 = arith.constant 17 : index
    %c0_36 = arith.constant 0 : index
    %34 = vector.load %arg12[%c0_35, %c17, %c0_36] : memref<10x25x8xf32, #tpu.memory_space<vmem>>, vector<8x8x8xf32>
    %35 = vector.shape_cast %34 : vector<8x8x8xf32> to vector<64x8xf32>
    %36 = arith.truncf %35 : vector<64x8xf32> to vector<64x8xbf16>
    %c16_37 = arith.constant 16 : index
    %c0_38 = arith.constant 0 : index
    %37 = vector.load %arg3[%c16_37, %c0_38] : memref<72x8xbf16, #tpu.memory_space<vmem>>, vector<8x8xbf16>
    %cst_39 = arith.constant dense<0.000000e+00> : vector<64x8xf32>
    %38 = tpu.matmul %36, %37, %cst_39 {dimension_numbers = #tpu.dot_dimension_numbers<[1], [0], [0], [1], [0, 0, 1, 1], [], []>} : vector<64x8xbf16>, vector<8x8xbf16>, vector<64x8xf32> -> vector<64x8xf32>
    %39 = arith.addf %33, %38 : vector<64x8xf32>
    %c1_40 = arith.constant 1 : index
    %c15_41 = arith.constant 15 : index
    %c0_42 = arith.constant 0 : index
    %40 = vector.load %arg12[%c1_40, %c15_41, %c0_42] : memref<10x25x8xf32, #tpu.memory_space<vmem>>, vector<8x8x8xf32>
    %41 = vector.shape_cast %40 : vector<8x8x8xf32> to vector<64x8xf32>
    %42 = arith.truncf %41 : vector<64x8xf32> to vector<64x8xbf16>
    %c24_43 = arith.constant 24 : index
    %c0_44 = arith.constant 0 : index
    %43 = vector.load %arg3[%c24_43, %c0_44] : memref<72x8xbf16, #tpu.memory_space<vmem>>, vector<8x8xbf16>
    %cst_45 = arith.constant dense<0.000000e+00> : vector<64x8xf32>
    %44 = tpu.matmul %42, %43, %cst_45 {dimension_numbers = #tpu.dot_dimension_numbers<[1], [0], [0], [1], [0, 0, 1, 1], [], []>} : vector<64x8xbf16>, vector<8x8xbf16>, vector<64x8xf32> -> vector<64x8xf32>
    %45 = arith.addf %39, %44 : vector<64x8xf32>
    %c1_46 = arith.constant 1 : index
    %c16_47 = arith.constant 16 : index
    %c0_48 = arith.constant 0 : index
    %46 = vector.load %arg12[%c1_46, %c16_47, %c0_48] : memref<10x25x8xf32, #tpu.memory_space<vmem>>, vector<8x8x8xf32>
    %47 = vector.shape_cast %46 : vector<8x8x8xf32> to vector<64x8xf32>
    %48 = arith.truncf %47 : vector<64x8xf32> to vector<64x8xbf16>
    %c32 = arith.constant 32 : index
    %c0_49 = arith.constant 0 : index
    %49 = vector.load %arg3[%c32, %c0_49] : memref<72x8xbf16, #tpu.memory_space<vmem>>, vector<8x8xbf16>
    %cst_50 = arith.constant dense<0.000000e+00> : vector<64x8xf32>
    %50 = tpu.matmul %48, %49, %cst_50 {dimension_numbers = #tpu.dot_dimension_numbers<[1], [0], [0], [1], [0, 0, 1, 1], [], []>} : vector<64x8xbf16>, vector<8x8xbf16>, vector<64x8xf32> -> vector<64x8xf32>
    %51 = arith.addf %45, %50 : vector<64x8xf32>
    %c1_51 = arith.constant 1 : index
    %c17_52 = arith.constant 17 : index
    %c0_53 = arith.constant 0 : index
    %52 = vector.load %arg12[%c1_51, %c17_52, %c0_53] : memref<10x25x8xf32, #tpu.memory_space<vmem>>, vector<8x8x8xf32>
    %53 = vector.shape_cast %52 : vector<8x8x8xf32> to vector<64x8xf32>
    %54 = arith.truncf %53 : vector<64x8xf32> to vector<64x8xbf16>
    %c40 = arith.constant 40 : index
    %c0_54 = arith.constant 0 : index
    %55 = vector.load %arg3[%c40, %c0_54] : memref<72x8xbf16, #tpu.memory_space<vmem>>, vector<8x8xbf16>
    %cst_55 = arith.constant dense<0.000000e+00> : vector<64x8xf32>
    %56 = tpu.matmul %54, %55, %cst_55 {dimension_numbers = #tpu.dot_dimension_numbers<[1], [0], [0], [1], [0, 0, 1, 1], [], []>} : vector<64x8xbf16>, vector<8x8xbf16>, vector<64x8xf32> -> vector<64x8xf32>
    %57 = arith.addf %51, %56 : vector<64x8xf32>
    %c2 = arith.constant 2 : index
    %c15_56 = arith.constant 15 : index
    %c0_57 = arith.constant 0 : index
    %58 = vector.load %arg12[%c2, %c15_56, %c0_57] : memref<10x25x8xf32, #tpu.memory_space<vmem>>, vector<8x8x8xf32>
    %59 = vector.shape_cast %58 : vector<8x8x8xf32> to vector<64x8xf32>
    %60 = arith.truncf %59 : vector<64x8xf32> to vector<64x8xbf16>
    %c48 = arith.constant 48 : index
    %c0_58 = arith.constant 0 : index
    %61 = vector.load %arg3[%c48, %c0_58] : memref<72x8xbf16, #tpu.memory_space<vmem>>, vector<8x8xbf16>
    %cst_59 = arith.constant dense<0.000000e+00> : vector<64x8xf32>
    %62 = tpu.matmul %60, %61, %cst_59 {dimension_numbers = #tpu.dot_dimension_numbers<[1], [0], [0], [1], [0, 0, 1, 1], [], []>} : vector<64x8xbf16>, vector<8x8xbf16>, vector<64x8xf32> -> vector<64x8xf32>
    %63 = arith.addf %57, %62 : vector<64x8xf32>
    %c2_60 = arith.constant 2 : index
    %c16_61 = arith.constant 16 : index
    %c0_62 = arith.constant 0 : index
    %64 = vector.load %arg12[%c2_60, %c16_61, %c0_62] : memref<10x25x8xf32, #tpu.memory_space<vmem>>, vector<8x8x8xf32>
    %65 = vector.shape_cast %64 : vector<8x8x8xf32> to vector<64x8xf32>
    %66 = arith.truncf %65 : vector<64x8xf32> to vector<64x8xbf16>
    %c56 = arith.constant 56 : index
    %c0_63 = arith.constant 0 : index
    %67 = vector.load %arg3[%c56, %c0_63] : memref<72x8xbf16, #tpu.memory_space<vmem>>, vector<8x8xbf16>
    %cst_64 = arith.constant dense<0.000000e+00> : vector<64x8xf32>
    %68 = tpu.matmul %66, %67, %cst_64 {dimension_numbers = #tpu.dot_dimension_numbers<[1], [0], [0], [1], [0, 0, 1, 1], [], []>} : vector<64x8xbf16>, vector<8x8xbf16>, vector<64x8xf32> -> vector<64x8xf32>
    %69 = arith.addf %63, %68 : vector<64x8xf32>
    %c2_65 = arith.constant 2 : index
    %c17_66 = arith.constant 17 : index
    %c0_67 = arith.constant 0 : index
    %70 = vector.load %arg12[%c2_65, %c17_66, %c0_67] : memref<10x25x8xf32, #tpu.memory_space<vmem>>, vector<8x8x8xf32>
    %71 = vector.shape_cast %70 : vector<8x8x8xf32> to vector<64x8xf32>
    %72 = arith.truncf %71 : vector<64x8xf32> to vector<64x8xbf16>
    %c64 = arith.constant 64 : index
    %c0_68 = arith.constant 0 : index
    %73 = vector.load %arg3[%c64, %c0_68] : memref<72x8xbf16, #tpu.memory_space<vmem>>, vector<8x8xbf16>
    %cst_69 = arith.constant dense<0.000000e+00> : vector<64x8xf32>
    %74 = tpu.matmul %72, %73, %cst_69 {dimension_numbers = #tpu.dot_dimension_numbers<[1], [0], [0], [1], [0, 0, 1, 1], [], []>} : vector<64x8xbf16>, vector<8x8xbf16>, vector<64x8xf32> -> vector<64x8xf32>
    %75 = arith.addf %69, %74 : vector<64x8xf32>
    %c0_70 = arith.constant 0 : index
    %c0_71 = arith.constant 0 : index
    %76 = vector.load %arg7[%c0_70, %c0_71] : memref<1x8xf32, #tpu.memory_space<vmem>>, vector<1x8xf32>
    %77 = vector.broadcast %76 : vector<1x8xf32> to vector<64x8xf32>
    %78 = arith.mulf %75, %77 : vector<64x8xf32>
    %c0_72 = arith.constant 0 : index
    %c0_73 = arith.constant 0 : index
    %79 = vector.load %arg8[%c0_72, %c0_73] : memref<1x8xf32, #tpu.memory_space<vmem>>, vector<1x8xf32>
    %80 = vector.broadcast %79 : vector<1x8xf32> to vector<64x8xf32>
    %81 = arith.addf %78, %80 : vector<64x8xf32>
    %cst_74 = arith.constant 0.000000e+00 : f32
    %82 = vector.broadcast %cst_74 : f32 to vector<64x8xf32>
    %83 = arith.maximumf %81, %82 : vector<64x8xf32>
    %84 = arith.truncf %83 : vector<64x8xf32> to vector<64x8xbf16>
    %c0_75 = arith.constant 0 : index
    %c0_76 = arith.constant 0 : index
    %85 = vector.load %arg4[%c0_75, %c0_76] : memref<8x32xbf16, #tpu.memory_space<vmem>>, vector<8x32xbf16>
    %cst_77 = arith.constant dense<0.000000e+00> : vector<64x32xf32>
    %86 = tpu.matmul %84, %85, %cst_77 {dimension_numbers = #tpu.dot_dimension_numbers<[1], [0], [0], [1], [0, 0, 1, 1], [], []>} : vector<64x8xbf16>, vector<8x32xbf16>, vector<64x32xf32> -> vector<64x32xf32>
    %c0_78 = arith.constant 0 : index
    %c0_79 = arith.constant 0 : index
    %87 = vector.load %arg9[%c0_78, %c0_79] : memref<1x32xf32, #tpu.memory_space<vmem>>, vector<1x32xf32>
    %88 = vector.broadcast %87 : vector<1x32xf32> to vector<64x32xf32>
    %89 = arith.mulf %86, %88 : vector<64x32xf32>
    %c0_80 = arith.constant 0 : index
    %c0_81 = arith.constant 0 : index
    %90 = vector.load %arg10[%c0_80, %c0_81] : memref<1x32xf32, #tpu.memory_space<vmem>>, vector<1x32xf32>
    %91 = vector.broadcast %90 : vector<1x32xf32> to vector<64x32xf32>
    %92 = arith.addf %89, %91 : vector<64x32xf32>
    %93 = vector.shape_cast %9 : vector<8x8x32xbf16> to vector<64x32xbf16>
    %94 = arith.extf %93 : vector<64x32xbf16> to vector<64x32xf32>
    %95 = arith.addf %94, %92 : vector<64x32xf32>
    %cst_82 = arith.constant 0.000000e+00 : f32
    %96 = vector.broadcast %cst_82 : f32 to vector<64x32xf32>
    %97 = arith.maximumf %95, %96 : vector<64x32xf32>
    %98 = vector.shape_cast %97 : vector<64x32xf32> to vector<8x8x32xf32>
    %99 = arith.truncf %98 : vector<8x8x32xf32> to vector<8x8x32xbf16>
    %c0_83 = arith.constant 0 : index
    %c0_84 = arith.constant 0 : index
    %c0_85 = arith.constant 0 : index
    %c0_86 = arith.constant 0 : index
    %100 = vector.load %arg11[%c0_83, %c0_84, %c0_85, %c0_86] : memref<1x8x8x32xbf16, #tpu.memory_space<vmem>>, vector<1x8x8x32xbf16>
    %101 = vector.shape_cast %100 : vector<1x8x8x32xbf16> to vector<8x8x32xbf16>
    %102 = vector.shape_cast %99 : vector<8x8x32xbf16> to vector<1x8x8x32xbf16>
    tpu.vector_store %arg11[%c0_83, %c0_84, %c0_85, %c0_86], %102 {strides = array<i32>} : memref<1x8x8x32xbf16, #tpu.memory_space<vmem>>, vector<1x8x8x32xbf16>,
    return
  }
  func.func @transform_0(%arg0: i32) -> (i32, i32, i32, i32) {
    %c0_i32 = arith.constant 0 : i32
    %c0_i32_0 = arith.constant 0 : i32
    %c0_i32_1 = arith.constant 0 : i32
    %c0_i32_2 = arith.constant 0 : i32
    return %arg0, %c0_i32, %c0_i32_0, %c0_i32_1 : i32, i32, i32, i32
  }
  func.func @transform_1(%arg0: i32) -> (i32, i32) {
    %c0_i32 = arith.constant 0 : i32
    %c0_i32_0 = arith.constant 0 : i32
    %c0_i32_1 = arith.constant 0 : i32
    return %c0_i32, %c0_i32_0 : i32, i32
  }
  func.func @transform_2(%arg0: i32) -> (i32, i32) {
    %c0_i32 = arith.constant 0 : i32
    %c0_i32_0 = arith.constant 0 : i32
    %c0_i32_1 = arith.constant 0 : i32
    return %c0_i32, %c0_i32_0 : i32, i32
  }
  func.func @transform_3(%arg0: i32) -> (i32, i32) {
    %c0_i32 = arith.constant 0 : i32
    %c0_i32_0 = arith.constant 0 : i32
    %c0_i32_1 = arith.constant 0 : i32
    return %c0_i32, %c0_i32_0 : i32, i32
  }
  func.func @transform_4(%arg0: i32) -> (i32, i32) {
    %c0_i32 = arith.constant 0 : i32
    %c0_i32_0 = arith.constant 0 : i32
    %c0_i32_1 = arith.constant 0 : i32
    return %c0_i32, %c0_i32_0 : i32, i32
  }
  func.func @transform_5(%arg0: i32) -> (i32, i32) {
    %c0_i32 = arith.constant 0 : i32
    %c0_i32_0 = arith.constant 0 : i32
    %c0_i32_1 = arith.constant 0 : i32
    return %c0_i32, %c0_i32_0 : i32, i32
  }
  func.func @transform_6(%arg0: i32) -> (i32, i32) {
    %c0_i32 = arith.constant 0 : i32
    %c0_i32_0 = arith.constant 0 : i32
    %c0_i32_1 = arith.constant 0 : i32
    return %c0_i32, %c0_i32_0 : i32, i32
  }
  func.func @transform_7(%arg0: i32) -> (i32, i32) {
    %c0_i32 = arith.constant 0 : i32
    %c0_i32_0 = arith.constant 0 : i32
    %c0_i32_1 = arith.constant 0 : i32
    return %c0_i32, %c0_i32_0 : i32, i32
  }
  func.func @transform_8(%arg0: i32) -> (i32, i32) {
    %c0_i32 = arith.constant 0 : i32
    %c0_i32_0 = arith.constant 0 : i32
    %c0_i32_1 = arith.constant 0 : i32
    return %c0_i32, %c0_i32_0 : i32, i32
  }
  func.func @transform_9(%arg0: i32) -> (i32, i32) {
    %c0_i32 = arith.constant 0 : i32
    %c0_i32_0 = arith.constant 0 : i32
    %c0_i32_1 = arith.constant 0 : i32
    return %c0_i32, %c0_i32_0 : i32, i32
  }
  func.func @transform_10(%arg0: i32) -> (i32, i32, i32, i32) {
    %c0_i32 = arith.constant 0 : i32
    %c0_i32_0 = arith.constant 0 : i32
    %c0_i32_1 = arith.constant 0 : i32
    %c0_i32_2 = arith.constant 0 : i32
    return %arg0, %c0_i32, %c0_i32_0, %c0_i32_1 : i32, i32, i32, i32
  }
}

module attributes {stable_mosaic.version = 11 : i64} {
  func.func @kernel(%arg0: i32, %arg1: memref<1x16x16x16xf32, #tpu.memory_space<vmem>>, %arg2: memref<16x8xbf16, #tpu.memory_space<vmem>>, %arg3: memref<72x8xbf16, #tpu.memory_space<vmem>>, %arg4: memref<8x32xbf16, #tpu.memory_space<vmem>>, %arg5: memref<16x32xbf16, #tpu.memory_space<vmem>>, %arg6: memref<1x8xf32, #tpu.memory_space<vmem>>, %arg7: memref<1x8xf32, #tpu.memory_space<vmem>>, %arg8: memref<1x8xf32, #tpu.memory_space<vmem>>, %arg9: memref<1x8xf32, #tpu.memory_space<vmem>>, %arg10: memref<1x32xf32, #tpu.memory_space<vmem>>, %arg11: memref<1x32xf32, #tpu.memory_space<vmem>>, %arg12: memref<1x32xf32, #tpu.memory_space<vmem>>, %arg13: memref<1x32xf32, #tpu.memory_space<vmem>>, %arg14: memref<1x8x8x32xbf16, #tpu.memory_space<vmem>>, %arg15: memref<18x33x8xf32, #tpu.memory_space<vmem>>) attributes {dimension_semantics = [#tpu.dimension_semantics<parallel>], iteration_bounds = array<i64: 2>, scalar_prefetch = 0 : i64, scratch_operands = 1 : i64, tpu.core_type = #tpu.core_type<tc>, window_params = [{transform_indices = @transform_0, window_bounds = array<i64: 1, 16, 16, 16>}, {pipeline_mode = #tpu.pipeline_mode<synchronous>, transform_indices = @transform_1, window_bounds = array<i64: 16, 8>}, {pipeline_mode = #tpu.pipeline_mode<synchronous>, transform_indices = @transform_2, window_bounds = array<i64: 72, 8>}, {pipeline_mode = #tpu.pipeline_mode<synchronous>, transform_indices = @transform_3, window_bounds = array<i64: 8, 32>}, {pipeline_mode = #tpu.pipeline_mode<synchronous>, transform_indices = @transform_4, window_bounds = array<i64: 16, 32>}, {pipeline_mode = #tpu.pipeline_mode<synchronous>, transform_indices = @transform_5, window_bounds = array<i64: 1, 8>}, {pipeline_mode = #tpu.pipeline_mode<synchronous>, transform_indices = @transform_6, window_bounds = array<i64: 1, 8>}, {pipeline_mode = #tpu.pipeline_mode<synchronous>, transform_indices = @transform_7, window_bounds = array<i64: 1, 8>}, {pipeline_mode = #tpu.pipeline_mode<synchronous>, transform_indices = @transform_8, window_bounds = array<i64: 1, 8>}, {pipeline_mode = #tpu.pipeline_mode<synchronous>, transform_indices = @transform_9, window_bounds = array<i64: 1, 32>}, {pipeline_mode = #tpu.pipeline_mode<synchronous>, transform_indices = @transform_10, window_bounds = array<i64: 1, 32>}, {pipeline_mode = #tpu.pipeline_mode<synchronous>, transform_indices = @transform_11, window_bounds = array<i64: 1, 32>}, {pipeline_mode = #tpu.pipeline_mode<synchronous>, transform_indices = @transform_12, window_bounds = array<i64: 1, 32>}, {transform_indices = @transform_13, window_bounds = array<i64: 1, 8, 8, 32>}]} {
    %cst = arith.constant 0.000000e+00 : f32
    %0 = vector.broadcast %cst : f32 to vector<1x18x8xf32>
    %c0 = arith.constant 0 : index
    %c15 = arith.constant 15 : index
    %c0_0 = arith.constant 0 : index
    %1 = vector.load %arg15[%c0, %c15, %c0_0] : memref<18x33x8xf32, #tpu.memory_space<vmem>>, vector<1x18x8xf32>
    tpu.vector_store %arg15[%c0, %c15, %c0_0], %0 {strides = array<i32>} : memref<18x33x8xf32, #tpu.memory_space<vmem>>, vector<1x18x8xf32>,
    %cst_1 = arith.constant 0.000000e+00 : f32
    %2 = vector.broadcast %cst_1 : f32 to vector<1x18x8xf32>
    %c17 = arith.constant 17 : index
    %c15_2 = arith.constant 15 : index
    %c0_3 = arith.constant 0 : index
    %3 = vector.load %arg15[%c17, %c15_2, %c0_3] : memref<18x33x8xf32, #tpu.memory_space<vmem>>, vector<1x18x8xf32>
    tpu.vector_store %arg15[%c17, %c15_2, %c0_3], %2 {strides = array<i32>} : memref<18x33x8xf32, #tpu.memory_space<vmem>>, vector<1x18x8xf32>,
    %cst_4 = arith.constant 0.000000e+00 : f32
    %4 = vector.broadcast %cst_4 : f32 to vector<18x1x8xf32>
    %c0_5 = arith.constant 0 : index
    %c15_6 = arith.constant 15 : index
    %c0_7 = arith.constant 0 : index
    %5 = vector.load %arg15[%c0_5, %c15_6, %c0_7] : memref<18x33x8xf32, #tpu.memory_space<vmem>>, vector<18x1x8xf32>
    tpu.vector_store %arg15[%c0_5, %c15_6, %c0_7], %4 {strides = array<i32>} : memref<18x33x8xf32, #tpu.memory_space<vmem>>, vector<18x1x8xf32>,
    %cst_8 = arith.constant 0.000000e+00 : f32
    %6 = vector.broadcast %cst_8 : f32 to vector<18x1x8xf32>
    %c0_9 = arith.constant 0 : index
    %c32 = arith.constant 32 : index
    %c0_10 = arith.constant 0 : index
    %7 = vector.load %arg15[%c0_9, %c32, %c0_10] : memref<18x33x8xf32, #tpu.memory_space<vmem>>, vector<18x1x8xf32>
    tpu.vector_store %arg15[%c0_9, %c32, %c0_10], %6 {strides = array<i32>} : memref<18x33x8xf32, #tpu.memory_space<vmem>>, vector<18x1x8xf32>,
    %c0_11 = arith.constant 0 : index
    %c0_12 = arith.constant 0 : index
    %c0_13 = arith.constant 0 : index
    %c0_14 = arith.constant 0 : index
    %8 = vector.load %arg1[%c0_11, %c0_12, %c0_13, %c0_14] : memref<1x16x16x16xf32, #tpu.memory_space<vmem>>, vector<1x16x16x16xf32>
    %9 = vector.shape_cast %8 : vector<1x16x16x16xf32> to vector<16x16x16xf32>
    %10 = vector.shape_cast %9 : vector<16x16x16xf32> to vector<256x16xf32>
    %11 = arith.truncf %10 : vector<256x16xf32> to vector<256x16xbf16>
    %c0_15 = arith.constant 0 : index
    %c0_16 = arith.constant 0 : index
    %12 = vector.load %arg2[%c0_15, %c0_16] : memref<16x8xbf16, #tpu.memory_space<vmem>>, vector<16x8xbf16>
    %cst_17 = arith.constant dense<0.000000e+00> : vector<256x8xf32>
    %13 = tpu.matmul %11, %12, %cst_17 {dimension_numbers = #tpu.dot_dimension_numbers<[1], [0], [0], [1], [0, 0, 1, 1], [], []>} : vector<256x16xbf16>, vector<16x8xbf16>, vector<256x8xf32> -> vector<256x8xf32>
    %c0_18 = arith.constant 0 : index
    %c0_19 = arith.constant 0 : index
    %14 = vector.load %arg6[%c0_18, %c0_19] : memref<1x8xf32, #tpu.memory_space<vmem>>, vector<1x8xf32>
    %15 = vector.broadcast %14 : vector<1x8xf32> to vector<256x8xf32>
    %16 = arith.mulf %13, %15 : vector<256x8xf32>
    %c0_20 = arith.constant 0 : index
    %c0_21 = arith.constant 0 : index
    %17 = vector.load %arg7[%c0_20, %c0_21] : memref<1x8xf32, #tpu.memory_space<vmem>>, vector<1x8xf32>
    %18 = vector.broadcast %17 : vector<1x8xf32> to vector<256x8xf32>
    %19 = arith.addf %16, %18 : vector<256x8xf32>
    %cst_22 = arith.constant 0.000000e+00 : f32
    %20 = vector.broadcast %cst_22 : f32 to vector<256x8xf32>
    %21 = arith.maximumf %19, %20 : vector<256x8xf32>
    %22 = vector.shape_cast %21 : vector<256x8xf32> to vector<16x16x8xf32>
    %c1 = arith.constant 1 : index
    %c16 = arith.constant 16 : index
    %c0_23 = arith.constant 0 : index
    %23 = vector.load %arg15[%c1, %c16, %c0_23] : memref<18x33x8xf32, #tpu.memory_space<vmem>>, vector<16x16x8xf32>
    tpu.vector_store %arg15[%c1, %c16, %c0_23], %22 {strides = array<i32>} : memref<18x33x8xf32, #tpu.memory_space<vmem>>, vector<16x16x8xf32>,
    %c0_24 = arith.constant 0 : index
    %c15_25 = arith.constant 15 : index
    %c0_26 = arith.constant 0 : index
    %24 = tpu.strided_load %arg15[%c0_24, %c15_25, %c0_26] {strides = array<i32: 2, 2, 1>} : memref<18x33x8xf32, #tpu.memory_space<vmem>>, vector<8x8x8xf32>
    %25 = vector.shape_cast %24 : vector<8x8x8xf32> to vector<64x8xf32>
    %26 = arith.truncf %25 : vector<64x8xf32> to vector<64x8xbf16>
    %c0_27 = arith.constant 0 : index
    %c0_28 = arith.constant 0 : index
    %27 = vector.load %arg3[%c0_27, %c0_28] : memref<72x8xbf16, #tpu.memory_space<vmem>>, vector<8x8xbf16>
    %cst_29 = arith.constant dense<0.000000e+00> : vector<64x8xf32>
    %28 = tpu.matmul %26, %27, %cst_29 {dimension_numbers = #tpu.dot_dimension_numbers<[1], [0], [0], [1], [0, 0, 1, 1], [], []>} : vector<64x8xbf16>, vector<8x8xbf16>, vector<64x8xf32> -> vector<64x8xf32>
    %c0_30 = arith.constant 0 : index
    %c16_31 = arith.constant 16 : index
    %c0_32 = arith.constant 0 : index
    %29 = tpu.strided_load %arg15[%c0_30, %c16_31, %c0_32] {strides = array<i32: 2, 2, 1>} : memref<18x33x8xf32, #tpu.memory_space<vmem>>, vector<8x8x8xf32>
    %30 = vector.shape_cast %29 : vector<8x8x8xf32> to vector<64x8xf32>
    %31 = arith.truncf %30 : vector<64x8xf32> to vector<64x8xbf16>
    %c8 = arith.constant 8 : index
    %c0_33 = arith.constant 0 : index
    %32 = vector.load %arg3[%c8, %c0_33] : memref<72x8xbf16, #tpu.memory_space<vmem>>, vector<8x8xbf16>
    %cst_34 = arith.constant dense<0.000000e+00> : vector<64x8xf32>
    %33 = tpu.matmul %31, %32, %cst_34 {dimension_numbers = #tpu.dot_dimension_numbers<[1], [0], [0], [1], [0, 0, 1, 1], [], []>} : vector<64x8xbf16>, vector<8x8xbf16>, vector<64x8xf32> -> vector<64x8xf32>
    %34 = arith.addf %28, %33 : vector<64x8xf32>
    %c0_35 = arith.constant 0 : index
    %c17_36 = arith.constant 17 : index
    %c0_37 = arith.constant 0 : index
    %35 = tpu.strided_load %arg15[%c0_35, %c17_36, %c0_37] {strides = array<i32: 2, 2, 1>} : memref<18x33x8xf32, #tpu.memory_space<vmem>>, vector<8x8x8xf32>
    %36 = vector.shape_cast %35 : vector<8x8x8xf32> to vector<64x8xf32>
    %37 = arith.truncf %36 : vector<64x8xf32> to vector<64x8xbf16>
    %c16_38 = arith.constant 16 : index
    %c0_39 = arith.constant 0 : index
    %38 = vector.load %arg3[%c16_38, %c0_39] : memref<72x8xbf16, #tpu.memory_space<vmem>>, vector<8x8xbf16>
    %cst_40 = arith.constant dense<0.000000e+00> : vector<64x8xf32>
    %39 = tpu.matmul %37, %38, %cst_40 {dimension_numbers = #tpu.dot_dimension_numbers<[1], [0], [0], [1], [0, 0, 1, 1], [], []>} : vector<64x8xbf16>, vector<8x8xbf16>, vector<64x8xf32> -> vector<64x8xf32>
    %40 = arith.addf %34, %39 : vector<64x8xf32>
    %c1_41 = arith.constant 1 : index
    %c15_42 = arith.constant 15 : index
    %c0_43 = arith.constant 0 : index
    %41 = tpu.strided_load %arg15[%c1_41, %c15_42, %c0_43] {strides = array<i32: 2, 2, 1>} : memref<18x33x8xf32, #tpu.memory_space<vmem>>, vector<8x8x8xf32>
    %42 = vector.shape_cast %41 : vector<8x8x8xf32> to vector<64x8xf32>
    %43 = arith.truncf %42 : vector<64x8xf32> to vector<64x8xbf16>
    %c24 = arith.constant 24 : index
    %c0_44 = arith.constant 0 : index
    %44 = vector.load %arg3[%c24, %c0_44] : memref<72x8xbf16, #tpu.memory_space<vmem>>, vector<8x8xbf16>
    %cst_45 = arith.constant dense<0.000000e+00> : vector<64x8xf32>
    %45 = tpu.matmul %43, %44, %cst_45 {dimension_numbers = #tpu.dot_dimension_numbers<[1], [0], [0], [1], [0, 0, 1, 1], [], []>} : vector<64x8xbf16>, vector<8x8xbf16>, vector<64x8xf32> -> vector<64x8xf32>
    %46 = arith.addf %40, %45 : vector<64x8xf32>
    %c1_46 = arith.constant 1 : index
    %c16_47 = arith.constant 16 : index
    %c0_48 = arith.constant 0 : index
    %47 = tpu.strided_load %arg15[%c1_46, %c16_47, %c0_48] {strides = array<i32: 2, 2, 1>} : memref<18x33x8xf32, #tpu.memory_space<vmem>>, vector<8x8x8xf32>
    %48 = vector.shape_cast %47 : vector<8x8x8xf32> to vector<64x8xf32>
    %49 = arith.truncf %48 : vector<64x8xf32> to vector<64x8xbf16>
    %c32_49 = arith.constant 32 : index
    %c0_50 = arith.constant 0 : index
    %50 = vector.load %arg3[%c32_49, %c0_50] : memref<72x8xbf16, #tpu.memory_space<vmem>>, vector<8x8xbf16>
    %cst_51 = arith.constant dense<0.000000e+00> : vector<64x8xf32>
    %51 = tpu.matmul %49, %50, %cst_51 {dimension_numbers = #tpu.dot_dimension_numbers<[1], [0], [0], [1], [0, 0, 1, 1], [], []>} : vector<64x8xbf16>, vector<8x8xbf16>, vector<64x8xf32> -> vector<64x8xf32>
    %52 = arith.addf %46, %51 : vector<64x8xf32>
    %c1_52 = arith.constant 1 : index
    %c17_53 = arith.constant 17 : index
    %c0_54 = arith.constant 0 : index
    %53 = tpu.strided_load %arg15[%c1_52, %c17_53, %c0_54] {strides = array<i32: 2, 2, 1>} : memref<18x33x8xf32, #tpu.memory_space<vmem>>, vector<8x8x8xf32>
    %54 = vector.shape_cast %53 : vector<8x8x8xf32> to vector<64x8xf32>
    %55 = arith.truncf %54 : vector<64x8xf32> to vector<64x8xbf16>
    %c40 = arith.constant 40 : index
    %c0_55 = arith.constant 0 : index
    %56 = vector.load %arg3[%c40, %c0_55] : memref<72x8xbf16, #tpu.memory_space<vmem>>, vector<8x8xbf16>
    %cst_56 = arith.constant dense<0.000000e+00> : vector<64x8xf32>
    %57 = tpu.matmul %55, %56, %cst_56 {dimension_numbers = #tpu.dot_dimension_numbers<[1], [0], [0], [1], [0, 0, 1, 1], [], []>} : vector<64x8xbf16>, vector<8x8xbf16>, vector<64x8xf32> -> vector<64x8xf32>
    %58 = arith.addf %52, %57 : vector<64x8xf32>
    %c2 = arith.constant 2 : index
    %c15_57 = arith.constant 15 : index
    %c0_58 = arith.constant 0 : index
    %59 = tpu.strided_load %arg15[%c2, %c15_57, %c0_58] {strides = array<i32: 2, 2, 1>} : memref<18x33x8xf32, #tpu.memory_space<vmem>>, vector<8x8x8xf32>
    %60 = vector.shape_cast %59 : vector<8x8x8xf32> to vector<64x8xf32>
    %61 = arith.truncf %60 : vector<64x8xf32> to vector<64x8xbf16>
    %c48 = arith.constant 48 : index
    %c0_59 = arith.constant 0 : index
    %62 = vector.load %arg3[%c48, %c0_59] : memref<72x8xbf16, #tpu.memory_space<vmem>>, vector<8x8xbf16>
    %cst_60 = arith.constant dense<0.000000e+00> : vector<64x8xf32>
    %63 = tpu.matmul %61, %62, %cst_60 {dimension_numbers = #tpu.dot_dimension_numbers<[1], [0], [0], [1], [0, 0, 1, 1], [], []>} : vector<64x8xbf16>, vector<8x8xbf16>, vector<64x8xf32> -> vector<64x8xf32>
    %64 = arith.addf %58, %63 : vector<64x8xf32>
    %c2_61 = arith.constant 2 : index
    %c16_62 = arith.constant 16 : index
    %c0_63 = arith.constant 0 : index
    %65 = tpu.strided_load %arg15[%c2_61, %c16_62, %c0_63] {strides = array<i32: 2, 2, 1>} : memref<18x33x8xf32, #tpu.memory_space<vmem>>, vector<8x8x8xf32>
    %66 = vector.shape_cast %65 : vector<8x8x8xf32> to vector<64x8xf32>
    %67 = arith.truncf %66 : vector<64x8xf32> to vector<64x8xbf16>
    %c56 = arith.constant 56 : index
    %c0_64 = arith.constant 0 : index
    %68 = vector.load %arg3[%c56, %c0_64] : memref<72x8xbf16, #tpu.memory_space<vmem>>, vector<8x8xbf16>
    %cst_65 = arith.constant dense<0.000000e+00> : vector<64x8xf32>
    %69 = tpu.matmul %67, %68, %cst_65 {dimension_numbers = #tpu.dot_dimension_numbers<[1], [0], [0], [1], [0, 0, 1, 1], [], []>} : vector<64x8xbf16>, vector<8x8xbf16>, vector<64x8xf32> -> vector<64x8xf32>
    %70 = arith.addf %64, %69 : vector<64x8xf32>
    %c2_66 = arith.constant 2 : index
    %c17_67 = arith.constant 17 : index
    %c0_68 = arith.constant 0 : index
    %71 = tpu.strided_load %arg15[%c2_66, %c17_67, %c0_68] {strides = array<i32: 2, 2, 1>} : memref<18x33x8xf32, #tpu.memory_space<vmem>>, vector<8x8x8xf32>
    %72 = vector.shape_cast %71 : vector<8x8x8xf32> to vector<64x8xf32>
    %73 = arith.truncf %72 : vector<64x8xf32> to vector<64x8xbf16>
    %c64 = arith.constant 64 : index
    %c0_69 = arith.constant 0 : index
    %74 = vector.load %arg3[%c64, %c0_69] : memref<72x8xbf16, #tpu.memory_space<vmem>>, vector<8x8xbf16>
    %cst_70 = arith.constant dense<0.000000e+00> : vector<64x8xf32>
    %75 = tpu.matmul %73, %74, %cst_70 {dimension_numbers = #tpu.dot_dimension_numbers<[1], [0], [0], [1], [0, 0, 1, 1], [], []>} : vector<64x8xbf16>, vector<8x8xbf16>, vector<64x8xf32> -> vector<64x8xf32>
    %76 = arith.addf %70, %75 : vector<64x8xf32>
    %c0_71 = arith.constant 0 : index
    %c0_72 = arith.constant 0 : index
    %77 = vector.load %arg8[%c0_71, %c0_72] : memref<1x8xf32, #tpu.memory_space<vmem>>, vector<1x8xf32>
    %78 = vector.broadcast %77 : vector<1x8xf32> to vector<64x8xf32>
    %79 = arith.mulf %76, %78 : vector<64x8xf32>
    %c0_73 = arith.constant 0 : index
    %c0_74 = arith.constant 0 : index
    %80 = vector.load %arg9[%c0_73, %c0_74] : memref<1x8xf32, #tpu.memory_space<vmem>>, vector<1x8xf32>
    %81 = vector.broadcast %80 : vector<1x8xf32> to vector<64x8xf32>
    %82 = arith.addf %79, %81 : vector<64x8xf32>
    %cst_75 = arith.constant 0.000000e+00 : f32
    %83 = vector.broadcast %cst_75 : f32 to vector<64x8xf32>
    %84 = arith.maximumf %82, %83 : vector<64x8xf32>
    %85 = arith.truncf %84 : vector<64x8xf32> to vector<64x8xbf16>
    %c0_76 = arith.constant 0 : index
    %c0_77 = arith.constant 0 : index
    %86 = vector.load %arg4[%c0_76, %c0_77] : memref<8x32xbf16, #tpu.memory_space<vmem>>, vector<8x32xbf16>
    %cst_78 = arith.constant dense<0.000000e+00> : vector<64x32xf32>
    %87 = tpu.matmul %85, %86, %cst_78 {dimension_numbers = #tpu.dot_dimension_numbers<[1], [0], [0], [1], [0, 0, 1, 1], [], []>} : vector<64x8xbf16>, vector<8x32xbf16>, vector<64x32xf32> -> vector<64x32xf32>
    %c0_79 = arith.constant 0 : index
    %c0_80 = arith.constant 0 : index
    %88 = vector.load %arg10[%c0_79, %c0_80] : memref<1x32xf32, #tpu.memory_space<vmem>>, vector<1x32xf32>
    %89 = vector.broadcast %88 : vector<1x32xf32> to vector<64x32xf32>
    %90 = arith.mulf %87, %89 : vector<64x32xf32>
    %c0_81 = arith.constant 0 : index
    %c0_82 = arith.constant 0 : index
    %91 = vector.load %arg11[%c0_81, %c0_82] : memref<1x32xf32, #tpu.memory_space<vmem>>, vector<1x32xf32>
    %92 = vector.broadcast %91 : vector<1x32xf32> to vector<64x32xf32>
    %93 = arith.addf %90, %92 : vector<64x32xf32>
    %c0_83 = arith.constant 0 : index
    %c0_84 = arith.constant 0 : index
    %c0_85 = arith.constant 0 : index
    %c0_86 = arith.constant 0 : index
    %94 = tpu.strided_load %arg1[%c0_83, %c0_84, %c0_85, %c0_86] {strides = array<i32: 1, 2, 2, 1>} : memref<1x16x16x16xf32, #tpu.memory_space<vmem>>, vector<1x8x8x16xf32>
    %95 = vector.shape_cast %94 : vector<1x8x8x16xf32> to vector<8x8x16xf32>
    %96 = vector.shape_cast %95 : vector<8x8x16xf32> to vector<64x16xf32>
    %97 = arith.truncf %96 : vector<64x16xf32> to vector<64x16xbf16>
    %c0_87 = arith.constant 0 : index
    %c0_88 = arith.constant 0 : index
    %98 = vector.load %arg5[%c0_87, %c0_88] : memref<16x32xbf16, #tpu.memory_space<vmem>>, vector<16x32xbf16>
    %cst_89 = arith.constant dense<0.000000e+00> : vector<64x32xf32>
    %99 = tpu.matmul %97, %98, %cst_89 {dimension_numbers = #tpu.dot_dimension_numbers<[1], [0], [0], [1], [0, 0, 1, 1], [], []>} : vector<64x16xbf16>, vector<16x32xbf16>, vector<64x32xf32> -> vector<64x32xf32>
    %c0_90 = arith.constant 0 : index
    %c0_91 = arith.constant 0 : index
    %100 = vector.load %arg12[%c0_90, %c0_91] : memref<1x32xf32, #tpu.memory_space<vmem>>, vector<1x32xf32>
    %101 = vector.broadcast %100 : vector<1x32xf32> to vector<64x32xf32>
    %102 = arith.mulf %99, %101 : vector<64x32xf32>
    %c0_92 = arith.constant 0 : index
    %c0_93 = arith.constant 0 : index
    %103 = vector.load %arg13[%c0_92, %c0_93] : memref<1x32xf32, #tpu.memory_space<vmem>>, vector<1x32xf32>
    %104 = vector.broadcast %103 : vector<1x32xf32> to vector<64x32xf32>
    %105 = arith.addf %102, %104 : vector<64x32xf32>
    %106 = arith.addf %105, %93 : vector<64x32xf32>
    %cst_94 = arith.constant 0.000000e+00 : f32
    %107 = vector.broadcast %cst_94 : f32 to vector<64x32xf32>
    %108 = arith.maximumf %106, %107 : vector<64x32xf32>
    %109 = vector.shape_cast %108 : vector<64x32xf32> to vector<8x8x32xf32>
    %110 = arith.truncf %109 : vector<8x8x32xf32> to vector<8x8x32xbf16>
    %c0_95 = arith.constant 0 : index
    %c0_96 = arith.constant 0 : index
    %c0_97 = arith.constant 0 : index
    %c0_98 = arith.constant 0 : index
    %111 = vector.load %arg14[%c0_95, %c0_96, %c0_97, %c0_98] : memref<1x8x8x32xbf16, #tpu.memory_space<vmem>>, vector<1x8x8x32xbf16>
    %112 = vector.shape_cast %111 : vector<1x8x8x32xbf16> to vector<8x8x32xbf16>
    %113 = vector.shape_cast %110 : vector<8x8x32xbf16> to vector<1x8x8x32xbf16>
    tpu.vector_store %arg14[%c0_95, %c0_96, %c0_97, %c0_98], %113 {strides = array<i32>} : memref<1x8x8x32xbf16, #tpu.memory_space<vmem>>, vector<1x8x8x32xbf16>,
    return
  }
  func.func @transform_0(%arg0: i32) -> (i32, i32, i32, i32) {
    %c0_i32 = arith.constant 0 : i32
    %c0_i32_0 = arith.constant 0 : i32
    %c0_i32_1 = arith.constant 0 : i32
    %c0_i32_2 = arith.constant 0 : i32
    return %arg0, %c0_i32, %c0_i32_0, %c0_i32_1 : i32, i32, i32, i32
  }
  func.func @transform_1(%arg0: i32) -> (i32, i32) {
    %c0_i32 = arith.constant 0 : i32
    %c0_i32_0 = arith.constant 0 : i32
    %c0_i32_1 = arith.constant 0 : i32
    return %c0_i32, %c0_i32_0 : i32, i32
  }
  func.func @transform_2(%arg0: i32) -> (i32, i32) {
    %c0_i32 = arith.constant 0 : i32
    %c0_i32_0 = arith.constant 0 : i32
    %c0_i32_1 = arith.constant 0 : i32
    return %c0_i32, %c0_i32_0 : i32, i32
  }
  func.func @transform_3(%arg0: i32) -> (i32, i32) {
    %c0_i32 = arith.constant 0 : i32
    %c0_i32_0 = arith.constant 0 : i32
    %c0_i32_1 = arith.constant 0 : i32
    return %c0_i32, %c0_i32_0 : i32, i32
  }
  func.func @transform_4(%arg0: i32) -> (i32, i32) {
    %c0_i32 = arith.constant 0 : i32
    %c0_i32_0 = arith.constant 0 : i32
    %c0_i32_1 = arith.constant 0 : i32
    return %c0_i32, %c0_i32_0 : i32, i32
  }
  func.func @transform_5(%arg0: i32) -> (i32, i32) {
    %c0_i32 = arith.constant 0 : i32
    %c0_i32_0 = arith.constant 0 : i32
    %c0_i32_1 = arith.constant 0 : i32
    return %c0_i32, %c0_i32_0 : i32, i32
  }
  func.func @transform_6(%arg0: i32) -> (i32, i32) {
    %c0_i32 = arith.constant 0 : i32
    %c0_i32_0 = arith.constant 0 : i32
    %c0_i32_1 = arith.constant 0 : i32
    return %c0_i32, %c0_i32_0 : i32, i32
  }
  func.func @transform_7(%arg0: i32) -> (i32, i32) {
    %c0_i32 = arith.constant 0 : i32
    %c0_i32_0 = arith.constant 0 : i32
    %c0_i32_1 = arith.constant 0 : i32
    return %c0_i32, %c0_i32_0 : i32, i32
  }
  func.func @transform_8(%arg0: i32) -> (i32, i32) {
    %c0_i32 = arith.constant 0 : i32
    %c0_i32_0 = arith.constant 0 : i32
    %c0_i32_1 = arith.constant 0 : i32
    return %c0_i32, %c0_i32_0 : i32, i32
  }
  func.func @transform_9(%arg0: i32) -> (i32, i32) {
    %c0_i32 = arith.constant 0 : i32
    %c0_i32_0 = arith.constant 0 : i32
    %c0_i32_1 = arith.constant 0 : i32
    return %c0_i32, %c0_i32_0 : i32, i32
  }
  func.func @transform_10(%arg0: i32) -> (i32, i32) {
    %c0_i32 = arith.constant 0 : i32
    %c0_i32_0 = arith.constant 0 : i32
    %c0_i32_1 = arith.constant 0 : i32
    return %c0_i32, %c0_i32_0 : i32, i32
  }
  func.func @transform_11(%arg0: i32) -> (i32, i32) {
    %c0_i32 = arith.constant 0 : i32
    %c0_i32_0 = arith.constant 0 : i32
    %c0_i32_1 = arith.constant 0 : i32
    return %c0_i32, %c0_i32_0 : i32, i32
  }
  func.func @transform_12(%arg0: i32) -> (i32, i32) {
    %c0_i32 = arith.constant 0 : i32
    %c0_i32_0 = arith.constant 0 : i32
    %c0_i32_1 = arith.constant 0 : i32
    return %c0_i32, %c0_i32_0 : i32, i32
  }
  func.func @transform_13(%arg0: i32) -> (i32, i32, i32, i32) {
    %c0_i32 = arith.constant 0 : i32
    %c0_i32_0 = arith.constant 0 : i32
    %c0_i32_1 = arith.constant 0 : i32
    %c0_i32_2 = arith.constant 0 : i32
    return %arg0, %c0_i32, %c0_i32_0, %c0_i32_1 : i32, i32, i32, i32
  }
}

</mosaic_0001>

<llo_original>
// kernel: res_stage.3
$region0: #{res_stage.3}
  #allocation0 [shape = 'u32[]', space=smem, size = 0x4, offset = 0x4, fixed_abs, tag = 'smem constant byte address 0x4 - core index']
  #allocation1 [shape = 'u32[144,128]{1,0:T(1,128)}', space=vmem, size = 0x12000, scoped, tag = 'internal scratch']
  #allocation2 [shape = 'f32[10,25,8]{2,1,0:T(8,128)}', space=vmem, size = 0x28000, scoped, tag = 'scratch operand']
  %s0 = inlined_call_operand.vmem [shape: bf16[2,8,8,32], index: 0, kind: input, shape index: {}]
  %s1 = inlined_call_operand.vmem [shape: bf16[32,8], index: 1, kind: input, shape index: {}]
  %s2 = inlined_call_operand.vmem [shape: bf16[72,8], index: 2, kind: input, shape index: {}]
  %s3 = inlined_call_operand.vmem [shape: bf16[8,32], index: 3, kind: input, shape index: {}]
  %s4 = inlined_call_operand.vmem [shape: f32[1,8], index: 4, kind: input, shape index: {}]
  %s5 = inlined_call_operand.vmem [shape: f32[1,8], index: 5, kind: input, shape index: {}]
  %s6 = inlined_call_operand.vmem [shape: f32[1,8], index: 6, kind: input, shape index: {}]
  %s7 = inlined_call_operand.vmem [shape: f32[1,8], index: 7, kind: input, shape index: {}]
  %s8 = inlined_call_operand.vmem [shape: f32[1,32], index: 8, kind: input, shape index: {}]
  %s9 = inlined_call_operand.vmem [shape: f32[1,32], index: 9, kind: input, shape index: {}]
  %s10 = inlined_call_operand.vmem [shape: bf16[2,8,8,32], index: 10, kind: output, shape index: {}]
  %s11 = sld [smem:[#allocation0]]
  $region73: #{res_stage.3} parent=0
    _
  %s13 = ssub.s32 1, %s11
  %s14 = scalar_select 0, %s13, %s11
  loop: start=0, step=1, limit=4
  $region2: #{res_stage.3} parent=0 // loop_pre_header
    _
  $region3: #{res_stage.3} parent=0 // loop_header
    %s16 = sphi 0, %s20
    %p17 = scmp.ge.s32.totalorder %s16, 4
    %s26 = sphi 0, %s28
    %s29 = sphi 0, %s26
    %s30 = sphi 0, %s29
    %s46 = sphi 0, %s30
    %s50 = sphi 0, %s50
    %s52 = sphi 0, %s50
    %s53 = sphi 0, %s52
    %s67 = sphi 0, %s53
    %s71 = sphi 0, %s71
    %s73 = sphi 0, %s71
    %s74 = sphi 0, %s73
    %s88 = sphi 0, %s74
    %s92 = sphi 0, %s92
    %s94 = sphi 0, %s92
    %s95 = sphi 0, %s94
    %s109 = sphi 0, %s95
    %s113 = sphi 0, %s113
    %s115 = sphi 0, %s113
    %s116 = sphi 0, %s115
    %s130 = sphi 0, %s116
    %s134 = sphi 0, %s134
    %s136 = sphi 0, %s134
    %s137 = sphi 0, %s136
    %s151 = sphi 0, %s137
    %s155 = sphi 0, %s155
    %s157 = sphi 0, %s155
    %s158 = sphi 0, %s157
    %s172 = sphi 0, %s158
    %s176 = sphi 0, %s176
    %s178 = sphi 0, %s176
    %s179 = sphi 0, %s178
    %s193 = sphi 0, %s179
    %s197 = sphi 0, %s197
    %s199 = sphi 0, %s197
    %s200 = sphi 0, %s199
    %s214 = sphi 0, %s200
    %s218 = sphi 0, %s218
    %s220 = sphi 0, %s218
    %s221 = sphi 0, %s220
    %s235 = sphi 0, %s221
    %s241 = sphi 0, %s243
    %s244 = sphi 0, %s241
    %s245 = sphi 0, %s244
    %s261 = sphi 0, %s245
  $region4: #{res_stage.3} parent=0 // loop_header_branch
    %19 = sbr.rel (%p17) target = $region8
  $region5: #{res_stage.3} parent=0 // loop_body
    %s21 = ssub.s32 %s16, 1
    %s22 = ssub.s32 %s16, 2
    %s23 = sadd.s32 %s16, 1
    %s24 = ssub.s32 %s16, %s23
    %p25 = scmp.eq.s32.totalorder %s24, 0
    %s27 = sadd.s32 %s26, 1
    %s28 = scalar_select %p25, %s26, %s27
    %p31 = pneg %p25
    %p32 = scmp.eq.s32.totalorder %s16, 1
    %p33 = por %p31, %p32
    %p34 = scmp.ne.s32.totalorder %s26, %s29
    %p35 = scmp.eq.s32.totalorder %s16, 0
    %p36 = por %p34, %p35
    %p37 = scmp.ne.s32.totalorder %s26, %s29
    %p38 = scmp.eq.s32.totalorder %s21, 1
    %p39 = por %p37, %p38
    %p40 = scmp.ne.s32.totalorder %s29, %s30
    %p41 = scmp.eq.s32.totalorder %s21, 0
    %p42 = por %p40, %p41
    %p43 = scmp.ne.s32.totalorder %s29, %s30
    %p44 = scmp.eq.s32.totalorder %s22, 1
    %p45 = por %p43, %p44
    %p47 = scmp.ne.s32.totalorder %s30, %s46
    %p48 = scmp.eq.s32.totalorder %s22, 0
    %p49 = por %p47, %p48
    %s51 = sadd.s32 %s50, 1
    %p54 = scmp.eq.s32.totalorder %s16, 1
    %p55 = scmp.ne.s32.totalorder %s50, %s52
    %p56 = scmp.eq.s32.totalorder %s16, 0
    %p57 = por %p55, %p56
    %p58 = scmp.ne.s32.totalorder %s50, %s52
    %p59 = scmp.eq.s32.totalorder %s21, 1
    %p60 = por %p58, %p59
    %p61 = scmp.ne.s32.totalorder %s52, %s53
    %p62 = scmp.eq.s32.totalorder %s21, 0
    %p63 = por %p61, %p62
    %p64 = scmp.ne.s32.totalorder %s52, %s53
    %p65 = scmp.eq.s32.totalorder %s22, 1
    %p66 = por %p64, %p65
    %p68 = scmp.ne.s32.totalorder %s53, %s67
    %p69 = scmp.eq.s32.totalorder %s22, 0
    %p70 = por %p68, %p69
    %s72 = sadd.s32 %s71, 1
    %p75 = scmp.eq.s32.totalorder %s16, 1
    %p76 = scmp.ne.s32.totalorder %s71, %s73
    %p77 = scmp.eq.s32.totalorder %s16, 0
    %p78 = por %p76, %p77
    %p79 = scmp.ne.s32.totalorder %s71, %s73
    %p80 = scmp.eq.s32.totalorder %s21, 1
    %p81 = por %p79, %p80
    %p82 = scmp.ne.s32.totalorder %s73, %s74
    %p83 = scmp.eq.s32.totalorder %s21, 0
    %p84 = por %p82, %p83
    %p85 = scmp.ne.s32.totalorder %s73, %s74
    %p86 = scmp.eq.s32.totalorder %s22, 1
    %p87 = por %p85, %p86
    %p89 = scmp.ne.s32.totalorder %s74, %s88
    %p90 = scmp.eq.s32.totalorder %s22, 0
    %p91 = por %p89, %p90
    %s93 = sadd.s32 %s92, 1
    %p96 = scmp.eq.s32.totalorder %s16, 1
    %p97 = scmp.ne.s32.totalorder %s92, %s94
    %p98 = scmp.eq.s32.totalorder %s16, 0
    %p99 = por %p97, %p98
    %p100 = scmp.ne.s32.totalorder %s92, %s94
    %p101 = scmp.eq.s32.totalorder %s21, 1
    %p102 = por %p100, %p101
    %p103 = scmp.ne.s32.totalorder %s94, %s95
    %p104 = scmp.eq.s32.totalorder %s21, 0
    %p105 = por %p103, %p104
    %p106 = scmp.ne.s32.totalorder %s94, %s95
    %p107 = scmp.eq.s32.totalorder %s22, 1
    %p108 = por %p106, %p107
    %p110 = scmp.ne.s32.totalorder %s95, %s109
    %p111 = scmp.eq.s32.totalorder %s22, 0
    %p112 = por %p110, %p111
    %s114 = sadd.s32 %s113, 1
    %p117 = scmp.eq.s32.totalorder %s16, 1
    %p118 = scmp.ne.s32.totalorder %s113, %s115
    %p119 = scmp.eq.s32.totalorder %s16, 0
    %p120 = por %p118, %p119
    %p121 = scmp.ne.s32.totalorder %s113, %s115
    %p122 = scmp.eq.s32.totalorder %s21, 1
    %p123 = por %p121, %p122
    %p124 = scmp.ne.s32.totalorder %s115, %s116
    %p125 = scmp.eq.s32.totalorder %s21, 0
    %p126 = por %p124, %p125
    %p127 = scmp.ne.s32.totalorder %s115, %s116
    %p128 = scmp.eq.s32.totalorder %s22, 1
    %p129 = por %p127, %p128
    %p131 = scmp.ne.s32.totalorder %s116, %s130
    %p132 = scmp.eq.s32.totalorder %s22, 0
    %p133 = por %p131, %p132
    %s135 = sadd.s32 %s134, 1
    %p138 = scmp.eq.s32.totalorder %s16, 1
    %p139 = scmp.ne.s32.totalorder %s134, %s136
    %p140 = scmp.eq.s32.totalorder %s16, 0
    %p141 = por %p139, %p140
    %p142 = scmp.ne.s32.totalorder %s134, %s136
    %p143 = scmp.eq.s32.totalorder %s21, 1
    %p144 = por %p142, %p143
    %p145 = scmp.ne.s32.totalorder %s136, %s137
    %p146 = scmp.eq.s32.totalorder %s21, 0
    %p147 = por %p145, %p146
    %p148 = scmp.ne.s32.totalorder %s136, %s137
    %p149 = scmp.eq.s32.totalorder %s22, 1
    %p150 = por %p148, %p149
    %p152 = scmp.ne.s32.totalorder %s137, %s151
    %p153 = scmp.eq.s32.totalorder %s22, 0
    %p154 = por %p152, %p153
    %s156 = sadd.s32 %s155, 1
    %p159 = scmp.eq.s32.totalorder %s16, 1
    %p160 = scmp.ne.s32.totalorder %s155, %s157
    %p161 = scmp.eq.s32.totalorder %s16, 0
    %p162 = por %p160, %p161
    %p163 = scmp.ne.s32.totalorder %s155, %s157
    %p164 = scmp.eq.s32.totalorder %s21, 1
    %p165 = por %p163, %p164
    %p166 = scmp.ne.s32.totalorder %s157, %s158
    %p167 = scmp.eq.s32.totalorder %s21, 0
    %p168 = por %p166, %p167
    %p169 = scmp.ne.s32.totalorder %s157, %s158
    %p170 = scmp.eq.s32.totalorder %s22, 1
    %p171 = por %p169, %p170
    %p173 = scmp.ne.s32.totalorder %s158, %s172
    %p174 = scmp.eq.s32.totalorder %s22, 0
    %p175 = por %p173, %p174
    %s177 = sadd.s32 %s176, 1
    %p180 = scmp.eq.s32.totalorder %s16, 1
    %p181 = scmp.ne.s32.totalorder %s176, %s178
    %p182 = scmp.eq.s32.totalorder %s16, 0
    %p183 = por %p181, %p182
    %p184 = scmp.ne.s32.totalorder %s176, %s178
    %p185 = scmp.eq.s32.totalorder %s21, 1
    %p186 = por %p184, %p185
    %p187 = scmp.ne.s32.totalorder %s178, %s179
    %p188 = scmp.eq.s32.totalorder %s21, 0
    %p189 = por %p187, %p188
    %p190 = scmp.ne.s32.totalorder %s178, %s179
    %p191 = scmp.eq.s32.totalorder %s22, 1
    %p192 = por %p190, %p191
    %p194 = scmp.ne.s32.totalorder %s179, %s193
    %p195 = scmp.eq.s32.totalorder %s22, 0
    %p196 = por %p194, %p195
    %s198 = sadd.s32 %s197, 1
    %p201 = scmp.eq.s32.totalorder %s16, 1
    %p202 = scmp.ne.s32.totalorder %s197, %s199
    %p203 = scmp.eq.s32.totalorder %s16, 0
    %p204 = por %p202, %p203
    %p205 = scmp.ne.s32.totalorder %s197, %s199
    %p206 = scmp.eq.s32.totalorder %s21, 1
    %p207 = por %p205, %p206
    %p208 = scmp.ne.s32.totalorder %s199, %s200
    %p209 = scmp.eq.s32.totalorder %s21, 0
    %p210 = por %p208, %p209
    %p211 = scmp.ne.s32.totalorder %s199, %s200
    %p212 = scmp.eq.s32.totalorder %s22, 1
    %p213 = por %p211, %p212
    %p215 = scmp.ne.s32.totalorder %s200, %s214
    %p216 = scmp.eq.s32.totalorder %s22, 0
    %p217 = por %p215, %p216
    %s219 = sadd.s32 %s218, 1
    %p222 = scmp.eq.s32.totalorder %s16, 1
    %p223 = scmp.ne.s32.totalorder %s218, %s220
    %p224 = scmp.eq.s32.totalorder %s16, 0
    %p225 = por %p223, %p224
    %p226 = scmp.ne.s32.totalorder %s218, %s220
    %p227 = scmp.eq.s32.totalorder %s21, 1
    %p228 = por %p226, %p227
    %p229 = scmp.ne.s32.totalorder %s220, %s221
    %p230 = scmp.eq.s32.totalorder %s21, 0
    %p231 = por %p229, %p230
    %p232 = scmp.ne.s32.totalorder %s220, %s221
    %p233 = scmp.eq.s32.totalorder %s22, 1
    %p234 = por %p232, %p233
    %p236 = scmp.ne.s32.totalorder %s221, %s235
    %p237 = scmp.eq.s32.totalorder %s22, 0
    %p238 = por %p236, %p237
    %s239 = ssub.s32 %s16, %s23
    %p240 = scmp.eq.s32.totalorder %s239, 0
    %s242 = sadd.s32 %s241, 1
    %s243 = scalar_select %p240, %s241, %s242
    %p246 = pneg %p240
    %p247 = scmp.eq.s32.totalorder %s16, 1
    %p248 = por %p246, %p247
    %p249 = scmp.ne.s32.totalorder %s241, %s244
    %p250 = scmp.eq.s32.totalorder %s16, 0
    %p251 = por %p249, %p250
    %p252 = scmp.ne.s32.totalorder %s241, %s244
    %p253 = scmp.eq.s32.totalorder %s21, 1
    %p254 = por %p252, %p253
    %p255 = scmp.ne.s32.totalorder %s244, %s245
    %p256 = scmp.eq.s32.totalorder %s21, 0
    %p257 = por %p255, %p256
    %p258 = scmp.ne.s32.totalorder %s244, %s245
    %p259 = scmp.eq.s32.totalorder %s22, 1
    %p260 = por %p258, %p259
    %p262 = scmp.ne.s32.totalorder %s245, %s261
    %p263 = scmp.eq.s32.totalorder %s22, 0
    %p264 = por %p262, %p263
    %p265 = scmp.le.s32.totalorder 1, %s16
    %p266 = scmp.lt.s32.totalorder %s16, 3
    %p267 = pnand %p265, %p266
    %p268 = pneg %p267
    // Predicated region
    $region9: #{res_stage.3} parent=5 // pred_check
      _
    $region10: #{res_stage.3} parent=5 // pred_check_branch
      %270 = sbr.rel (%p267) target = $region12
    $region11: #{res_stage.3} parent=5 // pred_region
      %s271 = ssub.s32 %s16, 1
      // Predicated region
      $region13: #{res_stage.3} parent=11 // pred_check
        %p272 = pneg %p63
      $region14: #{res_stage.3} parent=11 // pred_check_branch
        %274 = sbr.rel (%p272) target = $region16
      $region15: #{res_stage.3} parent=11 // pred_region
        _
      $region16: #{res_stage.3} parent=11 // pred_fallthru
        _
      // Predicated region
      $region17: #{res_stage.3} parent=11 // pred_check
        %p275 = pneg %p84
      $region18: #{res_stage.3} parent=11 // pred_check_branch
        %277 = sbr.rel (%p275) target = $region20
      $region19: #{res_stage.3} parent=11 // pred_region
        _
      $region20: #{res_stage.3} parent=11 // pred_fallthru
        _
      // Predicated region
      $region21: #{res_stage.3} parent=11 // pred_check
        %p278 = pneg %p105
      $region22: #{res_stage.3} parent=11 // pred_check_branch
        %280 = sbr.rel (%p278) target = $region24
      $region23: #{res_stage.3} parent=11 // pred_region
        _
      $region24: #{res_stage.3} parent=11 // pred_fallthru
        _
      // Predicated region
      $region25: #{res_stage.3} parent=11 // pred_check
        %p281 = pneg %p126
      $region26: #{res_stage.3} parent=11 // pred_check_branch
        %283 = sbr.rel (%p281) target = $region28
      $region27: #{res_stage.3} parent=11 // pred_region
        _
      $region28: #{res_stage.3} parent=11 // pred_fallthru
        _
      // Predicated region
      $region29: #{res_stage.3} parent=11 // pred_check
        %p284 = pneg %p147
      $region30: #{res_stage.3} parent=11 // pred_check_branch
        %286 = sbr.rel (%p284) target = $region32
      $region31: #{res_stage.3} parent=11 // pred_region
        _
      $region32: #{res_stage.3} parent=11 // pred_fallthru
        _
      // Predicated region
      $region33: #{res_stage.3} parent=11 // pred_check
        %p287 = pneg %p168
      $region34: #{res_stage.3} parent=11 // pred_check_branch
        %289 = sbr.rel (%p287) target = $region36
      $region35: #{res_stage.3} parent=11 // pred_region
        _
      $region36: #{res_stage.3} parent=11 // pred_fallthru
        _
      // Predicated region
      $region37: #{res_stage.3} parent=11 // pred_check
        %p290 = pneg %p189
      $region38: #{res_stage.3} parent=11 // pred_check_branch
        %292 = sbr.rel (%p290) target = $region40
      $region39: #{res_stage.3} parent=11 // pred_region
        _
      $region40: #{res_stage.3} parent=11 // pred_fallthru
        _
      // Predicated region
      $region41: #{res_stage.3} parent=11 // pred_check
        %p293 = pneg %p210
      $region42: #{res_stage.3} parent=11 // pred_check_branch
        %295 = sbr.rel (%p293) target = $region44
      $region43: #{res_stage.3} parent=11 // pred_region
        _
      $region44: #{res_stage.3} parent=11 // pred_fallthru
        _
      // Predicated region
      $region45: #{res_stage.3} parent=11 // pred_check
        %p296 = pneg %p231
      $region46: #{res_stage.3} parent=11 // pred_check_branch
        %298 = sbr.rel (%p296) target = $region48
      $region47: #{res_stage.3} parent=11 // pred_region
        _
      $region48: #{res_stage.3} parent=11 // pred_fallthru
        _
    $region12: #{res_stage.3} parent=5 // pred_fallthru
      _
    %p299 = scmp.lt.s32.totalorder %s16, 2
    // Predicated region
    $region49: #{res_stage.3} parent=5 // pred_check
      %p300 = pneg %p299
    $region50: #{res_stage.3} parent=5 // pred_check_branch
      %302 = sbr.rel (%p300) target = $region52
    $region51: #{res_stage.3} parent=5 // pred_region
      // Predicated region
      $region53: #{res_stage.3} parent=51 // pred_check
        %p303 = pneg %p36
      $region54: #{res_stage.3} parent=51 // pred_check_branch
        %305 = sbr.rel (%p303) target = $region56
      $region55: #{res_stage.3} parent=51 // pred_region
        %p306 = scmp.lt.s32.totalorder %s16, 1
        %s307 = scalar_select %p306, %s16, 1
        %s308 = smul.addr %s307, 8
        %s309 = smul.addr %s308, 4
        %s310 = scalar_lea.vmem %s0, %s309
      $region56: #{res_stage.3} parent=51 // pred_fallthru
        _
    $region52: #{res_stage.3} parent=5 // pred_fallthru
      _
    %p311 = scmp.le.s32.totalorder 1, %s16
    %p312 = scmp.lt.s32.totalorder %s16, 3
    %p313 = pnand %p311, %p312
    %p314 = pneg %p313
    // Predicated region
    $region57: #{res_stage.3} parent=5 // pred_check
      _
    $region58: #{res_stage.3} parent=5 // pred_check_branch
      %316 = sbr.rel (%p313) target = $region60
    $region59: #{res_stage.3} parent=5 // pred_region
      %s317 = ssub.s32 %s16, 1
      %p318 = scmp.lt.s32.totalorder %s21, 1
      %s319 = scalar_select %p318, %s21, 1
      %s320 = smul.addr %s319, 8
      %s321 = smul.addr %s320, 4
      %s322 = scalar_lea.vmem %s0, %s321
      %p323 = pneg %p42
      %p324 = pneg %p39
      %p325 = pneg %p63
      %p326 = pneg %p60
      %p327 = pneg %p84
      %p328 = pneg %p81
      %p329 = pneg %p105
      %p330 = pneg %p102
      %p331 = pneg %p126
      %p332 = pneg %p123
      %p333 = pneg %p147
      %p334 = pneg %p144
      %p335 = pneg %p168
      %p336 = pneg %p165
      %p337 = pneg %p189
      %p338 = pneg %p186
      %p339 = pneg %p210
      %p340 = pneg %p207
      %p341 = pneg %p231
      %p342 = pneg %p228
      %p343 = pneg %p257
      %p344 = pneg %p254
      %p345 = scmp.lt.s32.totalorder %s21, 1
      %s346 = scalar_select %p345, %s21, 1
      %s347 = smul.addr %s346, 8
      %s348 = smul.addr %s347, 4
      %s349 = scalar_lea.vmem %s10, %s348
      %p350 = scmp.lt.s32.totalorder %s21, 1
      %s351 = scalar_select %p350, %s21, 1
      %s352 = smul.addr %s351, 8
      %s353 = smul.addr %s352, 4
      %s354 = scalar_lea.vmem %s0, %s353
      %p355 = scmp.lt.s32.totalorder %s21, 1
      %s356 = scalar_select %p355, %s21, 1
      %s357 = smul.addr %s356, 8
      %s358 = smul.addr %s357, 4
      %s359 = scalar_lea.vmem %s10, %s358
      %vm361 = vcmask 64512
      %362 = vst.msk [vmem:[#allocation2 + $0xf] sm:$0xff] %vm361, 0.0
      %vm363 = vcmask 58368
      %364 = vst.msk [vmem:[#allocation2 + $0x17] sm:$0x3] %vm363, 0.0
      %s365 = scalar_lea.vmem [#allocation2], 288
      %366 = vst.msk [vmem:[%s365 + $0xf] sm:$0xff] %vm361, 0.0
      %367 = vst.msk [vmem:[%s365 + $0x17] sm:$0x3] %vm363, 0.0
      %vm368 = vcmask 57344
      %369 = vst.msk [vmem:[#allocation2 + $0xf] sm:$0x1] %vm368, 0.0
      %370 = vst.msk [vmem:[#allocation2 + $0x2f] sm:$0x1] %vm368, 0.0
      %371 = vst.msk [vmem:[#allocation2 + $0x4f] sm:$0x1] %vm368, 0.0
      %372 = vst.msk [vmem:[#allocation2 + $0x6f] sm:$0x1] %vm368, 0.0
      %373 = vst.msk [vmem:[#allocation2 + $0x8f] sm:$0x1] %vm368, 0.0
      %374 = vst.msk [vmem:[#allocation2 + $0xaf] sm:$0x1] %vm368, 0.0
      %375 = vst.msk [vmem:[#allocation2 + $0xcf] sm:$0x1] %vm368, 0.0
      %376 = vst.msk [vmem:[#allocation2 + $0xef] sm:$0x1] %vm368, 0.0
      %377 = vst.msk [vmem:[#allocation2 + $0x10f] sm:$0x1] %vm368, 0.0
      %378 = vst.msk [vmem:[#allocation2 + $0x12f] sm:$0x1] %vm368, 0.0
      %379 = vst.msk [vmem:[#allocation2 + $0x18] sm:$0x1] %vm368, 0.0
      %380 = vst.msk [vmem:[#allocation2 + $0x38] sm:$0x1] %vm368, 0.0
      %381 = vst.msk [vmem:[#allocation2 + $0x58] sm:$0x1] %vm368, 0.0
      %382 = vst.msk [vmem:[#allocation2 + $0x78] sm:$0x1] %vm368, 0.0
      %383 = vst.msk [vmem:[#allocation2 + $0x98] sm:$0x1] %vm368, 0.0
      %384 = vst.msk [vmem:[#allocation2 + $0xb8] sm:$0x1] %vm368, 0.0
      %385 = vst.msk [vmem:[#allocation2 + $0xd8] sm:$0x1] %vm368, 0.0
      %386 = vst.msk [vmem:[#allocation2 + $0xf8] sm:$0x1] %vm368, 0.0
      %387 = vst.msk [vmem:[#allocation2 + $0x118] sm:$0x1] %vm368, 0.0
      %388 = vst.msk [vmem:[#allocation2 + $0x138] sm:$0x1] %vm368, 0.0
      %v389 = vld [vmem:[%s354] sm:$0xf]
      %v390 = vld [vmem:[%s354 + $0x4] sm:$0xf]
      %v391 = vld [vmem:[%s354 + $0x8] sm:$0xf]
      %v392 = vld [vmem:[%s354 + $0xc] sm:$0xf]
      %v393 = vld [vmem:[%s354 + $0x10] sm:$0xf]
      %v394 = vld [vmem:[%s354 + $0x14] sm:$0xf]
      %v395 = vld [vmem:[%s354 + $0x18] sm:$0xf]
      %v396 = vld [vmem:[%s354 + $0x1c] sm:$0xf]
      %v397 = vld [vmem:[%s1] sm:$0xf]
      %v398 = vld [vmem:[%s1 + $0x4] sm:$0xf]
      %v399 = vld [vmem:[%s1 + $0x8] sm:$0xf]
      %v400 = vld [vmem:[%s1 + $0xc] sm:$0xf]
      %v409 = vunpack.c.l.b16 %v389
      %v410 = vunpack.c.l.b16 %v390
      %v411 = vunpack.c.l.b16 %v391
      %v412 = vunpack.c.l.b16 %v392
      %v413 = vunpack.c.l.b16 %v393
      %v414 = vunpack.c.l.b16 %v394
      %v415 = vunpack.c.l.b16 %v395
      %v416 = vunpack.c.l.b16 %v396
      %v417 = vpack.c.b16 %v410, %v409
      %v418 = vpack.c.b16 %v412, %v411
      %v419 = vpack.c.b16 %v414, %v413
      %v420 = vpack.c.b16 %v416, %v415
      %v425 = vunpack.c.l.b16 %v397
      %v426 = vunpack.c.l.b16 %v398
      %v427 = vunpack.c.l.b16 %v399
      %v428 = vunpack.c.l.b16 %v400
      %v429 = vpack.c.b16 %v426, %v425
      %v430 = vpack.c.b16 %v428, %v427
      %vm433 = vcmask 261120
      %v435 = vsel %vm433, %v417, 0
      %v438 = vsel %vm433, %v418, 0
      %v441 = vsel %vm433, %v419, 0
      %v444 = vsel %vm433, %v420, 0
      %446 = vmatprep.subr.bf16.mxu0 0
      %447 = vmatpush1.bf16.msra.mxu0 0
      %448 = vmatprep.subr.bf16.mxu0 0
      %449 = vmatpush1.bf16.msra.mxu0 0
      %450 = vmatprep.subr.bf16.mxu0 0
      %451 = vmatpush1.bf16.msra.mxu0 0
      %452 = vmatprep.subr.bf16.mxu0 0
      %453 = vmatpush1.bf16.msra.mxu0 0
      %454 = vmatprep.subr.bf16.mxu0 0
      %455 = vmatpush1.bf16.msra.mxu0 0
      %456 = vmatprep.subr.bf16.mxu0 0
      %457 = vmatpush1.bf16.msra.mxu0 0
      %458 = vmatprep.subr.bf16.mxu0 0
      %459 = vmatpush1.bf16.msra.mxu0 %v430
      %460 = vmatprep.subr.bf16.mxu0 0
      %461 = vmatpush1.bf16.msra.mxu0 %v429
      %462 = vmatprep.subr.bf16.mxu0 0
      %463 = vmatpush2.bf16.msra.mxu0 0
      %464 = vmatprep.subr.bf16.mxu0 0
      %465 = vmatpush2.bf16.msra.mxu0 0
      %466 = vmatprep.subr.bf16.mxu0 0
      %467 = vmatpush2.bf16.msra.mxu0 0
      %468 = vmatprep.subr.bf16.mxu0 0
      %469 = vmatpush2.bf16.msra.mxu0 0
      %470 = vmatprep.subr.bf16.mxu0 0
      %471 = vmatpush2.bf16.msra.mxu0 0
      %472 = vmatprep.subr.bf16.mxu0 0
      %473 = vmatpush2.bf16.msra.mxu0 0
      %474 = vmatprep.subr.bf16.mxu0 0
      %475 = vmatpush2.bf16.msra.mxu0 0
      %476 = vmatprep.subr.bf16.mxu0 0
      %477 = vmatpush2.bf16.msra.mxu0 0
      %478 = vmatprep.mubr.bf16.mxu0 0
      %479 = vmatmul.mubr.bf16.gmra.mxu0 %v435
      %v480 = vpop.f32.mrf.mxu0
      %v481 = vadd.f32 0.0, %v480
      %v482 = vpop.f32.mrf.mxu0
      %v483 = vpop.f32.mrf.mxu0
      %v484 = vadd.f32 0.0, %v483
      %v485 = vpop.f32.mrf.mxu0
      %486 = vmatprep.mubr.bf16.mxu0 0
      %487 = vmatmul.mubr.bf16.gmra.mxu0 %v438
      %v488 = vpop.f32.mrf.mxu0
      %v489 = vadd.f32 0.0, %v488
      %v490 = vpop.f32.mrf.mxu0
      %v491 = vpop.f32.mrf.mxu0
      %v492 = vadd.f32 0.0, %v491
      %v493 = vpop.f32.mrf.mxu0
      %494 = vmatprep.mubr.bf16.mxu0 0
      %495 = vmatmul.mubr.bf16.gmra.mxu0 %v441
      %v496 = vpop.f32.mrf.mxu0
      %v497 = vadd.f32 0.0, %v496
      %v498 = vpop.f32.mrf.mxu0
      %v499 = vpop.f32.mrf.mxu0
      %v500 = vadd.f32 0.0, %v499
      %v501 = vpop.f32.mrf.mxu0
      %502 = vmatprep.mubr.bf16.mxu0 0
      %503 = vmatmul.mubr.bf16.gmra.mxu0 %v444
      %v504 = vpop.f32.mrf.mxu0
      %v505 = vadd.f32 0.0, %v504
      %v506 = vpop.f32.mrf.mxu0
      %v507 = vpop.f32.mrf.mxu0
      %v508 = vadd.f32 0.0, %v507
      %v509 = vpop.f32.mrf.mxu0
      %510 = vdwg.mxu0
      %v511 = vld [vmem:[%s4] sm:$0x1]
      %v513 = vlaneseq
      %v514 = vshrl.u32 %v513, 7
      %v515 = vsub.s32 0, %v514
      %v516 = vrot.slane %v511, %v515
      %v518 = vmul.f32 %v481, %v516
      %v519 = vmul.f32 %v484, %v516
      %v520 = vmul.f32 %v489, %v516
      %v521 = vmul.f32 %v492, %v516
      %v522 = vmul.f32 %v497, %v516
      %v523 = vmul.f32 %v500, %v516
      %v524 = vmul.f32 %v505, %v516
      %v525 = vmul.f32 %v508, %v516
      %v526 = vld [vmem:[%s5] sm:$0x1]
      %v528 = vlaneseq
      %v529 = vshrl.u32 %v528, 7
      %v530 = vsub.s32 0, %v529
      %v531 = vrot.slane %v526, %v530
      %v533 = vadd.f32 %v518, %v531
      %v534 = vadd.f32 %v519, %v531
      %v535 = vadd.f32 %v520, %v531
      %v536 = vadd.f32 %v521, %v531
      %v537 = vadd.f32 %v522, %v531
      %v538 = vadd.f32 %v523, %v531
      %v539 = vadd.f32 %v524, %v531
      %v540 = vadd.f32 %v525, %v531
      %v541 = vmax.f32 %v533, 0.0
      %v542 = vmax.f32 %v534, 0.0
      %v543 = vmax.f32 %v535, 0.0
      %v544 = vmax.f32 %v536, 0.0
      %v545 = vmax.f32 %v537, 0.0
      %v546 = vmax.f32 %v538, 0.0
      %v547 = vmax.f32 %v539, 0.0
      %v548 = vmax.f32 %v540, 0.0
      %s549 = scalar_lea.vmem [#allocation2], 32
      %550 = vst.msk [vmem:[%s549 + $0x10] sm:$0xff] %vm361, %v541
      %551 = vst.msk [vmem:[%s549 + $0x30] sm:$0xff] %vm361, %v542
      %552 = vst.msk [vmem:[%s549 + $0x50] sm:$0xff] %vm361, %v543
      %553 = vst.msk [vmem:[%s549 + $0x70] sm:$0xff] %vm361, %v544
      %554 = vst.msk [vmem:[%s549 + $0x90] sm:$0xff] %vm361, %v545
      %555 = vst.msk [vmem:[%s549 + $0xb0] sm:$0xff] %vm361, %v546
      %556 = vst.msk [vmem:[%s549 + $0xd0] sm:$0xff] %vm361, %v547
      %557 = vst.msk [vmem:[%s549 + $0xf0] sm:$0xff] %vm361, %v548
      %v558 = vld [vmem:[#allocation2 + $0xf] sm:$0xff]
      %v559 = vld [vmem:[#allocation2 + $0x2f] sm:$0xff]
      %v560 = vld [vmem:[#allocation2 + $0x4f] sm:$0xff]
      %v561 = vld [vmem:[#allocation2 + $0x6f] sm:$0xff]
      %v562 = vld [vmem:[#allocation2 + $0x8f] sm:$0xff]
      %v563 = vld [vmem:[#allocation2 + $0xaf] sm:$0xff]
      %v564 = vld [vmem:[#allocation2 + $0xcf] sm:$0xff]
      %v565 = vld [vmem:[#allocation2 + $0xef] sm:$0xff]
      %v566 = vpack.c.bf16 %v559, %v558
      %v567 = vpack.c.bf16 %v561, %v560
      %v568 = vpack.c.bf16 %v563, %v562
      %v569 = vpack.c.bf16 %v565, %v564
      %v570 = vld [vmem:[%s2] sm:$0xf]
      %v571 = vld [vmem:[#allocation2 + $0x10] sm:$0xff]
      %v572 = vld [vmem:[#allocation2 + $0x30] sm:$0xff]
      %v573 = vld [vmem:[#allocation2 + $0x50] sm:$0xff]
      %v574 = vld [vmem:[#allocation2 + $0x70] sm:$0xff]
      %v575 = vld [vmem:[#allocation2 + $0x90] sm:$0xff]
      %v576 = vld [vmem:[#allocation2 + $0xb0] sm:$0xff]
      %v577 = vld [vmem:[#allocation2 + $0xd0] sm:$0xff]
      %v578 = vld [vmem:[#allocation2 + $0xf0] sm:$0xff]
      %v579 = vpack.c.bf16 %v572, %v571
      %v580 = vpack.c.bf16 %v574, %v573
      %v581 = vpack.c.bf16 %v576, %v575
      %v582 = vpack.c.bf16 %v578, %v577
      %v583 = vld [vmem:[%s2 + $0x4] sm:$0xf]
      %v585 = vsel %vm361, %v579, 0
      %v588 = vsel %vm361, %v580, 0
      %v591 = vsel %vm361, %v581, 0
      %v594 = vsel %vm361, %v582, 0
      %vm596 = vcmask 1043456
      %v598 = vsel %vm596, %v583, 0
      %600 = vmatprep.subr.bf16.mxu0 0
      %601 = vmatpush1.bf16.msra.mxu0 0
      %602 = vmatprep.subr.bf16.mxu0 0
      %603 = vmatpush1.bf16.msra.mxu0 0
      %604 = vmatprep.subr.bf16.mxu0 0
      %605 = vmatpush1.bf16.msra.mxu0 0
      %606 = vmatprep.subr.bf16.mxu0 0
      %607 = vmatpush1.bf16.msra.mxu0 0
      %608 = vmatprep.subr.bf16.mxu0 0
      %609 = vmatpush1.bf16.msra.mxu0 0
      %610 = vmatprep.subr.bf16.mxu0 0
      %611 = vmatpush1.bf16.msra.mxu0 0
      %612 = vmatprep.subr.bf16.mxu0 0
      %613 = vmatpush1.bf16.msra.mxu0 0
      %614 = vmatprep.subr.bf16.mxu0 0
      %615 = vmatpush1.bf16.msra.mxu0 %v598
      %616 = vmatprep.subr.bf16.mxu0 0
      %617 = vmatpush2.bf16.msra.mxu0 0
      %618 = vmatprep.subr.bf16.mxu0 0
      %619 = vmatpush2.bf16.msra.mxu0 0
      %620 = vmatprep.subr.bf16.mxu0 0
      %621 = vmatpush2.bf16.msra.mxu0 0
      %622 = vmatprep.subr.bf16.mxu0 0
      %623 = vmatpush2.bf16.msra.mxu0 0
      %624 = vmatprep.subr.bf16.mxu0 0
      %625 = vmatpush2.bf16.msra.mxu0 0
      %626 = vmatprep.subr.bf16.mxu0 0
      %627 = vmatpush2.bf16.msra.mxu0 0
      %628 = vmatprep.subr.bf16.mxu0 0
      %629 = vmatpush2.bf16.msra.mxu0 0
      %630 = vmatprep.subr.bf16.mxu0 0
      %631 = vmatpush2.bf16.msra.mxu0 0
      %632 = vmatprep.mubr.bf16.mxu0 0
      %633 = vmatmul.mubr.bf16.gmra.mxu0 %v585
      %v634 = vpop.f32.mrf.mxu0
      %v635 = vadd.f32 0.0, %v634
      %v636 = vpop.f32.mrf.mxu0
      %v637 = vpop.f32.mrf.mxu0
      %v638 = vadd.f32 0.0, %v637
      %v639 = vpop.f32.mrf.mxu0
      %640 = vmatprep.mubr.bf16.mxu0 0
      %641 = vmatmul.mubr.bf16.gmra.mxu0 %v588
      %v642 = vpop.f32.mrf.mxu0
      %v643 = vadd.f32 0.0, %v642
      %v644 = vpop.f32.mrf.mxu0
      %v645 = vpop.f32.mrf.mxu0
      %v646 = vadd.f32 0.0, %v645
      %v647 = vpop.f32.mrf.mxu0
      %648 = vmatprep.mubr.bf16.mxu0 0
      %649 = vmatmul.mubr.bf16.gmra.mxu0 %v591
      %v650 = vpop.f32.mrf.mxu0
      %v651 = vadd.f32 0.0, %v650
      %v652 = vpop.f32.mrf.mxu0
      %v653 = vpop.f32.mrf.mxu0
      %v654 = vadd.f32 0.0, %v653
      %v655 = vpop.f32.mrf.mxu0
      %656 = vmatprep.mubr.bf16.mxu0 0
      %657 = vmatmul.mubr.bf16.gmra.mxu0 %v594
      %v658 = vpop.f32.mrf.mxu0
      %v659 = vadd.f32 0.0, %v658
      %v660 = vpop.f32.mrf.mxu0
      %v661 = vpop.f32.mrf.mxu0
      %v662 = vadd.f32 0.0, %v661
      %v663 = vpop.f32.mrf.mxu0
      %664 = vdwg.mxu0
      %v666 = vsel %vm361, %v566, 0
      %v669 = vsel %vm361, %v567, 0
      %v672 = vsel %vm361, %v568, 0
      %v675 = vsel %vm361, %v569, 0
      %v678 = vsel %vm596, %v570, 0
      %680 = vmatprep.subr.bf16.mxu0 0
      %681 = vmatpush1.bf16.msra.mxu0 0
      %682 = vmatprep.subr.bf16.mxu0 0
      %683 = vmatpush1.bf16.msra.mxu0 0
      %684 = vmatprep.subr.bf16.mxu0 0
      %685 = vmatpush1.bf16.msra.mxu0 0
      %686 = vmatprep.subr.bf16.mxu0 0
      %687 = vmatpush1.bf16.msra.mxu0 0
      %688 = vmatprep.subr.bf16.mxu0 0
      %689 = vmatpush1.bf16.msra.mxu0 0
      %690 = vmatprep.subr.bf16.mxu0 0
      %691 = vmatpush1.bf16.msra.mxu0 0
      %692 = vmatprep.subr.bf16.mxu0 0
      %693 = vmatpush1.bf16.msra.mxu0 0
      %694 = vmatprep.subr.bf16.mxu0 0
      %695 = vmatpush1.bf16.msra.mxu0 %v678
      %696 = vmatprep.subr.bf16.mxu0 0
      %697 = vmatpush2.bf16.msra.mxu0 0
      %698 = vmatprep.subr.bf16.mxu0 0
      %699 = vmatpush2.bf16.msra.mxu0 0
      %700 = vmatprep.subr.bf16.mxu0 0
      %701 = vmatpush2.bf16.msra.mxu0 0
      %702 = vmatprep.subr.bf16.mxu0 0
      %703 = vmatpush2.bf16.msra.mxu0 0
      %704 = vmatprep.subr.bf16.mxu0 0
      %705 = vmatpush2.bf16.msra.mxu0 0
      %706 = vmatprep.subr.bf16.mxu0 0
      %707 = vmatpush2.bf16.msra.mxu0 0
      %708 = vmatprep.subr.bf16.mxu0 0
      %709 = vmatpush2.bf16.msra.mxu0 0
      %710 = vmatprep.subr.bf16.mxu0 0
      %711 = vmatpush2.bf16.msra.mxu0 0
      %712 = vmatprep.mubr.bf16.mxu0 0
      %713 = vmatmul.mubr.bf16.gmra.mxu0 %v666
      %v714 = vpop.f32.mrf.mxu0
      %v715 = vadd.f32 %v635, %v714
      %v716 = vpop.f32.mrf.mxu0
      %v717 = vpop.f32.mrf.mxu0
      %v718 = vadd.f32 %v638, %v717
      %v719 = vpop.f32.mrf.mxu0
      %720 = vmatprep.mubr.bf16.mxu0 0
      %721 = vmatmul.mubr.bf16.gmra.mxu0 %v669
      %v722 = vpop.f32.mrf.mxu0
      %v723 = vadd.f32 %v643, %v722
      %v724 = vpop.f32.mrf.mxu0
      %v725 = vpop.f32.mrf.mxu0
      %v726 = vadd.f32 %v646, %v725
      %v727 = vpop.f32.mrf.mxu0
      %728 = vmatprep.mubr.bf16.mxu0 0
      %729 = vmatmul.mubr.bf16.gmra.mxu0 %v672
      %v730 = vpop.f32.mrf.mxu0
      %v731 = vadd.f32 %v651, %v730
      %v732 = vpop.f32.mrf.mxu0
      %v733 = vpop.f32.mrf.mxu0
      %v734 = vadd.f32 %v654, %v733
      %v735 = vpop.f32.mrf.mxu0
      %736 = vmatprep.mubr.bf16.mxu0 0
      %737 = vmatmul.mubr.bf16.gmra.mxu0 %v675
      %v738 = vpop.f32.mrf.mxu0
      %v739 = vadd.f32 %v659, %v738
      %v740 = vpop.f32.mrf.mxu0
      %v741 = vpop.f32.mrf.mxu0
      %v742 = vadd.f32 %v662, %v741
      %v743 = vpop.f32.mrf.mxu0
      %744 = vdwg.mxu0
      %v745 = vld [vmem:[#allocation2 + $0x11] sm:$0xff]
      %v746 = vld [vmem:[#allocation2 + $0x31] sm:$0xff]
      %v747 = vld [vmem:[#allocation2 + $0x51] sm:$0xff]
      %v748 = vld [vmem:[#allocation2 + $0x71] sm:$0xff]
      %v749 = vld [vmem:[#allocation2 + $0x91] sm:$0xff]
      %v750 = vld [vmem:[#allocation2 + $0xb1] sm:$0xff]
      %v751 = vld [vmem:[#allocation2 + $0xd1] sm:$0xff]
      %v752 = vld [vmem:[#allocation2 + $0xf1] sm:$0xff]
      %v753 = vpack.c.bf16 %v746, %v745
      %v754 = vpack.c.bf16 %v748, %v747
      %v755 = vpack.c.bf16 %v750, %v749
      %v756 = vpack.c.bf16 %v752, %v751
      %v757 = vld [vmem:[%s2 + $0x8] sm:$0xf]
      %v759 = vsel %vm361, %v753, 0
      %v762 = vsel %vm361, %v754, 0
      %v765 = vsel %vm361, %v755, 0
      %v768 = vsel %vm361, %v756, 0
      %v771 = vsel %vm596, %v757, 0
      %773 = vmatprep.subr.bf16.mxu0 0
      %774 = vmatpush1.bf16.msra.mxu0 0
      %775 = vmatprep.subr.bf16.mxu0 0
      %776 = vmatpush1.bf16.msra.mxu0 0
      %777 = vmatprep.subr.bf16.mxu0 0
      %778 = vmatpush1.bf16.msra.mxu0 0
      %779 = vmatprep.subr.bf16.mxu0 0
      %780 = vmatpush1.bf16.msra.mxu0 0
      %781 = vmatprep.subr.bf16.mxu0 0
      %782 = vmatpush1.bf16.msra.mxu0 0
      %783 = vmatprep.subr.bf16.mxu0 0
      %784 = vmatpush1.bf16.msra.mxu0 0
      %785 = vmatprep.subr.bf16.mxu0 0
      %786 = vmatpush1.bf16.msra.mxu0 0
      %787 = vmatprep.subr.bf16.mxu0 0
      %788 = vmatpush1.bf16.msra.mxu0 %v771
      %789 = vmatprep.subr.bf16.mxu0 0
      %790 = vmatpush2.bf16.msra.mxu0 0
      %791 = vmatprep.subr.bf16.mxu0 0
      %792 = vmatpush2.bf16.msra.mxu0 0
      %793 = vmatprep.subr.bf16.mxu0 0
      %794 = vmatpush2.bf16.msra.mxu0 0
      %795 = vmatprep.subr.bf16.mxu0 0
      %796 = vmatpush2.bf16.msra.mxu0 0
      %797 = vmatprep.subr.bf16.mxu0 0
      %798 = vmatpush2.bf16.msra.mxu0 0
      %799 = vmatprep.subr.bf16.mxu0 0
      %800 = vmatpush2.bf16.msra.mxu0 0
      %801 = vmatprep.subr.bf16.mxu0 0
      %802 = vmatpush2.bf16.msra.mxu0 0
      %803 = vmatprep.subr.bf16.mxu0 0
      %804 = vmatpush2.bf16.msra.mxu0 0
      %805 = vmatprep.mubr.bf16.mxu0 0
      %806 = vmatmul.mubr.bf16.gmra.mxu0 %v759
      %v807 = vpop.f32.mrf.mxu0
      %v808 = vadd.f32 0.0, %v807
      %v809 = vpop.f32.mrf.mxu0
      %v810 = vpop.f32.mrf.mxu0
      %v811 = vadd.f32 0.0, %v810
      %v812 = vpop.f32.mrf.mxu0
      %813 = vmatprep.mubr.bf16.mxu0 0
      %814 = vmatmul.mubr.bf16.gmra.mxu0 %v762
      %v815 = vpop.f32.mrf.mxu0
      %v816 = vadd.f32 0.0, %v815
      %v817 = vpop.f32.mrf.mxu0
      %v818 = vpop.f32.mrf.mxu0
      %v819 = vadd.f32 0.0, %v818
      %v820 = vpop.f32.mrf.mxu0
      %821 = vmatprep.mubr.bf16.mxu0 0
      %822 = vmatmul.mubr.bf16.gmra.mxu0 %v765
      %v823 = vpop.f32.mrf.mxu0
      %v824 = vadd.f32 0.0, %v823
      %v825 = vpop.f32.mrf.mxu0
      %v826 = vpop.f32.mrf.mxu0
      %v827 = vadd.f32 0.0, %v826
      %v828 = vpop.f32.mrf.mxu0
      %829 = vmatprep.mubr.bf16.mxu0 0
      %830 = vmatmul.mubr.bf16.gmra.mxu0 %v768
      %v831 = vpop.f32.mrf.mxu0
      %v832 = vadd.f32 0.0, %v831
      %v833 = vpop.f32.mrf.mxu0
      %v834 = vpop.f32.mrf.mxu0
      %v835 = vadd.f32 0.0, %v834
      %v836 = vpop.f32.mrf.mxu0
      %837 = vdwg.mxu0
      %v838 = vadd.f32 %v715, %v808
      %v839 = vadd.f32 %v718, %v811
      %v840 = vadd.f32 %v723, %v816
      %v841 = vadd.f32 %v726, %v819
      %v842 = vadd.f32 %v731, %v824
      %v843 = vadd.f32 %v734, %v827
      %v844 = vadd.f32 %v739, %v832
      %v845 = vadd.f32 %v742, %v835
      %v846 = vld [vmem:[%s549 + $0xf] sm:$0xff]
      %v847 = vld [vmem:[%s549 + $0x2f] sm:$0xff]
      %v848 = vld [vmem:[%s549 + $0x4f] sm:$0xff]
      %v849 = vld [vmem:[%s549 + $0x6f] sm:$0xff]
      %v850 = vld [vmem:[%s549 + $0x8f] sm:$0xff]
      %v851 = vld [vmem:[%s549 + $0xaf] sm:$0xff]
      %v852 = vld [vmem:[%s549 + $0xcf] sm:$0xff]
      %v853 = vld [vmem:[%s549 + $0xef] sm:$0xff]
      %v854 = vpack.c.bf16 %v847, %v846
      %v855 = vpack.c.bf16 %v849, %v848
      %v856 = vpack.c.bf16 %v851, %v850
      %v857 = vpack.c.bf16 %v853, %v852
      %v858 = vld [vmem:[%s2 + $0xc] sm:$0xf]
      %v860 = vsel %vm361, %v854, 0
      %v863 = vsel %vm361, %v855, 0
      %v866 = vsel %vm361, %v856, 0
      %v869 = vsel %vm361, %v857, 0
      %v872 = vsel %vm596, %v858, 0
      %874 = vmatprep.subr.bf16.mxu0 0
      %875 = vmatpush1.bf16.msra.mxu0 0
      %876 = vmatprep.subr.bf16.mxu0 0
      %877 = vmatpush1.bf16.msra.mxu0 0
      %878 = vmatprep.subr.bf16.mxu0 0
      %879 = vmatpush1.bf16.msra.mxu0 0
      %880 = vmatprep.subr.bf16.mxu0 0
      %881 = vmatpush1.bf16.msra.mxu0 0
      %882 = vmatprep.subr.bf16.mxu0 0
      %883 = vmatpush1.bf16.msra.mxu0 0
      %884 = vmatprep.subr.bf16.mxu0 0
      %885 = vmatpush1.bf16.msra.mxu0 0
      %886 = vmatprep.subr.bf16.mxu0 0
      %887 = vmatpush1.bf16.msra.mxu0 0
      %888 = vmatprep.subr.bf16.mxu0 0
      %889 = vmatpush1.bf16.msra.mxu0 %v872
      %890 = vmatprep.subr.bf16.mxu0 0
      %891 = vmatpush2.bf16.msra.mxu0 0
      %892 = vmatprep.subr.bf16.mxu0 0
      %893 = vmatpush2.bf16.msra.mxu0 0
      %894 = vmatprep.subr.bf16.mxu0 0
      %895 = vmatpush2.bf16.msra.mxu0 0
      %896 = vmatprep.subr.bf16.mxu0 0
      %897 = vmatpush2.bf16.msra.mxu0 0
      %898 = vmatprep.subr.bf16.mxu0 0
      %899 = vmatpush2.bf16.msra.mxu0 0
      %900 = vmatprep.subr.bf16.mxu0 0
      %901 = vmatpush2.bf16.msra.mxu0 0
      %902 = vmatprep.subr.bf16.mxu0 0
      %903 = vmatpush2.bf16.msra.mxu0 0
      %904 = vmatprep.subr.bf16.mxu0 0
      %905 = vmatpush2.bf16.msra.mxu0 0
      %906 = vmatprep.mubr.bf16.mxu0 0
      %907 = vmatmul.mubr.bf16.gmra.mxu0 %v860
      %v908 = vpop.f32.mrf.mxu0
      %v909 = vadd.f32 0.0, %v908
      %v910 = vpop.f32.mrf.mxu0
      %v911 = vpop.f32.mrf.mxu0
      %v912 = vadd.f32 0.0, %v911
      %v913 = vpop.f32.mrf.mxu0
      %914 = vmatprep.mubr.bf16.mxu0 0
      %915 = vmatmul.mubr.bf16.gmra.mxu0 %v863
      %v916 = vpop.f32.mrf.mxu0
      %v917 = vadd.f32 0.0, %v916
      %v918 = vpop.f32.mrf.mxu0
      %v919 = vpop.f32.mrf.mxu0
      %v920 = vadd.f32 0.0, %v919
      %v921 = vpop.f32.mrf.mxu0
      %922 = vmatprep.mubr.bf16.mxu0 0
      %923 = vmatmul.mubr.bf16.gmra.mxu0 %v866
      %v924 = vpop.f32.mrf.mxu0
      %v925 = vadd.f32 0.0, %v924
      %v926 = vpop.f32.mrf.mxu0
      %v927 = vpop.f32.mrf.mxu0
      %v928 = vadd.f32 0.0, %v927
      %v929 = vpop.f32.mrf.mxu0
      %930 = vmatprep.mubr.bf16.mxu0 0
      %931 = vmatmul.mubr.bf16.gmra.mxu0 %v869
      %v932 = vpop.f32.mrf.mxu0
      %v933 = vadd.f32 0.0, %v932
      %v934 = vpop.f32.mrf.mxu0
      %v935 = vpop.f32.mrf.mxu0
      %v936 = vadd.f32 0.0, %v935
      %v937 = vpop.f32.mrf.mxu0
      %938 = vdwg.mxu0
      %v939 = vadd.f32 %v838, %v909
      %v940 = vadd.f32 %v839, %v912
      %v941 = vadd.f32 %v840, %v917
      %v942 = vadd.f32 %v841, %v920
      %v943 = vadd.f32 %v842, %v925
      %v944 = vadd.f32 %v843, %v928
      %v945 = vadd.f32 %v844, %v933
      %v946 = vadd.f32 %v845, %v936
      %v947 = vld [vmem:[%s549 + $0x10] sm:$0xff]
      %v948 = vld [vmem:[%s549 + $0x30] sm:$0xff]
      %v949 = vld [vmem:[%s549 + $0x50] sm:$0xff]
      %v950 = vld [vmem:[%s549 + $0x70] sm:$0xff]
      %v951 = vld [vmem:[%s549 + $0x90] sm:$0xff]
      %v952 = vld [vmem:[%s549 + $0xb0] sm:$0xff]
      %v953 = vld [vmem:[%s549 + $0xd0] sm:$0xff]
      %v954 = vld [vmem:[%s549 + $0xf0] sm:$0xff]
      %v955 = vpack.c.bf16 %v948, %v947
      %v956 = vpack.c.bf16 %v950, %v949
      %v957 = vpack.c.bf16 %v952, %v951
      %v958 = vpack.c.bf16 %v954, %v953
      %v959 = vld [vmem:[%s2 + $0x10] sm:$0xf]
      %v961 = vsel %vm361, %v955, 0
      %v964 = vsel %vm361, %v956, 0
      %v967 = vsel %vm361, %v957, 0
      %v970 = vsel %vm361, %v958, 0
      %v973 = vsel %vm596, %v959, 0
      %975 = vmatprep.subr.bf16.mxu0 0
      %976 = vmatpush1.bf16.msra.mxu0 0
      %977 = vmatprep.subr.bf16.mxu0 0
      %978 = vmatpush1.bf16.msra.mxu0 0
      %979 = vmatprep.subr.bf16.mxu0 0
      %980 = vmatpush1.bf16.msra.mxu0 0
      %981 = vmatprep.subr.bf16.mxu0 0
      %982 = vmatpush1.bf16.msra.mxu0 0
      %983 = vmatprep.subr.bf16.mxu0 0
      %984 = vmatpush1.bf16.msra.mxu0 0
      %985 = vmatprep.subr.bf16.mxu0 0
      %986 = vmatpush1.bf16.msra.mxu0 0
      %987 = vmatprep.subr.bf16.mxu0 0
      %988 = vmatpush1.bf16.msra.mxu0 0
      %989 = vmatprep.subr.bf16.mxu0 0
      %990 = vmatpush1.bf16.msra.mxu0 %v973
      %991 = vmatprep.subr.bf16.mxu0 0
      %992 = vmatpush2.bf16.msra.mxu0 0
      %993 = vmatprep.subr.bf16.mxu0 0
      %994 = vmatpush2.bf16.msra.mxu0 0
      %995 = vmatprep.subr.bf16.mxu0 0
      %996 = vmatpush2.bf16.msra.mxu0 0
      %997 = vmatprep.subr.bf16.mxu0 0
      %998 = vmatpush2.bf16.msra.mxu0 0
      %999 = vmatprep.subr.bf16.mxu0 0
      %1000 = vmatpush2.bf16.msra.mxu0 0
      %1001 = vmatprep.subr.bf16.mxu0 0
      %1002 = vmatpush2.bf16.msra.mxu0 0
      %1003 = vmatprep.subr.bf16.mxu0 0
      %1004 = vmatpush2.bf16.msra.mxu0 0
      %1005 = vmatprep.subr.bf16.mxu0 0
      %1006 = vmatpush2.bf16.msra.mxu0 0
      %1007 = vmatprep.mubr.bf16.mxu0 0
      %1008 = vmatmul.mubr.bf16.gmra.mxu0 %v961
      %v1009 = vpop.f32.mrf.mxu0
      %v1010 = vadd.f32 0.0, %v1009
      %v1011 = vpop.f32.mrf.mxu0
      %v1012 = vpop.f32.mrf.mxu0
      %v1013 = vadd.f32 0.0, %v1012
      %v1014 = vpop.f32.mrf.mxu0
      %1015 = vmatprep.mubr.bf16.mxu0 0
      %1016 = vmatmul.mubr.bf16.gmra.mxu0 %v964
      %v1017 = vpop.f32.mrf.mxu0
      %v1018 = vadd.f32 0.0, %v1017
      %v1019 = vpop.f32.mrf.mxu0
      %v1020 = vpop.f32.mrf.mxu0
      %v1021 = vadd.f32 0.0, %v1020
      %v1022 = vpop.f32.mrf.mxu0
      %1023 = vmatprep.mubr.bf16.mxu0 0
      %1024 = vmatmul.mubr.bf16.gmra.mxu0 %v967
      %v1025 = vpop.f32.mrf.mxu0
      %v1026 = vadd.f32 0.0, %v1025
      %v1027 = vpop.f32.mrf.mxu0
      %v1028 = vpop.f32.mrf.mxu0
      %v1029 = vadd.f32 0.0, %v1028
      %v1030 = vpop.f32.mrf.mxu0
      %1031 = vmatprep.mubr.bf16.mxu0 0
      %1032 = vmatmul.mubr.bf16.gmra.mxu0 %v970
      %v1033 = vpop.f32.mrf.mxu0
      %v1034 = vadd.f32 0.0, %v1033
      %v1035 = vpop.f32.mrf.mxu0
      %v1036 = vpop.f32.mrf.mxu0
      %v1037 = vadd.f32 0.0, %v1036
      %v1038 = vpop.f32.mrf.mxu0
      %1039 = vdwg.mxu0
      %v1040 = vadd.f32 %v939, %v1010
      %v1041 = vadd.f32 %v940, %v1013
      %v1042 = vadd.f32 %v941, %v1018
      %v1043 = vadd.f32 %v942, %v1021
      %v1044 = vadd.f32 %v943, %v1026
      %v1045 = vadd.f32 %v944, %v1029
      %v1046 = vadd.f32 %v945, %v1034
      %v1047 = vadd.f32 %v946, %v1037
      %v1048 = vld [vmem:[%s549 + $0x11] sm:$0xff]
      %v1049 = vld [vmem:[%s549 + $0x31] sm:$0xff]
      %v1050 = vld [vmem:[%s549 + $0x51] sm:$0xff]
      %v1051 = vld [vmem:[%s549 + $0x71] sm:$0xff]
      %v1052 = vld [vmem:[%s549 + $0x91] sm:$0xff]
      %v1053 = vld [vmem:[%s549 + $0xb1] sm:$0xff]
      %v1054 = vld [vmem:[%s549 + $0xd1] sm:$0xff]
      %v1055 = vld [vmem:[%s549 + $0xf1] sm:$0xff]
      %v1056 = vpack.c.bf16 %v1049, %v1048
      %v1057 = vpack.c.bf16 %v1051, %v1050
      %v1058 = vpack.c.bf16 %v1053, %v1052
      %v1059 = vpack.c.bf16 %v1055, %v1054
      %v1060 = vld [vmem:[%s2 + $0x14] sm:$0xf]
      %v1062 = vsel %vm361, %v1056, 0
      %v1065 = vsel %vm361, %v1057, 0
      %v1068 = vsel %vm361, %v1058, 0
      %v1071 = vsel %vm361, %v1059, 0
      %v1074 = vsel %vm596, %v1060, 0
      %1076 = vmatprep.subr.bf16.mxu0 0
      %1077 = vmatpush1.bf16.msra.mxu0 0
      %1078 = vmatprep.subr.bf16.mxu0 0
      %1079 = vmatpush1.bf16.msra.mxu0 0
      %1080 = vmatprep.subr.bf16.mxu0 0
      %1081 = vmatpush1.bf16.msra.mxu0 0
      %1082 = vmatprep.subr.bf16.mxu0 0
      %1083 = vmatpush1.bf16.msra.mxu0 0
      %1084 = vmatprep.subr.bf16.mxu0 0
      %1085 = vmatpush1.bf16.msra.mxu0 0
      %1086 = vmatprep.subr.bf16.mxu0 0
      %1087 = vmatpush1.bf16.msra.mxu0 0
      %1088 = vmatprep.subr.bf16.mxu0 0
      %1089 = vmatpush1.bf16.msra.mxu0 0
      %1090 = vmatprep.subr.bf16.mxu0 0
      %1091 = vmatpush1.bf16.msra.mxu0 %v1074
      %1092 = vmatprep.subr.bf16.mxu0 0
      %1093 = vmatpush2.bf16.msra.mxu0 0
      %1094 = vmatprep.subr.bf16.mxu0 0
      %1095 = vmatpush2.bf16.msra.mxu0 0
      %1096 = vmatprep.subr.bf16.mxu0 0
      %1097 = vmatpush2.bf16.msra.mxu0 0
      %1098 = vmatprep.subr.bf16.mxu0 0
      %1099 = vmatpush2.bf16.msra.mxu0 0
      %1100 = vmatprep.subr.bf16.mxu0 0
      %1101 = vmatpush2.bf16.msra.mxu0 0
      %1102 = vmatprep.subr.bf16.mxu0 0
      %1103 = vmatpush2.bf16.msra.mxu0 0
      %1104 = vmatprep.subr.bf16.mxu0 0
      %1105 = vmatpush2.bf16.msra.mxu0 0
      %1106 = vmatprep.subr.bf16.mxu0 0
      %1107 = vmatpush2.bf16.msra.mxu0 0
      %1108 = vmatprep.mubr.bf16.mxu0 0
      %1109 = vmatmul.mubr.bf16.gmra.mxu0 %v1062
      %v1110 = vpop.f32.mrf.mxu0
      %v1111 = vadd.f32 0.0, %v1110
      %v1112 = vpop.f32.mrf.mxu0
      %v1113 = vpop.f32.mrf.mxu0
      %v1114 = vadd.f32 0.0, %v1113
      %v1115 = vpop.f32.mrf.mxu0
      %1116 = vmatprep.mubr.bf16.mxu0 0
      %1117 = vmatmul.mubr.bf16.gmra.mxu0 %v1065
      %v1118 = vpop.f32.mrf.mxu0
      %v1119 = vadd.f32 0.0, %v1118
      %v1120 = vpop.f32.mrf.mxu0
      %v1121 = vpop.f32.mrf.mxu0
      %v1122 = vadd.f32 0.0, %v1121
      %v1123 = vpop.f32.mrf.mxu0
      %1124 = vmatprep.mubr.bf16.mxu0 0
      %1125 = vmatmul.mubr.bf16.gmra.mxu0 %v1068
      %v1126 = vpop.f32.mrf.mxu0
      %v1127 = vadd.f32 0.0, %v1126
      %v1128 = vpop.f32.mrf.mxu0
      %v1129 = vpop.f32.mrf.mxu0
      %v1130 = vadd.f32 0.0, %v1129
      %v1131 = vpop.f32.mrf.mxu0
      %1132 = vmatprep.mubr.bf16.mxu0 0
      %1133 = vmatmul.mubr.bf16.gmra.mxu0 %v1071
      %v1134 = vpop.f32.mrf.mxu0
      %v1135 = vadd.f32 0.0, %v1134
      %v1136 = vpop.f32.mrf.mxu0
      %v1137 = vpop.f32.mrf.mxu0
      %v1138 = vadd.f32 0.0, %v1137
      %v1139 = vpop.f32.mrf.mxu0
      %1140 = vdwg.mxu0
      %v1141 = vadd.f32 %v1040, %v1111
      %v1142 = vadd.f32 %v1041, %v1114
      %v1143 = vadd.f32 %v1042, %v1119
      %v1144 = vadd.f32 %v1043, %v1122
      %v1145 = vadd.f32 %v1044, %v1127
      %v1146 = vadd.f32 %v1045, %v1130
      %v1147 = vadd.f32 %v1046, %v1135
      %v1148 = vadd.f32 %v1047, %v1138
      %s1149 = scalar_lea.vmem [#allocation2], 64
      %v1150 = vld [vmem:[%s1149 + $0xf] sm:$0xff]
      %v1151 = vld [vmem:[%s1149 + $0x2f] sm:$0xff]
      %v1152 = vld [vmem:[%s1149 + $0x4f] sm:$0xff]
      %v1153 = vld [vmem:[%s1149 + $0x6f] sm:$0xff]
      %v1154 = vld [vmem:[%s1149 + $0x8f] sm:$0xff]
      %v1155 = vld [vmem:[%s1149 + $0xaf] sm:$0xff]
      %v1156 = vld [vmem:[%s1149 + $0xcf] sm:$0xff]
      %v1157 = vld [vmem:[%s1149 + $0xef] sm:$0xff]
      %v1158 = vpack.c.bf16 %v1151, %v1150
      %v1159 = vpack.c.bf16 %v1153, %v1152
      %v1160 = vpack.c.bf16 %v1155, %v1154
      %v1161 = vpack.c.bf16 %v1157, %v1156
      %v1162 = vld [vmem:[%s2 + $0x18] sm:$0xf]
      %v1164 = vsel %vm361, %v1158, 0
      %v1167 = vsel %vm361, %v1159, 0
      %v1170 = vsel %vm361, %v1160, 0
      %v1173 = vsel %vm361, %v1161, 0
      %v1176 = vsel %vm596, %v1162, 0
      %1178 = vmatprep.subr.bf16.mxu0 0
      %1179 = vmatpush1.bf16.msra.mxu0 0
      %1180 = vmatprep.subr.bf16.mxu0 0
      %1181 = vmatpush1.bf16.msra.mxu0 0
      %1182 = vmatprep.subr.bf16.mxu0 0
      %1183 = vmatpush1.bf16.msra.mxu0 0
      %1184 = vmatprep.subr.bf16.mxu0 0
      %1185 = vmatpush1.bf16.msra.mxu0 0
      %1186 = vmatprep.subr.bf16.mxu0 0
      %1187 = vmatpush1.bf16.msra.mxu0 0
      %1188 = vmatprep.subr.bf16.mxu0 0
      %1189 = vmatpush1.bf16.msra.mxu0 0
      %1190 = vmatprep.subr.bf16.mxu0 0
      %1191 = vmatpush1.bf16.msra.mxu0 0
      %1192 = vmatprep.subr.bf16.mxu0 0
      %1193 = vmatpush1.bf16.msra.mxu0 %v1176
      %1194 = vmatprep.subr.bf16.mxu0 0
      %1195 = vmatpush2.bf16.msra.mxu0 0
      %1196 = vmatprep.subr.bf16.mxu0 0
      %1197 = vmatpush2.bf16.msra.mxu0 0
      %1198 = vmatprep.subr.bf16.mxu0 0
      %1199 = vmatpush2.bf16.msra.mxu0 0
      %1200 = vmatprep.subr.bf16.mxu0 0
      %1201 = vmatpush2.bf16.msra.mxu0 0
      %1202 = vmatprep.subr.bf16.mxu0 0
      %1203 = vmatpush2.bf16.msra.mxu0 0
      %1204 = vmatprep.subr.bf16.mxu0 0
      %1205 = vmatpush2.bf16.msra.mxu0 0
      %1206 = vmatprep.subr.bf16.mxu0 0
      %1207 = vmatpush2.bf16.msra.mxu0 0
      %1208 = vmatprep.subr.bf16.mxu0 0
      %1209 = vmatpush2.bf16.msra.mxu0 0
      %1210 = vmatprep.mubr.bf16.mxu0 0
      %1211 = vmatmul.mubr.bf16.gmra.mxu0 %v1164
      %v1212 = vpop.f32.mrf.mxu0
      %v1213 = vadd.f32 0.0, %v1212
      %v1214 = vpop.f32.mrf.mxu0
      %v1215 = vpop.f32.mrf.mxu0
      %v1216 = vadd.f32 0.0, %v1215
      %v1217 = vpop.f32.mrf.mxu0
      %1218 = vmatprep.mubr.bf16.mxu0 0
      %1219 = vmatmul.mubr.bf16.gmra.mxu0 %v1167
      %v1220 = vpop.f32.mrf.mxu0
      %v1221 = vadd.f32 0.0, %v1220
      %v1222 = vpop.f32.mrf.mxu0
      %v1223 = vpop.f32.mrf.mxu0
      %v1224 = vadd.f32 0.0, %v1223
      %v1225 = vpop.f32.mrf.mxu0
      %1226 = vmatprep.mubr.bf16.mxu0 0
      %1227 = vmatmul.mubr.bf16.gmra.mxu0 %v1170
      %v1228 = vpop.f32.mrf.mxu0
      %v1229 = vadd.f32 0.0, %v1228
      %v1230 = vpop.f32.mrf.mxu0
      %v1231 = vpop.f32.mrf.mxu0
      %v1232 = vadd.f32 0.0, %v1231
      %v1233 = vpop.f32.mrf.mxu0
      %1234 = vmatprep.mubr.bf16.mxu0 0
      %1235 = vmatmul.mubr.bf16.gmra.mxu0 %v1173
      %v1236 = vpop.f32.mrf.mxu0
      %v1237 = vadd.f32 0.0, %v1236
      %v1238 = vpop.f32.mrf.mxu0
      %v1239 = vpop.f32.mrf.mxu0
      %v1240 = vadd.f32 0.0, %v1239
      %v1241 = vpop.f32.mrf.mxu0
      %1242 = vdwg.mxu0
      %v1243 = vadd.f32 %v1141, %v1213
      %v1244 = vadd.f32 %v1142, %v1216
      %v1245 = vadd.f32 %v1143, %v1221
      %v1246 = vadd.f32 %v1144, %v1224
      %v1247 = vadd.f32 %v1145, %v1229
      %v1248 = vadd.f32 %v1146, %v1232
      %v1249 = vadd.f32 %v1147, %v1237
      %v1250 = vadd.f32 %v1148, %v1240
      %v1251 = vld [vmem:[%s1149 + $0x10] sm:$0xff]
      %v1252 = vld [vmem:[%s1149 + $0x30] sm:$0xff]
      %v1253 = vld [vmem:[%s1149 + $0x50] sm:$0xff]
      %v1254 = vld [vmem:[%s1149 + $0x70] sm:$0xff]
      %v1255 = vld [vmem:[%s1149 + $0x90] sm:$0xff]
      %v1256 = vld [vmem:[%s1149 + $0xb0] sm:$0xff]
      %v1257 = vld [vmem:[%s1149 + $0xd0] sm:$0xff]
      %v1258 = vld [vmem:[%s1149 + $0xf0] sm:$0xff]
      %v1259 = vpack.c.bf16 %v1252, %v1251
      %v1260 = vpack.c.bf16 %v1254, %v1253
      %v1261 = vpack.c.bf16 %v1256, %v1255
      %v1262 = vpack.c.bf16 %v1258, %v1257
      %v1263 = vld [vmem:[%s2 + $0x1c] sm:$0xf]
      %v1265 = vsel %vm361, %v1259, 0
      %v1268 = vsel %vm361, %v1260, 0
      %v1271 = vsel %vm361, %v1261, 0
      %v1274 = vsel %vm361, %v1262, 0
      %v1277 = vsel %vm596, %v1263, 0
      %1279 = vmatprep.subr.bf16.mxu0 0
      %1280 = vmatpush1.bf16.msra.mxu0 0
      %1281 = vmatprep.subr.bf16.mxu0 0
      %1282 = vmatpush1.bf16.msra.mxu0 0
      %1283 = vmatprep.subr.bf16.mxu0 0
      %1284 = vmatpush1.bf16.msra.mxu0 0
      %1285 = vmatprep.subr.bf16.mxu0 0
      %1286 = vmatpush1.bf16.msra.mxu0 0
      %1287 = vmatprep.subr.bf16.mxu0 0
      %1288 = vmatpush1.bf16.msra.mxu0 0
      %1289 = vmatprep.subr.bf16.mxu0 0
      %1290 = vmatpush1.bf16.msra.mxu0 0
      %1291 = vmatprep.subr.bf16.mxu0 0
      %1292 = vmatpush1.bf16.msra.mxu0 0
      %1293 = vmatprep.subr.bf16.mxu0 0
      %1294 = vmatpush1.bf16.msra.mxu0 %v1277
      %1295 = vmatprep.subr.bf16.mxu0 0
      %1296 = vmatpush2.bf16.msra.mxu0 0
      %1297 = vmatprep.subr.bf16.mxu0 0
      %1298 = vmatpush2.bf16.msra.mxu0 0
      %1299 = vmatprep.subr.bf16.mxu0 0
      %1300 = vmatpush2.bf16.msra.mxu0 0
      %1301 = vmatprep.subr.bf16.mxu0 0
      %1302 = vmatpush2.bf16.msra.mxu0 0
      %1303 = vmatprep.subr.bf16.mxu0 0
      %1304 = vmatpush2.bf16.msra.mxu0 0
      %1305 = vmatprep.subr.bf16.mxu0 0
      %1306 = vmatpush2.bf16.msra.mxu0 0
      %1307 = vmatprep.subr.bf16.mxu0 0
      %1308 = vmatpush2.bf16.msra.mxu0 0
      %1309 = vmatprep.subr.bf16.mxu0 0
      %1310 = vmatpush2.bf16.msra.mxu0 0
      %1311 = vmatprep.mubr.bf16.mxu0 0
      %1312 = vmatmul.mubr.bf16.gmra.mxu0 %v1265
      %v1313 = vpop.f32.mrf.mxu0
      %v1314 = vadd.f32 0.0, %v1313
      %v1315 = vpop.f32.mrf.mxu0
      %v1316 = vpop.f32.mrf.mxu0
      %v1317 = vadd.f32 0.0, %v1316
      %v1318 = vpop.f32.mrf.mxu0
      %1319 = vmatprep.mubr.bf16.mxu0 0
      %1320 = vmatmul.mubr.bf16.gmra.mxu0 %v1268
      %v1321 = vpop.f32.mrf.mxu0
      %v1322 = vadd.f32 0.0, %v1321
      %v1323 = vpop.f32.mrf.mxu0
      %v1324 = vpop.f32.mrf.mxu0
      %v1325 = vadd.f32 0.0, %v1324
      %v1326 = vpop.f32.mrf.mxu0
      %1327 = vmatprep.mubr.bf16.mxu0 0
      %1328 = vmatmul.mubr.bf16.gmra.mxu0 %v1271
      %v1329 = vpop.f32.mrf.mxu0
      %v1330 = vadd.f32 0.0, %v1329
      %v1331 = vpop.f32.mrf.mxu0
      %v1332 = vpop.f32.mrf.mxu0
      %v1333 = vadd.f32 0.0, %v1332
      %v1334 = vpop.f32.mrf.mxu0
      %1335 = vmatprep.mubr.bf16.mxu0 0
      %1336 = vmatmul.mubr.bf16.gmra.mxu0 %v1274
      %v1337 = vpop.f32.mrf.mxu0
      %v1338 = vadd.f32 0.0, %v1337
      %v1339 = vpop.f32.mrf.mxu0
      %v1340 = vpop.f32.mrf.mxu0
      %v1341 = vadd.f32 0.0, %v1340
      %v1342 = vpop.f32.mrf.mxu0
      %1343 = vdwg.mxu0
      %v1344 = vadd.f32 %v1243, %v1314
      %v1345 = vadd.f32 %v1244, %v1317
      %v1346 = vadd.f32 %v1245, %v1322
      %v1347 = vadd.f32 %v1246, %v1325
      %v1348 = vadd.f32 %v1247, %v1330
      %v1349 = vadd.f32 %v1248, %v1333
      %v1350 = vadd.f32 %v1249, %v1338
      %v1351 = vadd.f32 %v1250, %v1341
      %v1352 = vld [vmem:[%s1149 + $0x11] sm:$0xff]
      %v1353 = vld [vmem:[%s1149 + $0x31] sm:$0xff]
      %v1354 = vld [vmem:[%s1149 + $0x51] sm:$0xff]
      %v1355 = vld [vmem:[%s1149 + $0x71] sm:$0xff]
      %v1356 = vld [vmem:[%s1149 + $0x91] sm:$0xff]
      %v1357 = vld [vmem:[%s1149 + $0xb1] sm:$0xff]
      %v1358 = vld [vmem:[%s1149 + $0xd1] sm:$0xff]
      %v1359 = vld [vmem:[%s1149 + $0xf1] sm:$0xff]
      %v1360 = vpack.c.bf16 %v1353, %v1352
      %v1361 = vpack.c.bf16 %v1355, %v1354
      %v1362 = vpack.c.bf16 %v1357, %v1356
      %v1363 = vpack.c.bf16 %v1359, %v1358
      %v1364 = vld [vmem:[%s2 + $0x20] sm:$0xf]
      %v1366 = vsel %vm361, %v1360, 0
      %v1369 = vsel %vm361, %v1361, 0
      %v1372 = vsel %vm361, %v1362, 0
      %v1375 = vsel %vm361, %v1363, 0
      %v1378 = vsel %vm596, %v1364, 0
      %1380 = vmatprep.subr.bf16.mxu0 0
      %1381 = vmatpush1.bf16.msra.mxu0 0
      %1382 = vmatprep.subr.bf16.mxu0 0
      %1383 = vmatpush1.bf16.msra.mxu0 0
      %1384 = vmatprep.subr.bf16.mxu0 0
      %1385 = vmatpush1.bf16.msra.mxu0 0
      %1386 = vmatprep.subr.bf16.mxu0 0
      %1387 = vmatpush1.bf16.msra.mxu0 0
      %1388 = vmatprep.subr.bf16.mxu0 0
      %1389 = vmatpush1.bf16.msra.mxu0 0
      %1390 = vmatprep.subr.bf16.mxu0 0
      %1391 = vmatpush1.bf16.msra.mxu0 0
      %1392 = vmatprep.subr.bf16.mxu0 0
      %1393 = vmatpush1.bf16.msra.mxu0 0
      %1394 = vmatprep.subr.bf16.mxu0 0
      %1395 = vmatpush1.bf16.msra.mxu0 %v1378
      %1396 = vmatprep.subr.bf16.mxu0 0
      %1397 = vmatpush2.bf16.msra.mxu0 0
      %1398 = vmatprep.subr.bf16.mxu0 0
      %1399 = vmatpush2.bf16.msra.mxu0 0
      %1400 = vmatprep.subr.bf16.mxu0 0
      %1401 = vmatpush2.bf16.msra.mxu0 0
      %1402 = vmatprep.subr.bf16.mxu0 0
      %1403 = vmatpush2.bf16.msra.mxu0 0
      %1404 = vmatprep.subr.bf16.mxu0 0
      %1405 = vmatpush2.bf16.msra.mxu0 0
      %1406 = vmatprep.subr.bf16.mxu0 0
      %1407 = vmatpush2.bf16.msra.mxu0 0
      %1408 = vmatprep.subr.bf16.mxu0 0
      %1409 = vmatpush2.bf16.msra.mxu0 0
      %1410 = vmatprep.subr.bf16.mxu0 0
      %1411 = vmatpush2.bf16.msra.mxu0 0
      %1412 = vmatprep.mubr.bf16.mxu0 0
      %1413 = vmatmul.mubr.bf16.gmra.mxu0 %v1366
      %v1414 = vpop.f32.mrf.mxu0
      %v1415 = vadd.f32 0.0, %v1414
      %v1416 = vpop.f32.mrf.mxu0
      %v1417 = vpop.f32.mrf.mxu0
      %v1418 = vadd.f32 0.0, %v1417
      %v1419 = vpop.f32.mrf.mxu0
      %1420 = vmatprep.mubr.bf16.mxu0 0
      %1421 = vmatmul.mubr.bf16.gmra.mxu0 %v1369
      %v1422 = vpop.f32.mrf.mxu0
      %v1423 = vadd.f32 0.0, %v1422
      %v1424 = vpop.f32.mrf.mxu0
      %v1425 = vpop.f32.mrf.mxu0
      %v1426 = vadd.f32 0.0, %v1425
      %v1427 = vpop.f32.mrf.mxu0
      %1428 = vmatprep.mubr.bf16.mxu0 0
      %1429 = vmatmul.mubr.bf16.gmra.mxu0 %v1372
      %v1430 = vpop.f32.mrf.mxu0
      %v1431 = vadd.f32 0.0, %v1430
      %v1432 = vpop.f32.mrf.mxu0
      %v1433 = vpop.f32.mrf.mxu0
      %v1434 = vadd.f32 0.0, %v1433
      %v1435 = vpop.f32.mrf.mxu0
      %1436 = vmatprep.mubr.bf16.mxu0 0
      %1437 = vmatmul.mubr.bf16.gmra.mxu0 %v1375
      %v1438 = vpop.f32.mrf.mxu0
      %v1439 = vadd.f32 0.0, %v1438
      %v1440 = vpop.f32.mrf.mxu0
      %v1441 = vpop.f32.mrf.mxu0
      %v1442 = vadd.f32 0.0, %v1441
      %v1443 = vpop.f32.mrf.mxu0
      %1444 = vdwg.mxu0
      %v1445 = vadd.f32 %v1344, %v1415
      %v1446 = vadd.f32 %v1345, %v1418
      %v1447 = vadd.f32 %v1346, %v1423
      %v1448 = vadd.f32 %v1347, %v1426
      %v1449 = vadd.f32 %v1348, %v1431
      %v1450 = vadd.f32 %v1349, %v1434
      %v1451 = vadd.f32 %v1350, %v1439
      %v1452 = vadd.f32 %v1351, %v1442
      %v1453 = vld [vmem:[%s6] sm:$0x1]
      %v1455 = vlaneseq
      %v1456 = vshrl.u32 %v1455, 7
      %v1457 = vsub.s32 0, %v1456
      %v1458 = vrot.slane %v1453, %v1457
      %v1460 = vmul.f32 %v1445, %v1458
      %v1461 = vmul.f32 %v1446, %v1458
      %v1462 = vmul.f32 %v1447, %v1458
      %v1463 = vmul.f32 %v1448, %v1458
      %v1464 = vmul.f32 %v1449, %v1458
      %v1465 = vmul.f32 %v1450, %v1458
      %v1466 = vmul.f32 %v1451, %v1458
      %v1467 = vmul.f32 %v1452, %v1458
      %v1468 = vld [vmem:[%s7] sm:$0x1]
      %v1470 = vlaneseq
      %v1471 = vshrl.u32 %v1470, 7
      %v1472 = vsub.s32 0, %v1471
      %v1473 = vrot.slane %v1468, %v1472
      %v1475 = vadd.f32 %v1460, %v1473
      %v1476 = vadd.f32 %v1461, %v1473
      %v1477 = vadd.f32 %v1462, %v1473
      %v1478 = vadd.f32 %v1463, %v1473
      %v1479 = vadd.f32 %v1464, %v1473
      %v1480 = vadd.f32 %v1465, %v1473
      %v1481 = vadd.f32 %v1466, %v1473
      %v1482 = vadd.f32 %v1467, %v1473
      %v1483 = vmax.f32 %v1475, 0.0
      %v1484 = vmax.f32 %v1476, 0.0
      %v1485 = vmax.f32 %v1477, 0.0
      %v1486 = vmax.f32 %v1478, 0.0
      %v1487 = vmax.f32 %v1479, 0.0
      %v1488 = vmax.f32 %v1480, 0.0
      %v1489 = vmax.f32 %v1481, 0.0
      %v1490 = vmax.f32 %v1482, 0.0
      %v1491 = vpack.c.bf16 %v1484, %v1483
      %v1492 = vpack.c.bf16 %v1486, %v1485
      %v1493 = vpack.c.bf16 %v1488, %v1487
      %v1494 = vpack.c.bf16 %v1490, %v1489
      %v1495 = vld [vmem:[%s3] sm:$0xf]
      %v1497 = vsel %vm361, %v1491, 0
      %v1500 = vsel %vm361, %v1492, 0
      %v1503 = vsel %vm361, %v1493, 0
      %v1506 = vsel %vm361, %v1494, 0
      %v1509 = vsel %vm596, %v1495, 0
      %1511 = vmatprep.subr.bf16.mxu0 0
      %1512 = vmatpush1.bf16.msra.mxu0 0
      %1513 = vmatprep.subr.bf16.mxu0 0
      %1514 = vmatpush1.bf16.msra.mxu0 0
      %1515 = vmatprep.subr.bf16.mxu0 0
      %1516 = vmatpush1.bf16.msra.mxu0 0
      %1517 = vmatprep.subr.bf16.mxu0 0
      %1518 = vmatpush1.bf16.msra.mxu0 0
      %1519 = vmatprep.subr.bf16.mxu0 0
      %1520 = vmatpush1.bf16.msra.mxu0 0
      %1521 = vmatprep.subr.bf16.mxu0 0
      %1522 = vmatpush1.bf16.msra.mxu0 0
      %1523 = vmatprep.subr.bf16.mxu0 0
      %1524 = vmatpush1.bf16.msra.mxu0 0
      %1525 = vmatprep.subr.bf16.mxu0 0
      %1526 = vmatpush1.bf16.msra.mxu0 %v1509
      %1527 = vmatprep.subr.bf16.mxu0 0
      %1528 = vmatpush2.bf16.msra.mxu0 0
      %1529 = vmatprep.subr.bf16.mxu0 0
      %1530 = vmatpush2.bf16.msra.mxu0 0
      %1531 = vmatprep.subr.bf16.mxu0 0
      %1532 = vmatpush2.bf16.msra.mxu0 0
      %1533 = vmatprep.subr.bf16.mxu0 0
      %1534 = vmatpush2.bf16.msra.mxu0 0
      %1535 = vmatprep.subr.bf16.mxu0 0
      %1536 = vmatpush2.bf16.msra.mxu0 0
      %1537 = vmatprep.subr.bf16.mxu0 0
      %1538 = vmatpush2.bf16.msra.mxu0 0
      %1539 = vmatprep.subr.bf16.mxu0 0
      %1540 = vmatpush2.bf16.msra.mxu0 0
      %1541 = vmatprep.subr.bf16.mxu0 0
      %1542 = vmatpush2.bf16.msra.mxu0 0
      %1543 = vmatprep.mubr.bf16.mxu0 0
      %1544 = vmatmul.mubr.bf16.gmra.mxu0 %v1497
      %v1545 = vpop.f32.mrf.mxu0
      %v1546 = vadd.f32 0.0, %v1545
      %v1547 = vpop.f32.mrf.mxu0
      %v1548 = vpop.f32.mrf.mxu0
      %v1549 = vadd.f32 0.0, %v1548
      %v1550 = vpop.f32.mrf.mxu0
      %1551 = vmatprep.mubr.bf16.mxu0 0
      %1552 = vmatmul.mubr.bf16.gmra.mxu0 %v1500
      %v1553 = vpop.f32.mrf.mxu0
      %v1554 = vadd.f32 0.0, %v1553
      %v1555 = vpop.f32.mrf.mxu0
      %v1556 = vpop.f32.mrf.mxu0
      %v1557 = vadd.f32 0.0, %v1556
      %v1558 = vpop.f32.mrf.mxu0
      %1559 = vmatprep.mubr.bf16.mxu0 0
      %1560 = vmatmul.mubr.bf16.gmra.mxu0 %v1503
      %v1561 = vpop.f32.mrf.mxu0
      %v1562 = vadd.f32 0.0, %v1561
      %v1563 = vpop.f32.mrf.mxu0
      %v1564 = vpop.f32.mrf.mxu0
      %v1565 = vadd.f32 0.0, %v1564
      %v1566 = vpop.f32.mrf.mxu0
      %1567 = vmatprep.mubr.bf16.mxu0 0
      %1568 = vmatmul.mubr.bf16.gmra.mxu0 %v1506
      %v1569 = vpop.f32.mrf.mxu0
      %v1570 = vadd.f32 0.0, %v1569
      %v1571 = vpop.f32.mrf.mxu0
      %v1572 = vpop.f32.mrf.mxu0
      %v1573 = vadd.f32 0.0, %v1572
      %v1574 = vpop.f32.mrf.mxu0
      %1575 = vdwg.mxu0
      %v1576 = vld [vmem:[%s8] sm:$0x1]
      %v1578 = vlaneseq
      %v1579 = vshrl.u32 %v1578, 7
      %v1580 = vsub.s32 0, %v1579
      %v1581 = vrot.slane %v1576, %v1580
      %v1583 = vmul.f32 %v1546, %v1581
      %v1584 = vmul.f32 %v1549, %v1581
      %v1585 = vmul.f32 %v1554, %v1581
      %v1586 = vmul.f32 %v1557, %v1581
      %v1587 = vmul.f32 %v1562, %v1581
      %v1588 = vmul.f32 %v1565, %v1581
      %v1589 = vmul.f32 %v1570, %v1581
      %v1590 = vmul.f32 %v1573, %v1581
      %v1591 = vld [vmem:[%s9] sm:$0x1]
      %v1593 = vlaneseq
      %v1594 = vshrl.u32 %v1593, 7
      %v1595 = vsub.s32 0, %v1594
      %v1596 = vrot.slane %v1591, %v1595
      %v1598 = vadd.f32 %v1583, %v1596
      %v1599 = vadd.f32 %v1584, %v1596
      %v1600 = vadd.f32 %v1585, %v1596
      %v1601 = vadd.f32 %v1586, %v1596
      %v1602 = vadd.f32 %v1587, %v1596
      %v1603 = vadd.f32 %v1588, %v1596
      %v1604 = vadd.f32 %v1589, %v1596
      %v1605 = vadd.f32 %v1590, %v1596
      %v1606 = vunpack.c.l.bf16 %v389
      %v1607 = vunpack.c.l.bf16 %v390
      %v1608 = vunpack.c.l.bf16 %v391
      %v1609 = vunpack.c.l.bf16 %v392
      %v1610 = vunpack.c.l.bf16 %v393
      %v1611 = vunpack.c.l.bf16 %v394
      %v1612 = vunpack.c.l.bf16 %v395
      %v1613 = vunpack.c.l.bf16 %v396
      %v1614 = vadd.f32 %v1606, %v1598
      %v1615 = vadd.f32 %v1607, %v1599
      %v1616 = vadd.f32 %v1608, %v1600
      %v1617 = vadd.f32 %v1609, %v1601
      %v1618 = vadd.f32 %v1610, %v1602
      %v1619 = vadd.f32 %v1611, %v1603
      %v1620 = vadd.f32 %v1612, %v1604
      %v1621 = vadd.f32 %v1613, %v1605
      %v1622 = vmax.f32 %v1614, 0.0
      %v1623 = vmax.f32 %v1615, 0.0
      %v1624 = vmax.f32 %v1616, 0.0
      %v1625 = vmax.f32 %v1617, 0.0
      %v1626 = vmax.f32 %v1618, 0.0
      %v1627 = vmax.f32 %v1619, 0.0
      %v1628 = vmax.f32 %v1620, 0.0
      %v1629 = vmax.f32 %v1621, 0.0
      %v1630 = vpack.c.bf16 %v1622, %v1622
      %v1631 = vpack.c.bf16 %v1623, %v1623
      %v1632 = vpack.c.bf16 %v1624, %v1624
      %v1633 = vpack.c.bf16 %v1625, %v1625
      %v1634 = vpack.c.bf16 %v1626, %v1626
      %v1635 = vpack.c.bf16 %v1627, %v1627
      %v1636 = vpack.c.bf16 %v1628, %v1628
      %v1637 = vpack.c.bf16 %v1629, %v1629
      %vm1638 = vcmask 257024
      %1639 = vst.msk [vmem:[%s359] sm:$0xf] %vm1638, %v1630
      %1640 = vst.msk [vmem:[%s359 + $0x4] sm:$0xf] %vm1638, %v1631
      %1641 = vst.msk [vmem:[%s359 + $0x8] sm:$0xf] %vm1638, %v1632
      %1642 = vst.msk [vmem:[%s359 + $0xc] sm:$0xf] %vm1638, %v1633
      %1643 = vst.msk [vmem:[%s359 + $0x10] sm:$0xf] %vm1638, %v1634
      %1644 = vst.msk [vmem:[%s359 + $0x14] sm:$0xf] %vm1638, %v1635
      %1645 = vst.msk [vmem:[%s359 + $0x18] sm:$0xf] %vm1638, %v1636
      %1646 = vst.msk [vmem:[%s359 + $0x1c] sm:$0xf] %vm1638, %v1637
      %p1647 = scmp.lt.s32.totalorder %s21, 1
      %s1648 = scalar_select %p1647, %s21, 1
      %s1649 = smul.addr %s1648, 8
      %s1650 = smul.addr %s1649, 4
      %s1651 = scalar_lea.vmem %s10, %s1650
      // Predicated region
      $region61: #{res_stage.3} parent=59 // pred_check
        %p1652 = pneg %p254
      $region62: #{res_stage.3} parent=59 // pred_check_branch
        %1654 = sbr.rel (%p1652) target = $region64
      $region63: #{res_stage.3} parent=59 // pred_region
        _
      $region64: #{res_stage.3} parent=59 // pred_fallthru
        _
    $region60: #{res_stage.3} parent=5 // pred_fallthru
      _
    %p1655 = scmp.le.s32.totalorder 2, %s16
    // Predicated region
    $region65: #{res_stage.3} parent=5 // pred_check
      %p1656 = pneg %p1655
    $region66: #{res_stage.3} parent=5 // pred_check_branch
      %1658 = sbr.rel (%p1656) target = $region68
    $region67: #{res_stage.3} parent=5 // pred_region
      %s1659 = ssub.s32 %s16, 2
      // Predicated region
      $region69: #{res_stage.3} parent=67 // pred_check
        %p1660 = pneg %p260
      $region70: #{res_stage.3} parent=67 // pred_check_branch
        %1662 = sbr.rel (%p1660) target = $region72
      $region71: #{res_stage.3} parent=67 // pred_region
        %p1663 = scmp.lt.s32.totalorder %s22, 1
        %s1664 = scalar_select %p1663, %s22, 1
        %s1665 = smul.addr %s1664, 8
        %s1666 = smul.addr %s1665, 4
        %s1667 = scalar_lea.vmem %s10, %s1666
      $region72: #{res_stage.3} parent=67 // pred_fallthru
        _
    $region68: #{res_stage.3} parent=5 // pred_fallthru
      _
  $region6: #{res_stage.3} parent=0 // loop_footer
    %s20 = sadd.s32 1, %s16
  $region7: #{res_stage.3} parent=0 // loop_footer_branch
    %15 = sbr.rel target = $region3
  $region8: #{res_stage.3} parent=0 // loop_exit
    _

// kernel: res_stage.2
$region0: #{res_stage.2}
  #allocation0 [shape = 'u32[]', space=smem, size = 0x4, offset = 0x4, fixed_abs, tag = 'smem constant byte address 0x4 - core index']
  #allocation1 [shape = 'u32[144,128]{1,0:T(1,128)}', space=vmem, size = 0x12000, scoped, tag = 'internal scratch']
  #allocation2 [shape = 'f32[18,33,8]{2,1,0:T(8,128)}', space=vmem, size = 0x5a000, scoped, tag = 'scratch operand']
  %s0 = inlined_call_operand.vmem [shape: f32[2,16,16,16], index: 0, kind: input, shape index: {}]
  %s1 = inlined_call_operand.vmem [shape: bf16[16,8], index: 1, kind: input, shape index: {}]
  %s2 = inlined_call_operand.vmem [shape: bf16[72,8], index: 2, kind: input, shape index: {}]
  %s3 = inlined_call_operand.vmem [shape: bf16[8,32], index: 3, kind: input, shape index: {}]
  %s4 = inlined_call_operand.vmem [shape: bf16[16,32], index: 4, kind: input, shape index: {}]
  %s5 = inlined_call_operand.vmem [shape: f32[1,8], index: 5, kind: input, shape index: {}]
  %s6 = inlined_call_operand.vmem [shape: f32[1,8], index: 6, kind: input, shape index: {}]
  %s7 = inlined_call_operand.vmem [shape: f32[1,8], index: 7, kind: input, shape index: {}]
  %s8 = inlined_call_operand.vmem [shape: f32[1,8], index: 8, kind: input, shape index: {}]
  %s9 = inlined_call_operand.vmem [shape: f32[1,32], index: 9, kind: input, shape index: {}]
  %s10 = inlined_call_operand.vmem [shape: f32[1,32], index: 10, kind: input, shape index: {}]
  %s11 = inlined_call_operand.vmem [shape: f32[1,32], index: 11, kind: input, shape index: {}]
  %s12 = inlined_call_operand.vmem [shape: f32[1,32], index: 12, kind: input, shape index: {}]
  %s13 = inlined_call_operand.vmem [shape: bf16[2,8,8,32], index: 13, kind: output, shape index: {}]
  %s14 = sld [smem:[#allocation0]]
  $region85: #{res_stage.2} parent=0
    _
  %s16 = ssub.s32 1, %s14
  %s17 = scalar_select 0, %s16, %s14
  loop: start=0, step=1, limit=4
  $region2: #{res_stage.2} parent=0 // loop_pre_header
    _
  $region3: #{res_stage.2} parent=0 // loop_header
    %s19 = sphi 0, %s23
    %p20 = scmp.ge.s32.totalorder %s19, 4
    %s29 = sphi 0, %s31
    %s32 = sphi 0, %s29
    %s33 = sphi 0, %s32
    %s49 = sphi 0, %s33
    %s53 = sphi 0, %s53
    %s55 = sphi 0, %s53
    %s56 = sphi 0, %s55
    %s70 = sphi 0, %s56
    %s74 = sphi 0, %s74
    %s76 = sphi 0, %s74
    %s77 = sphi 0, %s76
    %s91 = sphi 0, %s77
    %s95 = sphi 0, %s95
    %s97 = sphi 0, %s95
    %s98 = sphi 0, %s97
    %s112 = sphi 0, %s98
    %s116 = sphi 0, %s116
    %s118 = sphi 0, %s116
    %s119 = sphi 0, %s118
    %s133 = sphi 0, %s119
    %s137 = sphi 0, %s137
    %s139 = sphi 0, %s137
    %s140 = sphi 0, %s139
    %s154 = sphi 0, %s140
    %s158 = sphi 0, %s158
    %s160 = sphi 0, %s158
    %s161 = sphi 0, %s160
    %s175 = sphi 0, %s161
    %s179 = sphi 0, %s179
    %s181 = sphi 0, %s179
    %s182 = sphi 0, %s181
    %s196 = sphi 0, %s182
    %s200 = sphi 0, %s200
    %s202 = sphi 0, %s200
    %s203 = sphi 0, %s202
    %s217 = sphi 0, %s203
    %s221 = sphi 0, %s221
    %s223 = sphi 0, %s221
    %s224 = sphi 0, %s223
    %s238 = sphi 0, %s224
    %s242 = sphi 0, %s242
    %s244 = sphi 0, %s242
    %s245 = sphi 0, %s244
    %s259 = sphi 0, %s245
    %s263 = sphi 0, %s263
    %s265 = sphi 0, %s263
    %s266 = sphi 0, %s265
    %s280 = sphi 0, %s266
    %s284 = sphi 0, %s284
    %s286 = sphi 0, %s284
    %s287 = sphi 0, %s286
    %s301 = sphi 0, %s287
    %s307 = sphi 0, %s309
    %s310 = sphi 0, %s307
    %s311 = sphi 0, %s310
    %s327 = sphi 0, %s311
  $region4: #{res_stage.2} parent=0 // loop_header_branch
    %22 = sbr.rel (%p20) target = $region8
  $region5: #{res_stage.2} parent=0 // loop_body
    %s24 = ssub.s32 %s19, 1
    %s25 = ssub.s32 %s19, 2
    %s26 = sadd.s32 %s19, 1
    %s27 = ssub.s32 %s19, %s26
    %p28 = scmp.eq.s32.totalorder %s27, 0
    %s30 = sadd.s32 %s29, 1
    %s31 = scalar_select %p28, %s29, %s30
    %p34 = pneg %p28
    %p35 = scmp.eq.s32.totalorder %s19, 1
    %p36 = por %p34, %p35
    %p37 = scmp.ne.s32.totalorder %s29, %s32
    %p38 = scmp.eq.s32.totalorder %s19, 0
    %p39 = por %p37, %p38
    %p40 = scmp.ne.s32.totalorder %s29, %s32
    %p41 = scmp.eq.s32.totalorder %s24, 1
    %p42 = por %p40, %p41
    %p43 = scmp.ne.s32.totalorder %s32, %s33
    %p44 = scmp.eq.s32.totalorder %s24, 0
    %p45 = por %p43, %p44
    %p46 = scmp.ne.s32.totalorder %s32, %s33
    %p47 = scmp.eq.s32.totalorder %s25, 1
    %p48 = por %p46, %p47
    %p50 = scmp.ne.s32.totalorder %s33, %s49
    %p51 = scmp.eq.s32.totalorder %s25, 0
    %p52 = por %p50, %p51
    %s54 = sadd.s32 %s53, 1
    %p57 = scmp.eq.s32.totalorder %s19, 1
    %p58 = scmp.ne.s32.totalorder %s53, %s55
    %p59 = scmp.eq.s32.totalorder %s19, 0
    %p60 = por %p58, %p59
    %p61 = scmp.ne.s32.totalorder %s53, %s55
    %p62 = scmp.eq.s32.totalorder %s24, 1
    %p63 = por %p61, %p62
    %p64 = scmp.ne.s32.totalorder %s55, %s56
    %p65 = scmp.eq.s32.totalorder %s24, 0
    %p66 = por %p64, %p65
    %p67 = scmp.ne.s32.totalorder %s55, %s56
    %p68 = scmp.eq.s32.totalorder %s25, 1
    %p69 = por %p67, %p68
    %p71 = scmp.ne.s32.totalorder %s56, %s70
    %p72 = scmp.eq.s32.totalorder %s25, 0
    %p73 = por %p71, %p72
    %s75 = sadd.s32 %s74, 1
    %p78 = scmp.eq.s32.totalorder %s19, 1
    %p79 = scmp.ne.s32.totalorder %s74, %s76
    %p80 = scmp.eq.s32.totalorder %s19, 0
    %p81 = por %p79, %p80
    %p82 = scmp.ne.s32.totalorder %s74, %s76
    %p83 = scmp.eq.s32.totalorder %s24, 1
    %p84 = por %p82, %p83
    %p85 = scmp.ne.s32.totalorder %s76, %s77
    %p86 = scmp.eq.s32.totalorder %s24, 0
    %p87 = por %p85, %p86
    %p88 = scmp.ne.s32.totalorder %s76, %s77
    %p89 = scmp.eq.s32.totalorder %s25, 1
    %p90 = por %p88, %p89
    %p92 = scmp.ne.s32.totalorder %s77, %s91
    %p93 = scmp.eq.s32.totalorder %s25, 0
    %p94 = por %p92, %p93
    %s96 = sadd.s32 %s95, 1
    %p99 = scmp.eq.s32.totalorder %s19, 1
    %p100 = scmp.ne.s32.totalorder %s95, %s97
    %p101 = scmp.eq.s32.totalorder %s19, 0
    %p102 = por %p100, %p101
    %p103 = scmp.ne.s32.totalorder %s95, %s97
    %p104 = scmp.eq.s32.totalorder %s24, 1
    %p105 = por %p103, %p104
    %p106 = scmp.ne.s32.totalorder %s97, %s98
    %p107 = scmp.eq.s32.totalorder %s24, 0
    %p108 = por %p106, %p107
    %p109 = scmp.ne.s32.totalorder %s97, %s98
    %p110 = scmp.eq.s32.totalorder %s25, 1
    %p111 = por %p109, %p110
    %p113 = scmp.ne.s32.totalorder %s98, %s112
    %p114 = scmp.eq.s32.totalorder %s25, 0
    %p115 = por %p113, %p114
    %s117 = sadd.s32 %s116, 1
    %p120 = scmp.eq.s32.totalorder %s19, 1
    %p121 = scmp.ne.s32.totalorder %s116, %s118
    %p122 = scmp.eq.s32.totalorder %s19, 0
    %p123 = por %p121, %p122
    %p124 = scmp.ne.s32.totalorder %s116, %s118
    %p125 = scmp.eq.s32.totalorder %s24, 1
    %p126 = por %p124, %p125
    %p127 = scmp.ne.s32.totalorder %s118, %s119
    %p128 = scmp.eq.s32.totalorder %s24, 0
    %p129 = por %p127, %p128
    %p130 = scmp.ne.s32.totalorder %s118, %s119
    %p131 = scmp.eq.s32.totalorder %s25, 1
    %p132 = por %p130, %p131
    %p134 = scmp.ne.s32.totalorder %s119, %s133
    %p135 = scmp.eq.s32.totalorder %s25, 0
    %p136 = por %p134, %p135
    %s138 = sadd.s32 %s137, 1
    %p141 = scmp.eq.s32.totalorder %s19, 1
    %p142 = scmp.ne.s32.totalorder %s137, %s139
    %p143 = scmp.eq.s32.totalorder %s19, 0
    %p144 = por %p142, %p143
    %p145 = scmp.ne.s32.totalorder %s137, %s139
    %p146 = scmp.eq.s32.totalorder %s24, 1
    %p147 = por %p145, %p146
    %p148 = scmp.ne.s32.totalorder %s139, %s140
    %p149 = scmp.eq.s32.totalorder %s24, 0
    %p150 = por %p148, %p149
    %p151 = scmp.ne.s32.totalorder %s139, %s140
    %p152 = scmp.eq.s32.totalorder %s25, 1
    %p153 = por %p151, %p152
    %p155 = scmp.ne.s32.totalorder %s140, %s154
    %p156 = scmp.eq.s32.totalorder %s25, 0
    %p157 = por %p155, %p156
    %s159 = sadd.s32 %s158, 1
    %p162 = scmp.eq.s32.totalorder %s19, 1
    %p163 = scmp.ne.s32.totalorder %s158, %s160
    %p164 = scmp.eq.s32.totalorder %s19, 0
    %p165 = por %p163, %p164
    %p166 = scmp.ne.s32.totalorder %s158, %s160
    %p167 = scmp.eq.s32.totalorder %s24, 1
    %p168 = por %p166, %p167
    %p169 = scmp.ne.s32.totalorder %s160, %s161
    %p170 = scmp.eq.s32.totalorder %s24, 0
    %p171 = por %p169, %p170
    %p172 = scmp.ne.s32.totalorder %s160, %s161
    %p173 = scmp.eq.s32.totalorder %s25, 1
    %p174 = por %p172, %p173
    %p176 = scmp.ne.s32.totalorder %s161, %s175
    %p177 = scmp.eq.s32.totalorder %s25, 0
    %p178 = por %p176, %p177
    %s180 = sadd.s32 %s179, 1
    %p183 = scmp.eq.s32.totalorder %s19, 1
    %p184 = scmp.ne.s32.totalorder %s179, %s181
    %p185 = scmp.eq.s32.totalorder %s19, 0
    %p186 = por %p184, %p185
    %p187 = scmp.ne.s32.totalorder %s179, %s181
    %p188 = scmp.eq.s32.totalorder %s24, 1
    %p189 = por %p187, %p188
    %p190 = scmp.ne.s32.totalorder %s181, %s182
    %p191 = scmp.eq.s32.totalorder %s24, 0
    %p192 = por %p190, %p191
    %p193 = scmp.ne.s32.totalorder %s181, %s182
    %p194 = scmp.eq.s32.totalorder %s25, 1
    %p195 = por %p193, %p194
    %p197 = scmp.ne.s32.totalorder %s182, %s196
    %p198 = scmp.eq.s32.totalorder %s25, 0
    %p199 = por %p197, %p198
    %s201 = sadd.s32 %s200, 1
    %p204 = scmp.eq.s32.totalorder %s19, 1
    %p205 = scmp.ne.s32.totalorder %s200, %s202
    %p206 = scmp.eq.s32.totalorder %s19, 0
    %p207 = por %p205, %p206
    %p208 = scmp.ne.s32.totalorder %s200, %s202
    %p209 = scmp.eq.s32.totalorder %s24, 1
    %p210 = por %p208, %p209
    %p211 = scmp.ne.s32.totalorder %s202, %s203
    %p212 = scmp.eq.s32.totalorder %s24, 0
    %p213 = por %p211, %p212
    %p214 = scmp.ne.s32.totalorder %s202, %s203
    %p215 = scmp.eq.s32.totalorder %s25, 1
    %p216 = por %p214, %p215
    %p218 = scmp.ne.s32.totalorder %s203, %s217
    %p219 = scmp.eq.s32.totalorder %s25, 0
    %p220 = por %p218, %p219
    %s222 = sadd.s32 %s221, 1
    %p225 = scmp.eq.s32.totalorder %s19, 1
    %p226 = scmp.ne.s32.totalorder %s221, %s223
    %p227 = scmp.eq.s32.totalorder %s19, 0
    %p228 = por %p226, %p227
    %p229 = scmp.ne.s32.totalorder %s221, %s223
    %p230 = scmp.eq.s32.totalorder %s24, 1
    %p231 = por %p229, %p230
    %p232 = scmp.ne.s32.totalorder %s223, %s224
    %p233 = scmp.eq.s32.totalorder %s24, 0
    %p234 = por %p232, %p233
    %p235 = scmp.ne.s32.totalorder %s223, %s224
    %p236 = scmp.eq.s32.totalorder %s25, 1
    %p237 = por %p235, %p236
    %p239 = scmp.ne.s32.totalorder %s224, %s238
    %p240 = scmp.eq.s32.totalorder %s25, 0
    %p241 = por %p239, %p240
    %s243 = sadd.s32 %s242, 1
    %p246 = scmp.eq.s32.totalorder %s19, 1
    %p247 = scmp.ne.s32.totalorder %s242, %s244
    %p248 = scmp.eq.s32.totalorder %s19, 0
    %p249 = por %p247, %p248
    %p250 = scmp.ne.s32.totalorder %s242, %s244
    %p251 = scmp.eq.s32.totalorder %s24, 1
    %p252 = por %p250, %p251
    %p253 = scmp.ne.s32.totalorder %s244, %s245
    %p254 = scmp.eq.s32.totalorder %s24, 0
    %p255 = por %p253, %p254
    %p256 = scmp.ne.s32.totalorder %s244, %s245
    %p257 = scmp.eq.s32.totalorder %s25, 1
    %p258 = por %p256, %p257
    %p260 = scmp.ne.s32.totalorder %s245, %s259
    %p261 = scmp.eq.s32.totalorder %s25, 0
    %p262 = por %p260, %p261
    %s264 = sadd.s32 %s263, 1
    %p267 = scmp.eq.s32.totalorder %s19, 1
    %p268 = scmp.ne.s32.totalorder %s263, %s265
    %p269 = scmp.eq.s32.totalorder %s19, 0
    %p270 = por %p268, %p269
    %p271 = scmp.ne.s32.totalorder %s263, %s265
    %p272 = scmp.eq.s32.totalorder %s24, 1
    %p273 = por %p271, %p272
    %p274 = scmp.ne.s32.totalorder %s265, %s266
    %p275 = scmp.eq.s32.totalorder %s24, 0
    %p276 = por %p274, %p275
    %p277 = scmp.ne.s32.totalorder %s265, %s266
    %p278 = scmp.eq.s32.totalorder %s25, 1
    %p279 = por %p277, %p278
    %p281 = scmp.ne.s32.totalorder %s266, %s280
    %p282 = scmp.eq.s32.totalorder %s25, 0
    %p283 = por %p281, %p282
    %s285 = sadd.s32 %s284, 1
    %p288 = scmp.eq.s32.totalorder %s19, 1
    %p289 = scmp.ne.s32.totalorder %s284, %s286
    %p290 = scmp.eq.s32.totalorder %s19, 0
    %p291 = por %p289, %p290
    %p292 = scmp.ne.s32.totalorder %s284, %s286
    %p293 = scmp.eq.s32.totalorder %s24, 1
    %p294 = por %p292, %p293
    %p295 = scmp.ne.s32.totalorder %s286, %s287
    %p296 = scmp.eq.s32.totalorder %s24, 0
    %p297 = por %p295, %p296
    %p298 = scmp.ne.s32.totalorder %s286, %s287
    %p299 = scmp.eq.s32.totalorder %s25, 1
    %p300 = por %p298, %p299
    %p302 = scmp.ne.s32.totalorder %s287, %s301
    %p303 = scmp.eq.s32.totalorder %s25, 0
    %p304 = por %p302, %p303
    %s305 = ssub.s32 %s19, %s26
    %p306 = scmp.eq.s32.totalorder %s305, 0
    %s308 = sadd.s32 %s307, 1
    %s309 = scalar_select %p306, %s307, %s308
    %p312 = pneg %p306
    %p313 = scmp.eq.s32.totalorder %s19, 1
    %p314 = por %p312, %p313
    %p315 = scmp.ne.s32.totalorder %s307, %s310
    %p316 = scmp.eq.s32.totalorder %s19, 0
    %p317 = por %p315, %p316
    %p318 = scmp.ne.s32.totalorder %s307, %s310
    %p319 = scmp.eq.s32.totalorder %s24, 1
    %p320 = por %p318, %p319
    %p321 = scmp.ne.s32.totalorder %s310, %s311
    %p322 = scmp.eq.s32.totalorder %s24, 0
    %p323 = por %p321, %p322
    %p324 = scmp.ne.s32.totalorder %s310, %s311
    %p325 = scmp.eq.s32.totalorder %s25, 1
    %p326 = por %p324, %p325
    %p328 = scmp.ne.s32.totalorder %s311, %s327
    %p329 = scmp.eq.s32.totalorder %s25, 0
    %p330 = por %p328, %p329
    %p331 = scmp.le.s32.totalorder 1, %s19
    %p332 = scmp.lt.s32.totalorder %s19, 3
    %p333 = pnand %p331, %p332
    %p334 = pneg %p333
    // Predicated region
    $region9: #{res_stage.2} parent=5 // pred_check
      _
    $region10: #{res_stage.2} parent=5 // pred_check_branch
      %336 = sbr.rel (%p333) target = $region12
    $region11: #{res_stage.2} parent=5 // pred_region
      %s337 = ssub.s32 %s19, 1
      // Predicated region
      $region13: #{res_stage.2} parent=11 // pred_check
        %p338 = pneg %p66
      $region14: #{res_stage.2} parent=11 // pred_check_branch
        %340 = sbr.rel (%p338) target = $region16
      $region15: #{res_stage.2} parent=11 // pred_region
        _
      $region16: #{res_stage.2} parent=11 // pred_fallthru
        _
      // Predicated region
      $region17: #{res_stage.2} parent=11 // pred_check
        %p341 = pneg %p87
      $region18: #{res_stage.2} parent=11 // pred_check_branch
        %343 = sbr.rel (%p341) target = $region20
      $region19: #{res_stage.2} parent=11 // pred_region
        _
      $region20: #{res_stage.2} parent=11 // pred_fallthru
        _
      // Predicated region
      $region21: #{res_stage.2} parent=11 // pred_check
        %p344 = pneg %p108
      $region22: #{res_stage.2} parent=11 // pred_check_branch
        %346 = sbr.rel (%p344) target = $region24
      $region23: #{res_stage.2} parent=11 // pred_region
        _
      $region24: #{res_stage.2} parent=11 // pred_fallthru
        _
      // Predicated region
      $region25: #{res_stage.2} parent=11 // pred_check
        %p347 = pneg %p129
      $region26: #{res_stage.2} parent=11 // pred_check_branch
        %349 = sbr.rel (%p347) target = $region28
      $region27: #{res_stage.2} parent=11 // pred_region
        _
      $region28: #{res_stage.2} parent=11 // pred_fallthru
        _
      // Predicated region
      $region29: #{res_stage.2} parent=11 // pred_check
        %p350 = pneg %p150
      $region30: #{res_stage.2} parent=11 // pred_check_branch
        %352 = sbr.rel (%p350) target = $region32
      $region31: #{res_stage.2} parent=11 // pred_region
        _
      $region32: #{res_stage.2} parent=11 // pred_fallthru
        _
      // Predicated region
      $region33: #{res_stage.2} parent=11 // pred_check
        %p353 = pneg %p171
      $region34: #{res_stage.2} parent=11 // pred_check_branch
        %355 = sbr.rel (%p353) target = $region36
      $region35: #{res_stage.2} parent=11 // pred_region
        _
      $region36: #{res_stage.2} parent=11 // pred_fallthru
        _
      // Predicated region
      $region37: #{res_stage.2} parent=11 // pred_check
        %p356 = pneg %p192
      $region38: #{res_stage.2} parent=11 // pred_check_branch
        %358 = sbr.rel (%p356) target = $region40
      $region39: #{res_stage.2} parent=11 // pred_region
        _
      $region40: #{res_stage.2} parent=11 // pred_fallthru
        _
      // Predicated region
      $region41: #{res_stage.2} parent=11 // pred_check
        %p359 = pneg %p213
      $region42: #{res_stage.2} parent=11 // pred_check_branch
        %361 = sbr.rel (%p359) target = $region44
      $region43: #{res_stage.2} parent=11 // pred_region
        _
      $region44: #{res_stage.2} parent=11 // pred_fallthru
        _
      // Predicated region
      $region45: #{res_stage.2} parent=11 // pred_check
        %p362 = pneg %p234
      $region46: #{res_stage.2} parent=11 // pred_check_branch
        %364 = sbr.rel (%p362) target = $region48
      $region47: #{res_stage.2} parent=11 // pred_region
        _
      $region48: #{res_stage.2} parent=11 // pred_fallthru
        _
      // Predicated region
      $region49: #{res_stage.2} parent=11 // pred_check
        %p365 = pneg %p255
      $region50: #{res_stage.2} parent=11 // pred_check_branch
        %367 = sbr.rel (%p365) target = $region52
      $region51: #{res_stage.2} parent=11 // pred_region
        _
      $region52: #{res_stage.2} parent=11 // pred_fallthru
        _
      // Predicated region
      $region53: #{res_stage.2} parent=11 // pred_check
        %p368 = pneg %p276
      $region54: #{res_stage.2} parent=11 // pred_check_branch
        %370 = sbr.rel (%p368) target = $region56
      $region55: #{res_stage.2} parent=11 // pred_region
        _
      $region56: #{res_stage.2} parent=11 // pred_fallthru
        _
      // Predicated region
      $region57: #{res_stage.2} parent=11 // pred_check
        %p371 = pneg %p297
      $region58: #{res_stage.2} parent=11 // pred_check_branch
        %373 = sbr.rel (%p371) target = $region60
      $region59: #{res_stage.2} parent=11 // pred_region
        _
      $region60: #{res_stage.2} parent=11 // pred_fallthru
        _
    $region12: #{res_stage.2} parent=5 // pred_fallthru
      _
    %p374 = scmp.lt.s32.totalorder %s19, 2
    // Predicated region
    $region61: #{res_stage.2} parent=5 // pred_check
      %p375 = pneg %p374
    $region62: #{res_stage.2} parent=5 // pred_check_branch
      %377 = sbr.rel (%p375) target = $region64
    $region63: #{res_stage.2} parent=5 // pred_region
      // Predicated region
      $region65: #{res_stage.2} parent=63 // pred_check
        %p378 = pneg %p39
      $region66: #{res_stage.2} parent=63 // pred_check_branch
        %380 = sbr.rel (%p378) target = $region68
      $region67: #{res_stage.2} parent=63 // pred_region
        %p381 = scmp.lt.s32.totalorder %s19, 1
        %s382 = scalar_select %p381, %s19, 1
        %s383 = smul.addr %s382, 32
        %s384 = smul.addr %s383, 8
        %s385 = scalar_lea.vmem %s0, %s384
      $region68: #{res_stage.2} parent=63 // pred_fallthru
        _
    $region64: #{res_stage.2} parent=5 // pred_fallthru
      _
    %p386 = scmp.le.s32.totalorder 1, %s19
    %p387 = scmp.lt.s32.totalorder %s19, 3
    %p388 = pnand %p386, %p387
    %p389 = pneg %p388
    // Predicated region
    $region69: #{res_stage.2} parent=5 // pred_check
      _
    $region70: #{res_stage.2} parent=5 // pred_check_branch
      %391 = sbr.rel (%p388) target = $region72
    $region71: #{res_stage.2} parent=5 // pred_region
      %s392 = ssub.s32 %s19, 1
      %p393 = scmp.lt.s32.totalorder %s24, 1
      %s394 = scalar_select %p393, %s24, 1
      %s395 = smul.addr %s394, 32
      %s396 = smul.addr %s395, 8
      %s397 = scalar_lea.vmem %s0, %s396
      %p398 = pneg %p45
      %p399 = pneg %p42
      %p400 = pneg %p66
      %p401 = pneg %p63
      %p402 = pneg %p87
      %p403 = pneg %p84
      %p404 = pneg %p108
      %p405 = pneg %p105
      %p406 = pneg %p129
      %p407 = pneg %p126
      %p408 = pneg %p150
      %p409 = pneg %p147
      %p410 = pneg %p171
      %p411 = pneg %p168
      %p412 = pneg %p192
      %p413 = pneg %p189
      %p414 = pneg %p213
      %p415 = pneg %p210
      %p416 = pneg %p234
      %p417 = pneg %p231
      %p418 = pneg %p255
      %p419 = pneg %p252
      %p420 = pneg %p276
      %p421 = pneg %p273
      %p422 = pneg %p297
      %p423 = pneg %p294
      %p424 = pneg %p323
      %p425 = pneg %p320
      %p426 = scmp.lt.s32.totalorder %s24, 1
      %s427 = scalar_select %p426, %s24, 1
      %s428 = smul.addr %s427, 8
      %s429 = smul.addr %s428, 4
      %s430 = scalar_lea.vmem %s13, %s429
      %p431 = scmp.lt.s32.totalorder %s24, 1
      %s432 = scalar_select %p431, %s24, 1
      %s433 = smul.addr %s432, 32
      %s434 = smul.addr %s433, 8
      %s435 = scalar_lea.vmem %s0, %s434
      %p436 = scmp.lt.s32.totalorder %s24, 1
      %s437 = scalar_select %p436, %s24, 1
      %s438 = smul.addr %s437, 8
      %s439 = smul.addr %s438, 4
      %s440 = scalar_lea.vmem %s13, %s439
      %vm442 = vcmask 64512
      %443 = vst.msk [vmem:[#allocation2 + $0xf] sm:$0xff] %vm442, 0.0
      %444 = vst.msk [vmem:[#allocation2 + $0x17] sm:$0xff] %vm442, 0.0
      %vm445 = vcmask 58368
      %446 = vst.msk [vmem:[#allocation2 + $0x1f] sm:$0x3] %vm445, 0.0
      %s447 = scalar_lea.vmem [#allocation2], 680
      %448 = vst.msk [vmem:[%s447 + $0xf] sm:$0xff] %vm442, 0.0
      %449 = vst.msk [vmem:[%s447 + $0x17] sm:$0xff] %vm442, 0.0
      %450 = vst.msk [vmem:[%s447 + $0x1f] sm:$0x3] %vm445, 0.0
      %vm451 = vcmask 57344
      %452 = vst.msk [vmem:[#allocation2 + $0xf] sm:$0x1] %vm451, 0.0
      %453 = vst.msk [vmem:[#allocation2 + $0x37] sm:$0x1] %vm451, 0.0
      %454 = vst.msk [vmem:[#allocation2 + $0x5f] sm:$0x1] %vm451, 0.0
      %455 = vst.msk [vmem:[#allocation2 + $0x87] sm:$0x1] %vm451, 0.0
      %456 = vst.msk [vmem:[#allocation2 + $0xaf] sm:$0x1] %vm451, 0.0
      %457 = vst.msk [vmem:[#allocation2 + $0xd7] sm:$0x1] %vm451, 0.0
      %458 = vst.msk [vmem:[#allocation2 + $0xff] sm:$0x1] %vm451, 0.0
      %459 = vst.msk [vmem:[#allocation2 + $0x127] sm:$0x1] %vm451, 0.0
      %460 = vst.msk [vmem:[#allocation2 + $0x14f] sm:$0x1] %vm451, 0.0
      %461 = vst.msk [vmem:[#allocation2 + $0x177] sm:$0x1] %vm451, 0.0
      %462 = vst.msk [vmem:[#allocation2 + $0x19f] sm:$0x1] %vm451, 0.0
      %463 = vst.msk [vmem:[#allocation2 + $0x1c7] sm:$0x1] %vm451, 0.0
      %464 = vst.msk [vmem:[#allocation2 + $0x1ef] sm:$0x1] %vm451, 0.0
      %465 = vst.msk [vmem:[#allocation2 + $0x217] sm:$0x1] %vm451, 0.0
      %466 = vst.msk [vmem:[#allocation2 + $0x23f] sm:$0x1] %vm451, 0.0
      %467 = vst.msk [vmem:[#allocation2 + $0x267] sm:$0x1] %vm451, 0.0
      %468 = vst.msk [vmem:[#allocation2 + $0x28f] sm:$0x1] %vm451, 0.0
      %469 = vst.msk [vmem:[#allocation2 + $0x2b7] sm:$0x1] %vm451, 0.0
      %470 = vst.msk [vmem:[#allocation2 + $0x20] sm:$0x1] %vm451, 0.0
      %471 = vst.msk [vmem:[#allocation2 + $0x48] sm:$0x1] %vm451, 0.0
      %472 = vst.msk [vmem:[#allocation2 + $0x70] sm:$0x1] %vm451, 0.0
      %473 = vst.msk [vmem:[#allocation2 + $0x98] sm:$0x1] %vm451, 0.0
      %474 = vst.msk [vmem:[#allocation2 + $0xc0] sm:$0x1] %vm451, 0.0
      %475 = vst.msk [vmem:[#allocation2 + $0xe8] sm:$0x1] %vm451, 0.0
      %476 = vst.msk [vmem:[#allocation2 + $0x110] sm:$0x1] %vm451, 0.0
      %477 = vst.msk [vmem:[#allocation2 + $0x138] sm:$0x1] %vm451, 0.0
      %478 = vst.msk [vmem:[#allocation2 + $0x160] sm:$0x1] %vm451, 0.0
      %479 = vst.msk [vmem:[#allocation2 + $0x188] sm:$0x1] %vm451, 0.0
      %480 = vst.msk [vmem:[#allocation2 + $0x1b0] sm:$0x1] %vm451, 0.0
      %481 = vst.msk [vmem:[#allocation2 + $0x1d8] sm:$0x1] %vm451, 0.0
      %482 = vst.msk [vmem:[#allocation2 + $0x200] sm:$0x1] %vm451, 0.0
      %483 = vst.msk [vmem:[#allocation2 + $0x228] sm:$0x1] %vm451, 0.0
      %484 = vst.msk [vmem:[#allocation2 + $0x250] sm:$0x1] %vm451, 0.0
      %485 = vst.msk [vmem:[#allocation2 + $0x278] sm:$0x1] %vm451, 0.0
      %486 = vst.msk [vmem:[#allocation2 + $0x2a0] sm:$0x1] %vm451, 0.0
      %487 = vst.msk [vmem:[#allocation2 + $0x2c8] sm:$0x1] %vm451, 0.0
      %v488 = vld [vmem:[%s435] sm:$0xff]
      %v489 = vld [vmem:[%s435 + $0x8] sm:$0xff]
      %v490 = vld [vmem:[%s435 + $0x10] sm:$0xff]
      %v491 = vld [vmem:[%s435 + $0x18] sm:$0xff]
      %v492 = vld [vmem:[%s435 + $0x20] sm:$0xff]
      %v493 = vld [vmem:[%s435 + $0x28] sm:$0xff]
      %v494 = vld [vmem:[%s435 + $0x30] sm:$0xff]
      %v495 = vld [vmem:[%s435 + $0x38] sm:$0xff]
      %v496 = vld [vmem:[%s435 + $0x40] sm:$0xff]
      %v497 = vld [vmem:[%s435 + $0x48] sm:$0xff]
      %v498 = vld [vmem:[%s435 + $0x50] sm:$0xff]
      %v499 = vld [vmem:[%s435 + $0x58] sm:$0xff]
      %v500 = vld [vmem:[%s435 + $0x60] sm:$0xff]
      %v501 = vld [vmem:[%s435 + $0x68] sm:$0xff]
      %v502 = vld [vmem:[%s435 + $0x70] sm:$0xff]
      %v503 = vld [vmem:[%s435 + $0x78] sm:$0xff]
      %v504 = vld [vmem:[%s435 + $0x80] sm:$0xff]
      %v505 = vld [vmem:[%s435 + $0x88] sm:$0xff]
      %v506 = vld [vmem:[%s435 + $0x90] sm:$0xff]
      %v507 = vld [vmem:[%s435 + $0x98] sm:$0xff]
      %v508 = vld [vmem:[%s435 + $0xa0] sm:$0xff]
      %v509 = vld [vmem:[%s435 + $0xa8] sm:$0xff]
      %v510 = vld [vmem:[%s435 + $0xb0] sm:$0xff]
      %v511 = vld [vmem:[%s435 + $0xb8] sm:$0xff]
      %v512 = vld [vmem:[%s435 + $0xc0] sm:$0xff]
      %v513 = vld [vmem:[%s435 + $0xc8] sm:$0xff]
      %v514 = vld [vmem:[%s435 + $0xd0] sm:$0xff]
      %v515 = vld [vmem:[%s435 + $0xd8] sm:$0xff]
      %v516 = vld [vmem:[%s435 + $0xe0] sm:$0xff]
      %v517 = vld [vmem:[%s435 + $0xe8] sm:$0xff]
      %v518 = vld [vmem:[%s435 + $0xf0] sm:$0xff]
      %v519 = vld [vmem:[%s435 + $0xf8] sm:$0xff]
      %v520 = vpack.c.bf16 %v489, %v488
      %v521 = vpack.c.bf16 %v491, %v490
      %v522 = vpack.c.bf16 %v493, %v492
      %v523 = vpack.c.bf16 %v495, %v494
      %v524 = vpack.c.bf16 %v497, %v496
      %v525 = vpack.c.bf16 %v499, %v498
      %v526 = vpack.c.bf16 %v501, %v500
      %v527 = vpack.c.bf16 %v503, %v502
      %v528 = vpack.c.bf16 %v505, %v504
      %v529 = vpack.c.bf16 %v507, %v506
      %v530 = vpack.c.bf16 %v509, %v508
      %v531 = vpack.c.bf16 %v511, %v510
      %v532 = vpack.c.bf16 %v513, %v512
      %v533 = vpack.c.bf16 %v515, %v514
      %v534 = vpack.c.bf16 %v517, %v516
      %v535 = vpack.c.bf16 %v519, %v518
      %v536 = vld [vmem:[%s1] sm:$0xf]
      %v537 = vld [vmem:[%s1 + $0x4] sm:$0xf]
      %v540 = vunpack.c.l.b16 %v536
      %v541 = vunpack.c.l.b16 %v537
      %v542 = vpack.c.b16 %v541, %v540
      %vm544 = vcmask 130048
      %v546 = vsel %vm544, %v520, 0
      %v549 = vsel %vm544, %v521, 0
      %v552 = vsel %vm544, %v522, 0
      %v555 = vsel %vm544, %v523, 0
      %v558 = vsel %vm544, %v524, 0
      %v561 = vsel %vm544, %v525, 0
      %v564 = vsel %vm544, %v526, 0
      %v567 = vsel %vm544, %v527, 0
      %v570 = vsel %vm544, %v528, 0
      %v573 = vsel %vm544, %v529, 0
      %v576 = vsel %vm544, %v530, 0
      %v579 = vsel %vm544, %v531, 0
      %v582 = vsel %vm544, %v532, 0
      %v585 = vsel %vm544, %v533, 0
      %v588 = vsel %vm544, %v534, 0
      %v591 = vsel %vm544, %v535, 0
      %593 = vmatprep.subr.bf16.mxu0 0
      %594 = vmatpush1.bf16.msra.mxu0 0
      %595 = vmatprep.subr.bf16.mxu0 0
      %596 = vmatpush1.bf16.msra.mxu0 0
      %597 = vmatprep.subr.bf16.mxu0 0
      %598 = vmatpush1.bf16.msra.mxu0 0
      %599 = vmatprep.subr.bf16.mxu0 0
      %600 = vmatpush1.bf16.msra.mxu0 0
      %601 = vmatprep.subr.bf16.mxu0 0
      %602 = vmatpush1.bf16.msra.mxu0 0
      %603 = vmatprep.subr.bf16.mxu0 0
      %604 = vmatpush1.bf16.msra.mxu0 0
      %605 = vmatprep.subr.bf16.mxu0 0
      %606 = vmatpush1.bf16.msra.mxu0 0
      %607 = vmatprep.subr.bf16.mxu0 0
      %608 = vmatpush1.bf16.msra.mxu0 %v542
      %609 = vmatprep.subr.bf16.mxu0 0
      %610 = vmatpush2.bf16.msra.mxu0 0
      %611 = vmatprep.subr.bf16.mxu0 0
      %612 = vmatpush2.bf16.msra.mxu0 0
      %613 = vmatprep.subr.bf16.mxu0 0
      %614 = vmatpush2.bf16.msra.mxu0 0
      %615 = vmatprep.subr.bf16.mxu0 0
      %616 = vmatpush2.bf16.msra.mxu0 0
      %617 = vmatprep.subr.bf16.mxu0 0
      %618 = vmatpush2.bf16.msra.mxu0 0
      %619 = vmatprep.subr.bf16.mxu0 0
      %620 = vmatpush2.bf16.msra.mxu0 0
      %621 = vmatprep.subr.bf16.mxu0 0
      %622 = vmatpush2.bf16.msra.mxu0 0
      %623 = vmatprep.subr.bf16.mxu0 0
      %624 = vmatpush2.bf16.msra.mxu0 0
      %625 = vmatprep.mubr.bf16.mxu0 0
      %626 = vmatmul.mubr.bf16.gmra.mxu0 %v546
      %v627 = vpop.f32.mrf.mxu0
      %v628 = vadd.f32 0.0, %v627
      %v629 = vpop.f32.mrf.mxu0
      %v630 = vpop.f32.mrf.mxu0
      %v631 = vadd.f32 0.0, %v630
      %v632 = vpop.f32.mrf.mxu0
      %633 = vmatprep.mubr.bf16.mxu0 0
      %634 = vmatmul.mubr.bf16.gmra.mxu0 %v549
      %v635 = vpop.f32.mrf.mxu0
      %v636 = vadd.f32 0.0, %v635
      %v637 = vpop.f32.mrf.mxu0
      %v638 = vpop.f32.mrf.mxu0
      %v639 = vadd.f32 0.0, %v638
      %v640 = vpop.f32.mrf.mxu0
      %641 = vmatprep.mubr.bf16.mxu0 0
      %642 = vmatmul.mubr.bf16.gmra.mxu0 %v552
      %v643 = vpop.f32.mrf.mxu0
      %v644 = vadd.f32 0.0, %v643
      %v645 = vpop.f32.mrf.mxu0
      %v646 = vpop.f32.mrf.mxu0
      %v647 = vadd.f32 0.0, %v646
      %v648 = vpop.f32.mrf.mxu0
      %649 = vmatprep.mubr.bf16.mxu0 0
      %650 = vmatmul.mubr.bf16.gmra.mxu0 %v555
      %v651 = vpop.f32.mrf.mxu0
      %v652 = vadd.f32 0.0, %v651
      %v653 = vpop.f32.mrf.mxu0
      %v654 = vpop.f32.mrf.mxu0
      %v655 = vadd.f32 0.0, %v654
      %v656 = vpop.f32.mrf.mxu0
      %657 = vmatprep.mubr.bf16.mxu0 0
      %658 = vmatmul.mubr.bf16.gmra.mxu0 %v558
      %v659 = vpop.f32.mrf.mxu0
      %v660 = vadd.f32 0.0, %v659
      %v661 = vpop.f32.mrf.mxu0
      %v662 = vpop.f32.mrf.mxu0
      %v663 = vadd.f32 0.0, %v662
      %v664 = vpop.f32.mrf.mxu0
      %665 = vmatprep.mubr.bf16.mxu0 0
      %666 = vmatmul.mubr.bf16.gmra.mxu0 %v561
      %v667 = vpop.f32.mrf.mxu0
      %v668 = vadd.f32 0.0, %v667
      %v669 = vpop.f32.mrf.mxu0
      %v670 = vpop.f32.mrf.mxu0
      %v671 = vadd.f32 0.0, %v670
      %v672 = vpop.f32.mrf.mxu0
      %673 = vmatprep.mubr.bf16.mxu0 0
      %674 = vmatmul.mubr.bf16.gmra.mxu0 %v564
      %v675 = vpop.f32.mrf.mxu0
      %v676 = vadd.f32 0.0, %v675
      %v677 = vpop.f32.mrf.mxu0
      %v678 = vpop.f32.mrf.mxu0
      %v679 = vadd.f32 0.0, %v678
      %v680 = vpop.f32.mrf.mxu0
      %681 = vmatprep.mubr.bf16.mxu0 0
      %682 = vmatmul.mubr.bf16.gmra.mxu0 %v567
      %v683 = vpop.f32.mrf.mxu0
      %v684 = vadd.f32 0.0, %v683
      %v685 = vpop.f32.mrf.mxu0
      %v686 = vpop.f32.mrf.mxu0
      %v687 = vadd.f32 0.0, %v686
      %v688 = vpop.f32.mrf.mxu0
      %689 = vmatprep.mubr.bf16.mxu0 0
      %690 = vmatmul.mubr.bf16.gmra.mxu0 %v570
      %v691 = vpop.f32.mrf.mxu0
      %v692 = vadd.f32 0.0, %v691
      %v693 = vpop.f32.mrf.mxu0
      %v694 = vpop.f32.mrf.mxu0
      %v695 = vadd.f32 0.0, %v694
      %v696 = vpop.f32.mrf.mxu0
      %697 = vmatprep.mubr.bf16.mxu0 0
      %698 = vmatmul.mubr.bf16.gmra.mxu0 %v573
      %v699 = vpop.f32.mrf.mxu0
      %v700 = vadd.f32 0.0, %v699
      %v701 = vpop.f32.mrf.mxu0
      %v702 = vpop.f32.mrf.mxu0
      %v703 = vadd.f32 0.0, %v702
      %v704 = vpop.f32.mrf.mxu0
      %705 = vmatprep.mubr.bf16.mxu0 0
      %706 = vmatmul.mubr.bf16.gmra.mxu0 %v576
      %v707 = vpop.f32.mrf.mxu0
      %v708 = vadd.f32 0.0, %v707
      %v709 = vpop.f32.mrf.mxu0
      %v710 = vpop.f32.mrf.mxu0
      %v711 = vadd.f32 0.0, %v710
      %v712 = vpop.f32.mrf.mxu0
      %713 = vmatprep.mubr.bf16.mxu0 0
      %714 = vmatmul.mubr.bf16.gmra.mxu0 %v579
      %v715 = vpop.f32.mrf.mxu0
      %v716 = vadd.f32 0.0, %v715
      %v717 = vpop.f32.mrf.mxu0
      %v718 = vpop.f32.mrf.mxu0
      %v719 = vadd.f32 0.0, %v718
      %v720 = vpop.f32.mrf.mxu0
      %721 = vmatprep.mubr.bf16.mxu0 0
      %722 = vmatmul.mubr.bf16.gmra.mxu0 %v582
      %v723 = vpop.f32.mrf.mxu0
      %v724 = vadd.f32 0.0, %v723
      %v725 = vpop.f32.mrf.mxu0
      %v726 = vpop.f32.mrf.mxu0
      %v727 = vadd.f32 0.0, %v726
      %v728 = vpop.f32.mrf.mxu0
      %729 = vmatprep.mubr.bf16.mxu0 0
      %730 = vmatmul.mubr.bf16.gmra.mxu0 %v585
      %v731 = vpop.f32.mrf.mxu0
      %v732 = vadd.f32 0.0, %v731
      %v733 = vpop.f32.mrf.mxu0
      %v734 = vpop.f32.mrf.mxu0
      %v735 = vadd.f32 0.0, %v734
      %v736 = vpop.f32.mrf.mxu0
      %737 = vmatprep.mubr.bf16.mxu0 0
      %738 = vmatmul.mubr.bf16.gmra.mxu0 %v588
      %v739 = vpop.f32.mrf.mxu0
      %v740 = vadd.f32 0.0, %v739
      %v741 = vpop.f32.mrf.mxu0
      %v742 = vpop.f32.mrf.mxu0
      %v743 = vadd.f32 0.0, %v742
      %v744 = vpop.f32.mrf.mxu0
      %745 = vmatprep.mubr.bf16.mxu0 0
      %746 = vmatmul.mubr.bf16.gmra.mxu0 %v591
      %v747 = vpop.f32.mrf.mxu0
      %v748 = vadd.f32 0.0, %v747
      %v749 = vpop.f32.mrf.mxu0
      %v750 = vpop.f32.mrf.mxu0
      %v751 = vadd.f32 0.0, %v750
      %v752 = vpop.f32.mrf.mxu0
      %753 = vdwg.mxu0
      %v754 = vld [vmem:[%s5] sm:$0x1]
      %v756 = vlaneseq
      %v757 = vshrl.u32 %v756, 7
      %v758 = vsub.s32 0, %v757
      %v759 = vrot.slane %v754, %v758
      %v761 = vmul.f32 %v628, %v759
      %v762 = vmul.f32 %v631, %v759
      %v763 = vmul.f32 %v636, %v759
      %v764 = vmul.f32 %v639, %v759
      %v765 = vmul.f32 %v644, %v759
      %v766 = vmul.f32 %v647, %v759
      %v767 = vmul.f32 %v652, %v759
      %v768 = vmul.f32 %v655, %v759
      %v769 = vmul.f32 %v660, %v759
      %v770 = vmul.f32 %v663, %v759
      %v771 = vmul.f32 %v668, %v759
      %v772 = vmul.f32 %v671, %v759
      %v773 = vmul.f32 %v676, %v759
      %v774 = vmul.f32 %v679, %v759
      %v775 = vmul.f32 %v684, %v759
      %v776 = vmul.f32 %v687, %v759
      %v777 = vmul.f32 %v692, %v759
      %v778 = vmul.f32 %v695, %v759
      %v779 = vmul.f32 %v700, %v759
      %v780 = vmul.f32 %v703, %v759
      %v781 = vmul.f32 %v708, %v759
      %v782 = vmul.f32 %v711, %v759
      %v783 = vmul.f32 %v716, %v759
      %v784 = vmul.f32 %v719, %v759
      %v785 = vmul.f32 %v724, %v759
      %v786 = vmul.f32 %v727, %v759
      %v787 = vmul.f32 %v732, %v759
      %v788 = vmul.f32 %v735, %v759
      %v789 = vmul.f32 %v740, %v759
      %v790 = vmul.f32 %v743, %v759
      %v791 = vmul.f32 %v748, %v759
      %v792 = vmul.f32 %v751, %v759
      %v793 = vld [vmem:[%s6] sm:$0x1]
      %v795 = vlaneseq
      %v796 = vshrl.u32 %v795, 7
      %v797 = vsub.s32 0, %v796
      %v798 = vrot.slane %v793, %v797
      %v800 = vadd.f32 %v761, %v798
      %v801 = vadd.f32 %v762, %v798
      %v802 = vadd.f32 %v763, %v798
      %v803 = vadd.f32 %v764, %v798
      %v804 = vadd.f32 %v765, %v798
      %v805 = vadd.f32 %v766, %v798
      %v806 = vadd.f32 %v767, %v798
      %v807 = vadd.f32 %v768, %v798
      %v808 = vadd.f32 %v769, %v798
      %v809 = vadd.f32 %v770, %v798
      %v810 = vadd.f32 %v771, %v798
      %v811 = vadd.f32 %v772, %v798
      %v812 = vadd.f32 %v773, %v798
      %v813 = vadd.f32 %v774, %v798
      %v814 = vadd.f32 %v775, %v798
      %v815 = vadd.f32 %v776, %v798
      %v816 = vadd.f32 %v777, %v798
      %v817 = vadd.f32 %v778, %v798
      %v818 = vadd.f32 %v779, %v798
      %v819 = vadd.f32 %v780, %v798
      %v820 = vadd.f32 %v781, %v798
      %v821 = vadd.f32 %v782, %v798
      %v822 = vadd.f32 %v783, %v798
      %v823 = vadd.f32 %v784, %v798
      %v824 = vadd.f32 %v785, %v798
      %v825 = vadd.f32 %v786, %v798
      %v826 = vadd.f32 %v787, %v798
      %v827 = vadd.f32 %v788, %v798
      %v828 = vadd.f32 %v789, %v798
      %v829 = vadd.f32 %v790, %v798
      %v830 = vadd.f32 %v791, %v798
      %v831 = vadd.f32 %v792, %v798
      %v832 = vmax.f32 %v800, 0.0
      %v833 = vmax.f32 %v801, 0.0
      %v834 = vmax.f32 %v802, 0.0
      %v835 = vmax.f32 %v803, 0.0
      %v836 = vmax.f32 %v804, 0.0
      %v837 = vmax.f32 %v805, 0.0
      %v838 = vmax.f32 %v806, 0.0
      %v839 = vmax.f32 %v807, 0.0
      %v840 = vmax.f32 %v808, 0.0
      %v841 = vmax.f32 %v809, 0.0
      %v842 = vmax.f32 %v810, 0.0
      %v843 = vmax.f32 %v811, 0.0
      %v844 = vmax.f32 %v812, 0.0
      %v845 = vmax.f32 %v813, 0.0
      %v846 = vmax.f32 %v814, 0.0
      %v847 = vmax.f32 %v815, 0.0
      %v848 = vmax.f32 %v816, 0.0
      %v849 = vmax.f32 %v817, 0.0
      %v850 = vmax.f32 %v818, 0.0
      %v851 = vmax.f32 %v819, 0.0
      %v852 = vmax.f32 %v820, 0.0
      %v853 = vmax.f32 %v821, 0.0
      %v854 = vmax.f32 %v822, 0.0
      %v855 = vmax.f32 %v823, 0.0
      %v856 = vmax.f32 %v824, 0.0
      %v857 = vmax.f32 %v825, 0.0
      %v858 = vmax.f32 %v826, 0.0
      %v859 = vmax.f32 %v827, 0.0
      %v860 = vmax.f32 %v828, 0.0
      %v861 = vmax.f32 %v829, 0.0
      %v862 = vmax.f32 %v830, 0.0
      %v863 = vmax.f32 %v831, 0.0
      %s864 = scalar_lea.vmem [#allocation2], 40
      %865 = vst.msk [vmem:[%s864 + $0x10] sm:$0xff] %vm442, %v832
      %866 = vst.msk [vmem:[%s864 + $0x18] sm:$0xff] %vm442, %v833
      %867 = vst.msk [vmem:[%s864 + $0x38] sm:$0xff] %vm442, %v834
      %868 = vst.msk [vmem:[%s864 + $0x40] sm:$0xff] %vm442, %v835
      %869 = vst.msk [vmem:[%s864 + $0x60] sm:$0xff] %vm442, %v836
      %870 = vst.msk [vmem:[%s864 + $0x68] sm:$0xff] %vm442, %v837
      %871 = vst.msk [vmem:[%s864 + $0x88] sm:$0xff] %vm442, %v838
      %872 = vst.msk [vmem:[%s864 + $0x90] sm:$0xff] %vm442, %v839
      %873 = vst.msk [vmem:[%s864 + $0xb0] sm:$0xff] %vm442, %v840
      %874 = vst.msk [vmem:[%s864 + $0xb8] sm:$0xff] %vm442, %v841
      %875 = vst.msk [vmem:[%s864 + $0xd8] sm:$0xff] %vm442, %v842
      %876 = vst.msk [vmem:[%s864 + $0xe0] sm:$0xff] %vm442, %v843
      %877 = vst.msk [vmem:[%s864 + $0x100] sm:$0xff] %vm442, %v844
      %878 = vst.msk [vmem:[%s864 + $0x108] sm:$0xff] %vm442, %v845
      %879 = vst.msk [vmem:[%s864 + $0x128] sm:$0xff] %vm442, %v846
      %880 = vst.msk [vmem:[%s864 + $0x130] sm:$0xff] %vm442, %v847
      %881 = vst.msk [vmem:[%s864 + $0x150] sm:$0xff] %vm442, %v848
      %882 = vst.msk [vmem:[%s864 + $0x158] sm:$0xff] %vm442, %v849
      %883 = vst.msk [vmem:[%s864 + $0x178] sm:$0xff] %vm442, %v850
      %884 = vst.msk [vmem:[%s864 + $0x180] sm:$0xff] %vm442, %v851
      %885 = vst.msk [vmem:[%s864 + $0x1a0] sm:$0xff] %vm442, %v852
      %886 = vst.msk [vmem:[%s864 + $0x1a8] sm:$0xff] %vm442, %v853
      %887 = vst.msk [vmem:[%s864 + $0x1c8] sm:$0xff] %vm442, %v854
      %888 = vst.msk [vmem:[%s864 + $0x1d0] sm:$0xff] %vm442, %v855
      %889 = vst.msk [vmem:[%s864 + $0x1f0] sm:$0xff] %vm442, %v856
      %890 = vst.msk [vmem:[%s864 + $0x1f8] sm:$0xff] %vm442, %v857
      %891 = vst.msk [vmem:[%s864 + $0x218] sm:$0xff] %vm442, %v858
      %892 = vst.msk [vmem:[%s864 + $0x220] sm:$0xff] %vm442, %v859
      %893 = vst.msk [vmem:[%s864 + $0x240] sm:$0xff] %vm442, %v860
      %894 = vst.msk [vmem:[%s864 + $0x248] sm:$0xff] %vm442, %v861
      %895 = vst.msk [vmem:[%s864 + $0x268] sm:$0xff] %vm442, %v862
      %896 = vst.msk [vmem:[%s864 + $0x270] sm:$0xff] %vm442, %v863
      %s897 = scalar_lea.vmem [#allocation2], 15
      %v898 = vld [vmem:[%s897] ss:$2 sm:$0xff]
      %s899 = scalar_lea.vmem [#allocation2], 95
      %v900 = vld [vmem:[%s899] ss:$2 sm:$0xff]
      %s901 = scalar_lea.vmem [#allocation2], 175
      %v902 = vld [vmem:[%s901] ss:$2 sm:$0xff]
      %s903 = scalar_lea.vmem [#allocation2], 255
      %v904 = vld [vmem:[%s903] ss:$2 sm:$0xff]
      %s905 = scalar_lea.vmem [#allocation2], 335
      %v906 = vld [vmem:[%s905] ss:$2 sm:$0xff]
      %s907 = scalar_lea.vmem [#allocation2], 415
      %v908 = vld [vmem:[%s907] ss:$2 sm:$0xff]
      %s909 = scalar_lea.vmem [#allocation2], 495
      %v910 = vld [vmem:[%s909] ss:$2 sm:$0xff]
      %s911 = scalar_lea.vmem [#allocation2], 575
      %v912 = vld [vmem:[%s911] ss:$2 sm:$0xff]
      %v913 = vpack.c.bf16 %v900, %v898
      %v914 = vpack.c.bf16 %v904, %v902
      %v915 = vpack.c.bf16 %v908, %v906
      %v916 = vpack.c.bf16 %v912, %v910
      %v917 = vld [vmem:[%s2] sm:$0xf]
      %s918 = scalar_lea.vmem [#allocation2], 16
      %v919 = vld [vmem:[%s918] ss:$2 sm:$0xff]
      %s920 = scalar_lea.vmem [#allocation2], 96
      %v921 = vld [vmem:[%s920] ss:$2 sm:$0xff]
      %s922 = scalar_lea.vmem [#allocation2], 176
      %v923 = vld [vmem:[%s922] ss:$2 sm:$0xff]
      %s924 = scalar_lea.vmem [#allocation2], 256
      %v925 = vld [vmem:[%s924] ss:$2 sm:$0xff]
      %s926 = scalar_lea.vmem [#allocation2], 336
      %v927 = vld [vmem:[%s926] ss:$2 sm:$0xff]
      %s928 = scalar_lea.vmem [#allocation2], 416
      %v929 = vld [vmem:[%s928] ss:$2 sm:$0xff]
      %s930 = scalar_lea.vmem [#allocation2], 496
      %v931 = vld [vmem:[%s930] ss:$2 sm:$0xff]
      %s932 = scalar_lea.vmem [#allocation2], 576
      %v933 = vld [vmem:[%s932] ss:$2 sm:$0xff]
      %v934 = vpack.c.bf16 %v921, %v919
      %v935 = vpack.c.bf16 %v925, %v923
      %v936 = vpack.c.bf16 %v929, %v927
      %v937 = vpack.c.bf16 %v933, %v931
      %v938 = vld [vmem:[%s2 + $0x4] sm:$0xf]
      %v940 = vsel %vm442, %v934, 0
      %v943 = vsel %vm442, %v935, 0
      %v946 = vsel %vm442, %v936, 0
      %v949 = vsel %vm442, %v937, 0
      %vm951 = vcmask 1043456
      %v953 = vsel %vm951, %v938, 0
      %955 = vmatprep.subr.bf16.mxu0 0
      %956 = vmatpush1.bf16.msra.mxu0 0
      %957 = vmatprep.subr.bf16.mxu0 0
      %958 = vmatpush1.bf16.msra.mxu0 0
      %959 = vmatprep.subr.bf16.mxu0 0
      %960 = vmatpush1.bf16.msra.mxu0 0
      %961 = vmatprep.subr.bf16.mxu0 0
      %962 = vmatpush1.bf16.msra.mxu0 0
      %963 = vmatprep.subr.bf16.mxu0 0
      %964 = vmatpush1.bf16.msra.mxu0 0
      %965 = vmatprep.subr.bf16.mxu0 0
      %966 = vmatpush1.bf16.msra.mxu0 0
      %967 = vmatprep.subr.bf16.mxu0 0
      %968 = vmatpush1.bf16.msra.mxu0 0
      %969 = vmatprep.subr.bf16.mxu0 0
      %970 = vmatpush1.bf16.msra.mxu0 %v953
      %971 = vmatprep.subr.bf16.mxu0 0
      %972 = vmatpush2.bf16.msra.mxu0 0
      %973 = vmatprep.subr.bf16.mxu0 0
      %974 = vmatpush2.bf16.msra.mxu0 0
      %975 = vmatprep.subr.bf16.mxu0 0
      %976 = vmatpush2.bf16.msra.mxu0 0
      %977 = vmatprep.subr.bf16.mxu0 0
      %978 = vmatpush2.bf16.msra.mxu0 0
      %979 = vmatprep.subr.bf16.mxu0 0
      %980 = vmatpush2.bf16.msra.mxu0 0
      %981 = vmatprep.subr.bf16.mxu0 0
      %982 = vmatpush2.bf16.msra.mxu0 0
      %983 = vmatprep.subr.bf16.mxu0 0
      %984 = vmatpush2.bf16.msra.mxu0 0
      %985 = vmatprep.subr.bf16.mxu0 0
      %986 = vmatpush2.bf16.msra.mxu0 0
      %987 = vmatprep.mubr.bf16.mxu0 0
      %988 = vmatmul.mubr.bf16.gmra.mxu0 %v940
      %v989 = vpop.f32.mrf.mxu0
      %v990 = vadd.f32 0.0, %v989
      %v991 = vpop.f32.mrf.mxu0
      %v992 = vpop.f32.mrf.mxu0
      %v993 = vadd.f32 0.0, %v992
      %v994 = vpop.f32.mrf.mxu0
      %995 = vmatprep.mubr.bf16.mxu0 0
      %996 = vmatmul.mubr.bf16.gmra.mxu0 %v943
      %v997 = vpop.f32.mrf.mxu0
      %v998 = vadd.f32 0.0, %v997
      %v999 = vpop.f32.mrf.mxu0
      %v1000 = vpop.f32.mrf.mxu0
      %v1001 = vadd.f32 0.0, %v1000
      %v1002 = vpop.f32.mrf.mxu0
      %1003 = vmatprep.mubr.bf16.mxu0 0
      %1004 = vmatmul.mubr.bf16.gmra.mxu0 %v946
      %v1005 = vpop.f32.mrf.mxu0
      %v1006 = vadd.f32 0.0, %v1005
      %v1007 = vpop.f32.mrf.mxu0
      %v1008 = vpop.f32.mrf.mxu0
      %v1009 = vadd.f32 0.0, %v1008
      %v1010 = vpop.f32.mrf.mxu0
      %1011 = vmatprep.mubr.bf16.mxu0 0
      %1012 = vmatmul.mubr.bf16.gmra.mxu0 %v949
      %v1013 = vpop.f32.mrf.mxu0
      %v1014 = vadd.f32 0.0, %v1013
      %v1015 = vpop.f32.mrf.mxu0
      %v1016 = vpop.f32.mrf.mxu0
      %v1017 = vadd.f32 0.0, %v1016
      %v1018 = vpop.f32.mrf.mxu0
      %1019 = vdwg.mxu0
      %v1021 = vsel %vm442, %v913, 0
      %v1024 = vsel %vm442, %v914, 0
      %v1027 = vsel %vm442, %v915, 0
      %v1030 = vsel %vm442, %v916, 0
      %v1033 = vsel %vm951, %v917, 0
      %1035 = vmatprep.subr.bf16.mxu0 0
      %1036 = vmatpush1.bf16.msra.mxu0 0
      %1037 = vmatprep.subr.bf16.mxu0 0
      %1038 = vmatpush1.bf16.msra.mxu0 0
      %1039 = vmatprep.subr.bf16.mxu0 0
      %1040 = vmatpush1.bf16.msra.mxu0 0
      %1041 = vmatprep.subr.bf16.mxu0 0
      %1042 = vmatpush1.bf16.msra.mxu0 0
      %1043 = vmatprep.subr.bf16.mxu0 0
      %1044 = vmatpush1.bf16.msra.mxu0 0
      %1045 = vmatprep.subr.bf16.mxu0 0
      %1046 = vmatpush1.bf16.msra.mxu0 0
      %1047 = vmatprep.subr.bf16.mxu0 0
      %1048 = vmatpush1.bf16.msra.mxu0 0
      %1049 = vmatprep.subr.bf16.mxu0 0
      %1050 = vmatpush1.bf16.msra.mxu0 %v1033
      %1051 = vmatprep.subr.bf16.mxu0 0
      %1052 = vmatpush2.bf16.msra.mxu0 0
      %1053 = vmatprep.subr.bf16.mxu0 0
      %1054 = vmatpush2.bf16.msra.mxu0 0
      %1055 = vmatprep.subr.bf16.mxu0 0
      %1056 = vmatpush2.bf16.msra.mxu0 0
      %1057 = vmatprep.subr.bf16.mxu0 0
      %1058 = vmatpush2.bf16.msra.mxu0 0
      %1059 = vmatprep.subr.bf16.mxu0 0
      %1060 = vmatpush2.bf16.msra.mxu0 0
      %1061 = vmatprep.subr.bf16.mxu0 0
      %1062 = vmatpush2.bf16.msra.mxu0 0
      %1063 = vmatprep.subr.bf16.mxu0 0
      %1064 = vmatpush2.bf16.msra.mxu0 0
      %1065 = vmatprep.subr.bf16.mxu0 0
      %1066 = vmatpush2.bf16.msra.mxu0 0
      %1067 = vmatprep.mubr.bf16.mxu0 0
      %1068 = vmatmul.mubr.bf16.gmra.mxu0 %v1021
      %v1069 = vpop.f32.mrf.mxu0
      %v1070 = vadd.f32 %v990, %v1069
      %v1071 = vpop.f32.mrf.mxu0
      %v1072 = vpop.f32.mrf.mxu0
      %v1073 = vadd.f32 %v993, %v1072
      %v1074 = vpop.f32.mrf.mxu0
      %1075 = vmatprep.mubr.bf16.mxu0 0
      %1076 = vmatmul.mubr.bf16.gmra.mxu0 %v1024
      %v1077 = vpop.f32.mrf.mxu0
      %v1078 = vadd.f32 %v998, %v1077
      %v1079 = vpop.f32.mrf.mxu0
      %v1080 = vpop.f32.mrf.mxu0
      %v1081 = vadd.f32 %v1001, %v1080
      %v1082 = vpop.f32.mrf.mxu0
      %1083 = vmatprep.mubr.bf16.mxu0 0
      %1084 = vmatmul.mubr.bf16.gmra.mxu0 %v1027
      %v1085 = vpop.f32.mrf.mxu0
      %v1086 = vadd.f32 %v1006, %v1085
      %v1087 = vpop.f32.mrf.mxu0
      %v1088 = vpop.f32.mrf.mxu0
      %v1089 = vadd.f32 %v1009, %v1088
      %v1090 = vpop.f32.mrf.mxu0
      %1091 = vmatprep.mubr.bf16.mxu0 0
      %1092 = vmatmul.mubr.bf16.gmra.mxu0 %v1030
      %v1093 = vpop.f32.mrf.mxu0
      %v1094 = vadd.f32 %v1014, %v1093
      %v1095 = vpop.f32.mrf.mxu0
      %v1096 = vpop.f32.mrf.mxu0
      %v1097 = vadd.f32 %v1017, %v1096
      %v1098 = vpop.f32.mrf.mxu0
      %1099 = vdwg.mxu0
      %s1100 = scalar_lea.vmem [#allocation2], 17
      %v1101 = vld [vmem:[%s1100] ss:$2 sm:$0xff]
      %s1102 = scalar_lea.vmem [#allocation2], 97
      %v1103 = vld [vmem:[%s1102] ss:$2 sm:$0xff]
      %s1104 = scalar_lea.vmem [#allocation2], 177
      %v1105 = vld [vmem:[%s1104] ss:$2 sm:$0xff]
      %s1106 = scalar_lea.vmem [#allocation2], 257
      %v1107 = vld [vmem:[%s1106] ss:$2 sm:$0xff]
      %s1108 = scalar_lea.vmem [#allocation2], 337
      %v1109 = vld [vmem:[%s1108] ss:$2 sm:$0xff]
      %s1110 = scalar_lea.vmem [#allocation2], 417
      %v1111 = vld [vmem:[%s1110] ss:$2 sm:$0xff]
      %s1112 = scalar_lea.vmem [#allocation2], 497
      %v1113 = vld [vmem:[%s1112] ss:$2 sm:$0xff]
      %s1114 = scalar_lea.vmem [#allocation2], 577
      %v1115 = vld [vmem:[%s1114] ss:$2 sm:$0xff]
      %v1116 = vpack.c.bf16 %v1103, %v1101
      %v1117 = vpack.c.bf16 %v1107, %v1105
      %v1118 = vpack.c.bf16 %v1111, %v1109
      %v1119 = vpack.c.bf16 %v1115, %v1113
      %v1120 = vld [vmem:[%s2 + $0x8] sm:$0xf]
      %v1122 = vsel %vm442, %v1116, 0
      %v1125 = vsel %vm442, %v1117, 0
      %v1128 = vsel %vm442, %v1118, 0
      %v1131 = vsel %vm442, %v1119, 0
      %v1134 = vsel %vm951, %v1120, 0
      %1136 = vmatprep.subr.bf16.mxu0 0
      %1137 = vmatpush1.bf16.msra.mxu0 0
      %1138 = vmatprep.subr.bf16.mxu0 0
      %1139 = vmatpush1.bf16.msra.mxu0 0
      %1140 = vmatprep.subr.bf16.mxu0 0
      %1141 = vmatpush1.bf16.msra.mxu0 0
      %1142 = vmatprep.subr.bf16.mxu0 0
      %1143 = vmatpush1.bf16.msra.mxu0 0
      %1144 = vmatprep.subr.bf16.mxu0 0
      %1145 = vmatpush1.bf16.msra.mxu0 0
      %1146 = vmatprep.subr.bf16.mxu0 0
      %1147 = vmatpush1.bf16.msra.mxu0 0
      %1148 = vmatprep.subr.bf16.mxu0 0
      %1149 = vmatpush1.bf16.msra.mxu0 0
      %1150 = vmatprep.subr.bf16.mxu0 0
      %1151 = vmatpush1.bf16.msra.mxu0 %v1134
      %1152 = vmatprep.subr.bf16.mxu0 0
      %1153 = vmatpush2.bf16.msra.mxu0 0
      %1154 = vmatprep.subr.bf16.mxu0 0
      %1155 = vmatpush2.bf16.msra.mxu0 0
      %1156 = vmatprep.subr.bf16.mxu0 0
      %1157 = vmatpush2.bf16.msra.mxu0 0
      %1158 = vmatprep.subr.bf16.mxu0 0
      %1159 = vmatpush2.bf16.msra.mxu0 0
      %1160 = vmatprep.subr.bf16.mxu0 0
      %1161 = vmatpush2.bf16.msra.mxu0 0
      %1162 = vmatprep.subr.bf16.mxu0 0
      %1163 = vmatpush2.bf16.msra.mxu0 0
      %1164 = vmatprep.subr.bf16.mxu0 0
      %1165 = vmatpush2.bf16.msra.mxu0 0
      %1166 = vmatprep.subr.bf16.mxu0 0
      %1167 = vmatpush2.bf16.msra.mxu0 0
      %1168 = vmatprep.mubr.bf16.mxu0 0
      %1169 = vmatmul.mubr.bf16.gmra.mxu0 %v1122
      %v1170 = vpop.f32.mrf.mxu0
      %v1171 = vadd.f32 0.0, %v1170
      %v1172 = vpop.f32.mrf.mxu0
      %v1173 = vpop.f32.mrf.mxu0
      %v1174 = vadd.f32 0.0, %v1173
      %v1175 = vpop.f32.mrf.mxu0
      %1176 = vmatprep.mubr.bf16.mxu0 0
      %1177 = vmatmul.mubr.bf16.gmra.mxu0 %v1125
      %v1178 = vpop.f32.mrf.mxu0
      %v1179 = vadd.f32 0.0, %v1178
      %v1180 = vpop.f32.mrf.mxu0
      %v1181 = vpop.f32.mrf.mxu0
      %v1182 = vadd.f32 0.0, %v1181
      %v1183 = vpop.f32.mrf.mxu0
      %1184 = vmatprep.mubr.bf16.mxu0 0
      %1185 = vmatmul.mubr.bf16.gmra.mxu0 %v1128
      %v1186 = vpop.f32.mrf.mxu0
      %v1187 = vadd.f32 0.0, %v1186
      %v1188 = vpop.f32.mrf.mxu0
      %v1189 = vpop.f32.mrf.mxu0
      %v1190 = vadd.f32 0.0, %v1189
      %v1191 = vpop.f32.mrf.mxu0
      %1192 = vmatprep.mubr.bf16.mxu0 0
      %1193 = vmatmul.mubr.bf16.gmra.mxu0 %v1131
      %v1194 = vpop.f32.mrf.mxu0
      %v1195 = vadd.f32 0.0, %v1194
      %v1196 = vpop.f32.mrf.mxu0
      %v1197 = vpop.f32.mrf.mxu0
      %v1198 = vadd.f32 0.0, %v1197
      %v1199 = vpop.f32.mrf.mxu0
      %1200 = vdwg.mxu0
      %v1201 = vadd.f32 %v1070, %v1171
      %v1202 = vadd.f32 %v1073, %v1174
      %v1203 = vadd.f32 %v1078, %v1179
      %v1204 = vadd.f32 %v1081, %v1182
      %v1205 = vadd.f32 %v1086, %v1187
      %v1206 = vadd.f32 %v1089, %v1190
      %v1207 = vadd.f32 %v1094, %v1195
      %v1208 = vadd.f32 %v1097, %v1198
      %s1209 = scalar_lea.vmem %s864, 15 [#allocation2]
      %v1210 = vld [vmem:[%s1209] ss:$2 sm:$0xff]
      %s1211 = scalar_lea.vmem %s864, 95 [#allocation2]
      %v1212 = vld [vmem:[%s1211] ss:$2 sm:$0xff]
      %s1213 = scalar_lea.vmem %s864, 175 [#allocation2]
      %v1214 = vld [vmem:[%s1213] ss:$2 sm:$0xff]
      %s1215 = scalar_lea.vmem %s864, 255 [#allocation2]
      %v1216 = vld [vmem:[%s1215] ss:$2 sm:$0xff]
      %s1217 = scalar_lea.vmem %s864, 335 [#allocation2]
      %v1218 = vld [vmem:[%s1217] ss:$2 sm:$0xff]
      %s1219 = scalar_lea.vmem %s864, 415 [#allocation2]
      %v1220 = vld [vmem:[%s1219] ss:$2 sm:$0xff]
      %s1221 = scalar_lea.vmem %s864, 495 [#allocation2]
      %v1222 = vld [vmem:[%s1221] ss:$2 sm:$0xff]
      %s1223 = scalar_lea.vmem %s864, 575 [#allocation2]
      %v1224 = vld [vmem:[%s1223] ss:$2 sm:$0xff]
      %v1225 = vpack.c.bf16 %v1212, %v1210
      %v1226 = vpack.c.bf16 %v1216, %v1214
      %v1227 = vpack.c.bf16 %v1220, %v1218
      %v1228 = vpack.c.bf16 %v1224, %v1222
      %v1229 = vld [vmem:[%s2 + $0xc] sm:$0xf]
      %v1231 = vsel %vm442, %v1225, 0
      %v1234 = vsel %vm442, %v1226, 0
      %v1237 = vsel %vm442, %v1227, 0
      %v1240 = vsel %vm442, %v1228, 0
      %v1243 = vsel %vm951, %v1229, 0
      %1245 = vmatprep.subr.bf16.mxu0 0
      %1246 = vmatpush1.bf16.msra.mxu0 0
      %1247 = vmatprep.subr.bf16.mxu0 0
      %1248 = vmatpush1.bf16.msra.mxu0 0
      %1249 = vmatprep.subr.bf16.mxu0 0
      %1250 = vmatpush1.bf16.msra.mxu0 0
      %1251 = vmatprep.subr.bf16.mxu0 0
      %1252 = vmatpush1.bf16.msra.mxu0 0
      %1253 = vmatprep.subr.bf16.mxu0 0
      %1254 = vmatpush1.bf16.msra.mxu0 0
      %1255 = vmatprep.subr.bf16.mxu0 0
      %1256 = vmatpush1.bf16.msra.mxu0 0
      %1257 = vmatprep.subr.bf16.mxu0 0
      %1258 = vmatpush1.bf16.msra.mxu0 0
      %1259 = vmatprep.subr.bf16.mxu0 0
      %1260 = vmatpush1.bf16.msra.mxu0 %v1243
      %1261 = vmatprep.subr.bf16.mxu0 0
      %1262 = vmatpush2.bf16.msra.mxu0 0
      %1263 = vmatprep.subr.bf16.mxu0 0
      %1264 = vmatpush2.bf16.msra.mxu0 0
      %1265 = vmatprep.subr.bf16.mxu0 0
      %1266 = vmatpush2.bf16.msra.mxu0 0
      %1267 = vmatprep.subr.bf16.mxu0 0
      %1268 = vmatpush2.bf16.msra.mxu0 0
      %1269 = vmatprep.subr.bf16.mxu0 0
      %1270 = vmatpush2.bf16.msra.mxu0 0
      %1271 = vmatprep.subr.bf16.mxu0 0
      %1272 = vmatpush2.bf16.msra.mxu0 0
      %1273 = vmatprep.subr.bf16.mxu0 0
      %1274 = vmatpush2.bf16.msra.mxu0 0
      %1275 = vmatprep.subr.bf16.mxu0 0
      %1276 = vmatpush2.bf16.msra.mxu0 0
      %1277 = vmatprep.mubr.bf16.mxu0 0
      %1278 = vmatmul.mubr.bf16.gmra.mxu0 %v1231
      %v1279 = vpop.f32.mrf.mxu0
      %v1280 = vadd.f32 0.0, %v1279
      %v1281 = vpop.f32.mrf.mxu0
      %v1282 = vpop.f32.mrf.mxu0
      %v1283 = vadd.f32 0.0, %v1282
      %v1284 = vpop.f32.mrf.mxu0
      %1285 = vmatprep.mubr.bf16.mxu0 0
      %1286 = vmatmul.mubr.bf16.gmra.mxu0 %v1234
      %v1287 = vpop.f32.mrf.mxu0
      %v1288 = vadd.f32 0.0, %v1287
      %v1289 = vpop.f32.mrf.mxu0
      %v1290 = vpop.f32.mrf.mxu0
      %v1291 = vadd.f32 0.0, %v1290
      %v1292 = vpop.f32.mrf.mxu0
      %1293 = vmatprep.mubr.bf16.mxu0 0
      %1294 = vmatmul.mubr.bf16.gmra.mxu0 %v1237
      %v1295 = vpop.f32.mrf.mxu0
      %v1296 = vadd.f32 0.0, %v1295
      %v1297 = vpop.f32.mrf.mxu0
      %v1298 = vpop.f32.mrf.mxu0
      %v1299 = vadd.f32 0.0, %v1298
      %v1300 = vpop.f32.mrf.mxu0
      %1301 = vmatprep.mubr.bf16.mxu0 0
      %1302 = vmatmul.mubr.bf16.gmra.mxu0 %v1240
      %v1303 = vpop.f32.mrf.mxu0
      %v1304 = vadd.f32 0.0, %v1303
      %v1305 = vpop.f32.mrf.mxu0
      %v1306 = vpop.f32.mrf.mxu0
      %v1307 = vadd.f32 0.0, %v1306
      %v1308 = vpop.f32.mrf.mxu0
      %1309 = vdwg.mxu0
      %v1310 = vadd.f32 %v1201, %v1280
      %v1311 = vadd.f32 %v1202, %v1283
      %v1312 = vadd.f32 %v1203, %v1288
      %v1313 = vadd.f32 %v1204, %v1291
      %v1314 = vadd.f32 %v1205, %v1296
      %v1315 = vadd.f32 %v1206, %v1299
      %v1316 = vadd.f32 %v1207, %v1304
      %v1317 = vadd.f32 %v1208, %v1307
      %s1318 = scalar_lea.vmem %s864, 16 [#allocation2]
      %v1319 = vld [vmem:[%s1318] ss:$2 sm:$0xff]
      %s1320 = scalar_lea.vmem %s864, 96 [#allocation2]
      %v1321 = vld [vmem:[%s1320] ss:$2 sm:$0xff]
      %s1322 = scalar_lea.vmem %s864, 176 [#allocation2]
      %v1323 = vld [vmem:[%s1322] ss:$2 sm:$0xff]
      %s1324 = scalar_lea.vmem %s864, 256 [#allocation2]
      %v1325 = vld [vmem:[%s1324] ss:$2 sm:$0xff]
      %s1326 = scalar_lea.vmem %s864, 336 [#allocation2]
      %v1327 = vld [vmem:[%s1326] ss:$2 sm:$0xff]
      %s1328 = scalar_lea.vmem %s864, 416 [#allocation2]
      %v1329 = vld [vmem:[%s1328] ss:$2 sm:$0xff]
      %s1330 = scalar_lea.vmem %s864, 496 [#allocation2]
      %v1331 = vld [vmem:[%s1330] ss:$2 sm:$0xff]
      %s1332 = scalar_lea.vmem %s864, 576 [#allocation2]
      %v1333 = vld [vmem:[%s1332] ss:$2 sm:$0xff]
      %v1334 = vpack.c.bf16 %v1321, %v1319
      %v1335 = vpack.c.bf16 %v1325, %v1323
      %v1336 = vpack.c.bf16 %v1329, %v1327
      %v1337 = vpack.c.bf16 %v1333, %v1331
      %v1338 = vld [vmem:[%s2 + $0x10] sm:$0xf]
      %v1340 = vsel %vm442, %v1334, 0
      %v1343 = vsel %vm442, %v1335, 0
      %v1346 = vsel %vm442, %v1336, 0
      %v1349 = vsel %vm442, %v1337, 0
      %v1352 = vsel %vm951, %v1338, 0
      %1354 = vmatprep.subr.bf16.mxu0 0
      %1355 = vmatpush1.bf16.msra.mxu0 0
      %1356 = vmatprep.subr.bf16.mxu0 0
      %1357 = vmatpush1.bf16.msra.mxu0 0
      %1358 = vmatprep.subr.bf16.mxu0 0
      %1359 = vmatpush1.bf16.msra.mxu0 0
      %1360 = vmatprep.subr.bf16.mxu0 0
      %1361 = vmatpush1.bf16.msra.mxu0 0
      %1362 = vmatprep.subr.bf16.mxu0 0
      %1363 = vmatpush1.bf16.msra.mxu0 0
      %1364 = vmatprep.subr.bf16.mxu0 0
      %1365 = vmatpush1.bf16.msra.mxu0 0
      %1366 = vmatprep.subr.bf16.mxu0 0
      %1367 = vmatpush1.bf16.msra.mxu0 0
      %1368 = vmatprep.subr.bf16.mxu0 0
      %1369 = vmatpush1.bf16.msra.mxu0 %v1352
      %1370 = vmatprep.subr.bf16.mxu0 0
      %1371 = vmatpush2.bf16.msra.mxu0 0
      %1372 = vmatprep.subr.bf16.mxu0 0
      %1373 = vmatpush2.bf16.msra.mxu0 0
      %1374 = vmatprep.subr.bf16.mxu0 0
      %1375 = vmatpush2.bf16.msra.mxu0 0
      %1376 = vmatprep.subr.bf16.mxu0 0
      %1377 = vmatpush2.bf16.msra.mxu0 0
      %1378 = vmatprep.subr.bf16.mxu0 0
      %1379 = vmatpush2.bf16.msra.mxu0 0
      %1380 = vmatprep.subr.bf16.mxu0 0
      %1381 = vmatpush2.bf16.msra.mxu0 0
      %1382 = vmatprep.subr.bf16.mxu0 0
      %1383 = vmatpush2.bf16.msra.mxu0 0
      %1384 = vmatprep.subr.bf16.mxu0 0
      %1385 = vmatpush2.bf16.msra.mxu0 0
      %1386 = vmatprep.mubr.bf16.mxu0 0
      %1387 = vmatmul.mubr.bf16.gmra.mxu0 %v1340
      %v1388 = vpop.f32.mrf.mxu0
      %v1389 = vadd.f32 0.0, %v1388
      %v1390 = vpop.f32.mrf.mxu0
      %v1391 = vpop.f32.mrf.mxu0
      %v1392 = vadd.f32 0.0, %v1391
      %v1393 = vpop.f32.mrf.mxu0
      %1394 = vmatprep.mubr.bf16.mxu0 0
      %1395 = vmatmul.mubr.bf16.gmra.mxu0 %v1343
      %v1396 = vpop.f32.mrf.mxu0
      %v1397 = vadd.f32 0.0, %v1396
      %v1398 = vpop.f32.mrf.mxu0
      %v1399 = vpop.f32.mrf.mxu0
      %v1400 = vadd.f32 0.0, %v1399
      %v1401 = vpop.f32.mrf.mxu0
      %1402 = vmatprep.mubr.bf16.mxu0 0
      %1403 = vmatmul.mubr.bf16.gmra.mxu0 %v1346
      %v1404 = vpop.f32.mrf.mxu0
      %v1405 = vadd.f32 0.0, %v1404
      %v1406 = vpop.f32.mrf.mxu0
      %v1407 = vpop.f32.mrf.mxu0
      %v1408 = vadd.f32 0.0, %v1407
      %v1409 = vpop.f32.mrf.mxu0
      %1410 = vmatprep.mubr.bf16.mxu0 0
      %1411 = vmatmul.mubr.bf16.gmra.mxu0 %v1349
      %v1412 = vpop.f32.mrf.mxu0
      %v1413 = vadd.f32 0.0, %v1412
      %v1414 = vpop.f32.mrf.mxu0
      %v1415 = vpop.f32.mrf.mxu0
      %v1416 = vadd.f32 0.0, %v1415
      %v1417 = vpop.f32.mrf.mxu0
      %1418 = vdwg.mxu0
      %v1419 = vadd.f32 %v1310, %v1389
      %v1420 = vadd.f32 %v1311, %v1392
      %v1421 = vadd.f32 %v1312, %v1397
      %v1422 = vadd.f32 %v1313, %v1400
      %v1423 = vadd.f32 %v1314, %v1405
      %v1424 = vadd.f32 %v1315, %v1408
      %v1425 = vadd.f32 %v1316, %v1413
      %v1426 = vadd.f32 %v1317, %v1416
      %s1427 = scalar_lea.vmem %s864, 17 [#allocation2]
      %v1428 = vld [vmem:[%s1427] ss:$2 sm:$0xff]
      %s1429 = scalar_lea.vmem %s864, 97 [#allocation2]
      %v1430 = vld [vmem:[%s1429] ss:$2 sm:$0xff]
      %s1431 = scalar_lea.vmem %s864, 177 [#allocation2]
      %v1432 = vld [vmem:[%s1431] ss:$2 sm:$0xff]
      %s1433 = scalar_lea.vmem %s864, 257 [#allocation2]
      %v1434 = vld [vmem:[%s1433] ss:$2 sm:$0xff]
      %s1435 = scalar_lea.vmem %s864, 337 [#allocation2]
      %v1436 = vld [vmem:[%s1435] ss:$2 sm:$0xff]
      %s1437 = scalar_lea.vmem %s864, 417 [#allocation2]
      %v1438 = vld [vmem:[%s1437] ss:$2 sm:$0xff]
      %s1439 = scalar_lea.vmem %s864, 497 [#allocation2]
      %v1440 = vld [vmem:[%s1439] ss:$2 sm:$0xff]
      %s1441 = scalar_lea.vmem %s864, 577 [#allocation2]
      %v1442 = vld [vmem:[%s1441] ss:$2 sm:$0xff]
      %v1443 = vpack.c.bf16 %v1430, %v1428
      %v1444 = vpack.c.bf16 %v1434, %v1432
      %v1445 = vpack.c.bf16 %v1438, %v1436
      %v1446 = vpack.c.bf16 %v1442, %v1440
      %v1447 = vld [vmem:[%s2 + $0x14] sm:$0xf]
      %v1449 = vsel %vm442, %v1443, 0
      %v1452 = vsel %vm442, %v1444, 0
      %v1455 = vsel %vm442, %v1445, 0
      %v1458 = vsel %vm442, %v1446, 0
      %v1461 = vsel %vm951, %v1447, 0
      %1463 = vmatprep.subr.bf16.mxu0 0
      %1464 = vmatpush1.bf16.msra.mxu0 0
      %1465 = vmatprep.subr.bf16.mxu0 0
      %1466 = vmatpush1.bf16.msra.mxu0 0
      %1467 = vmatprep.subr.bf16.mxu0 0
      %1468 = vmatpush1.bf16.msra.mxu0 0
      %1469 = vmatprep.subr.bf16.mxu0 0
      %1470 = vmatpush1.bf16.msra.mxu0 0
      %1471 = vmatprep.subr.bf16.mxu0 0
      %1472 = vmatpush1.bf16.msra.mxu0 0
      %1473 = vmatprep.subr.bf16.mxu0 0
      %1474 = vmatpush1.bf16.msra.mxu0 0
      %1475 = vmatprep.subr.bf16.mxu0 0
      %1476 = vmatpush1.bf16.msra.mxu0 0
      %1477 = vmatprep.subr.bf16.mxu0 0
      %1478 = vmatpush1.bf16.msra.mxu0 %v1461
      %1479 = vmatprep.subr.bf16.mxu0 0
      %1480 = vmatpush2.bf16.msra.mxu0 0
      %1481 = vmatprep.subr.bf16.mxu0 0
      %1482 = vmatpush2.bf16.msra.mxu0 0
      %1483 = vmatprep.subr.bf16.mxu0 0
      %1484 = vmatpush2.bf16.msra.mxu0 0
      %1485 = vmatprep.subr.bf16.mxu0 0
      %1486 = vmatpush2.bf16.msra.mxu0 0
      %1487 = vmatprep.subr.bf16.mxu0 0
      %1488 = vmatpush2.bf16.msra.mxu0 0
      %1489 = vmatprep.subr.bf16.mxu0 0
      %1490 = vmatpush2.bf16.msra.mxu0 0
      %1491 = vmatprep.subr.bf16.mxu0 0
      %1492 = vmatpush2.bf16.msra.mxu0 0
      %1493 = vmatprep.subr.bf16.mxu0 0
      %1494 = vmatpush2.bf16.msra.mxu0 0
      %1495 = vmatprep.mubr.bf16.mxu0 0
      %1496 = vmatmul.mubr.bf16.gmra.mxu0 %v1449
      %v1497 = vpop.f32.mrf.mxu0
      %v1498 = vadd.f32 0.0, %v1497
      %v1499 = vpop.f32.mrf.mxu0
      %v1500 = vpop.f32.mrf.mxu0
      %v1501 = vadd.f32 0.0, %v1500
      %v1502 = vpop.f32.mrf.mxu0
      %1503 = vmatprep.mubr.bf16.mxu0 0
      %1504 = vmatmul.mubr.bf16.gmra.mxu0 %v1452
      %v1505 = vpop.f32.mrf.mxu0
      %v1506 = vadd.f32 0.0, %v1505
      %v1507 = vpop.f32.mrf.mxu0
      %v1508 = vpop.f32.mrf.mxu0
      %v1509 = vadd.f32 0.0, %v1508
      %v1510 = vpop.f32.mrf.mxu0
      %1511 = vmatprep.mubr.bf16.mxu0 0
      %1512 = vmatmul.mubr.bf16.gmra.mxu0 %v1455
      %v1513 = vpop.f32.mrf.mxu0
      %v1514 = vadd.f32 0.0, %v1513
      %v1515 = vpop.f32.mrf.mxu0
      %v1516 = vpop.f32.mrf.mxu0
      %v1517 = vadd.f32 0.0, %v1516
      %v1518 = vpop.f32.mrf.mxu0
      %1519 = vmatprep.mubr.bf16.mxu0 0
      %1520 = vmatmul.mubr.bf16.gmra.mxu0 %v1458
      %v1521 = vpop.f32.mrf.mxu0
      %v1522 = vadd.f32 0.0, %v1521
      %v1523 = vpop.f32.mrf.mxu0
      %v1524 = vpop.f32.mrf.mxu0
      %v1525 = vadd.f32 0.0, %v1524
      %v1526 = vpop.f32.mrf.mxu0
      %1527 = vdwg.mxu0
      %v1528 = vadd.f32 %v1419, %v1498
      %v1529 = vadd.f32 %v1420, %v1501
      %v1530 = vadd.f32 %v1421, %v1506
      %v1531 = vadd.f32 %v1422, %v1509
      %v1532 = vadd.f32 %v1423, %v1514
      %v1533 = vadd.f32 %v1424, %v1517
      %v1534 = vadd.f32 %v1425, %v1522
      %v1535 = vadd.f32 %v1426, %v1525
      %s1536 = scalar_lea.vmem [#allocation2], 80
      %s1537 = scalar_lea.vmem %s1536, 15 [#allocation2]
      %v1538 = vld [vmem:[%s1537] ss:$2 sm:$0xff]
      %s1539 = scalar_lea.vmem %s1536, 95 [#allocation2]
      %v1540 = vld [vmem:[%s1539] ss:$2 sm:$0xff]
      %s1541 = scalar_lea.vmem %s1536, 175 [#allocation2]
      %v1542 = vld [vmem:[%s1541] ss:$2 sm:$0xff]
      %s1543 = scalar_lea.vmem %s1536, 255 [#allocation2]
      %v1544 = vld [vmem:[%s1543] ss:$2 sm:$0xff]
      %s1545 = scalar_lea.vmem %s1536, 335 [#allocation2]
      %v1546 = vld [vmem:[%s1545] ss:$2 sm:$0xff]
      %s1547 = scalar_lea.vmem %s1536, 415 [#allocation2]
      %v1548 = vld [vmem:[%s1547] ss:$2 sm:$0xff]
      %s1549 = scalar_lea.vmem %s1536, 495 [#allocation2]
      %v1550 = vld [vmem:[%s1549] ss:$2 sm:$0xff]
      %s1551 = scalar_lea.vmem %s1536, 575 [#allocation2]
      %v1552 = vld [vmem:[%s1551] ss:$2 sm:$0xff]
      %v1553 = vpack.c.bf16 %v1540, %v1538
      %v1554 = vpack.c.bf16 %v1544, %v1542
      %v1555 = vpack.c.bf16 %v1548, %v1546
      %v1556 = vpack.c.bf16 %v1552, %v1550
      %v1557 = vld [vmem:[%s2 + $0x18] sm:$0xf]
      %v1559 = vsel %vm442, %v1553, 0
      %v1562 = vsel %vm442, %v1554, 0
      %v1565 = vsel %vm442, %v1555, 0
      %v1568 = vsel %vm442, %v1556, 0
      %v1571 = vsel %vm951, %v1557, 0
      %1573 = vmatprep.subr.bf16.mxu0 0
      %1574 = vmatpush1.bf16.msra.mxu0 0
      %1575 = vmatprep.subr.bf16.mxu0 0
      %1576 = vmatpush1.bf16.msra.mxu0 0
      %1577 = vmatprep.subr.bf16.mxu0 0
      %1578 = vmatpush1.bf16.msra.mxu0 0
      %1579 = vmatprep.subr.bf16.mxu0 0
      %1580 = vmatpush1.bf16.msra.mxu0 0
      %1581 = vmatprep.subr.bf16.mxu0 0
      %1582 = vmatpush1.bf16.msra.mxu0 0
      %1583 = vmatprep.subr.bf16.mxu0 0
      %1584 = vmatpush1.bf16.msra.mxu0 0
      %1585 = vmatprep.subr.bf16.mxu0 0
      %1586 = vmatpush1.bf16.msra.mxu0 0
      %1587 = vmatprep.subr.bf16.mxu0 0
      %1588 = vmatpush1.bf16.msra.mxu0 %v1571
      %1589 = vmatprep.subr.bf16.mxu0 0
      %1590 = vmatpush2.bf16.msra.mxu0 0
      %1591 = vmatprep.subr.bf16.mxu0 0
      %1592 = vmatpush2.bf16.msra.mxu0 0
      %1593 = vmatprep.subr.bf16.mxu0 0
      %1594 = vmatpush2.bf16.msra.mxu0 0
      %1595 = vmatprep.subr.bf16.mxu0 0
      %1596 = vmatpush2.bf16.msra.mxu0 0
      %1597 = vmatprep.subr.bf16.mxu0 0
      %1598 = vmatpush2.bf16.msra.mxu0 0
      %1599 = vmatprep.subr.bf16.mxu0 0
      %1600 = vmatpush2.bf16.msra.mxu0 0
      %1601 = vmatprep.subr.bf16.mxu0 0
      %1602 = vmatpush2.bf16.msra.mxu0 0
      %1603 = vmatprep.subr.bf16.mxu0 0
      %1604 = vmatpush2.bf16.msra.mxu0 0
      %1605 = vmatprep.mubr.bf16.mxu0 0
      %1606 = vmatmul.mubr.bf16.gmra.mxu0 %v1559
      %v1607 = vpop.f32.mrf.mxu0
      %v1608 = vadd.f32 0.0, %v1607
      %v1609 = vpop.f32.mrf.mxu0
      %v1610 = vpop.f32.mrf.mxu0
      %v1611 = vadd.f32 0.0, %v1610
      %v1612 = vpop.f32.mrf.mxu0
      %1613 = vmatprep.mubr.bf16.mxu0 0
      %1614 = vmatmul.mubr.bf16.gmra.mxu0 %v1562
      %v1615 = vpop.f32.mrf.mxu0
      %v1616 = vadd.f32 0.0, %v1615
      %v1617 = vpop.f32.mrf.mxu0
      %v1618 = vpop.f32.mrf.mxu0
      %v1619 = vadd.f32 0.0, %v1618
      %v1620 = vpop.f32.mrf.mxu0
      %1621 = vmatprep.mubr.bf16.mxu0 0
      %1622 = vmatmul.mubr.bf16.gmra.mxu0 %v1565
      %v1623 = vpop.f32.mrf.mxu0
      %v1624 = vadd.f32 0.0, %v1623
      %v1625 = vpop.f32.mrf.mxu0
      %v1626 = vpop.f32.mrf.mxu0
      %v1627 = vadd.f32 0.0, %v1626
      %v1628 = vpop.f32.mrf.mxu0
      %1629 = vmatprep.mubr.bf16.mxu0 0
      %1630 = vmatmul.mubr.bf16.gmra.mxu0 %v1568
      %v1631 = vpop.f32.mrf.mxu0
      %v1632 = vadd.f32 0.0, %v1631
      %v1633 = vpop.f32.mrf.mxu0
      %v1634 = vpop.f32.mrf.mxu0
      %v1635 = vadd.f32 0.0, %v1634
      %v1636 = vpop.f32.mrf.mxu0
      %1637 = vdwg.mxu0
      %v1638 = vadd.f32 %v1528, %v1608
      %v1639 = vadd.f32 %v1529, %v1611
      %v1640 = vadd.f32 %v1530, %v1616
      %v1641 = vadd.f32 %v1531, %v1619
      %v1642 = vadd.f32 %v1532, %v1624
      %v1643 = vadd.f32 %v1533, %v1627
      %v1644 = vadd.f32 %v1534, %v1632
      %v1645 = vadd.f32 %v1535, %v1635
      %s1646 = scalar_lea.vmem %s1536, 16 [#allocation2]
      %v1647 = vld [vmem:[%s1646] ss:$2 sm:$0xff]
      %s1648 = scalar_lea.vmem %s1536, 96 [#allocation2]
      %v1649 = vld [vmem:[%s1648] ss:$2 sm:$0xff]
      %s1650 = scalar_lea.vmem %s1536, 176 [#allocation2]
      %v1651 = vld [vmem:[%s1650] ss:$2 sm:$0xff]
      %s1652 = scalar_lea.vmem %s1536, 256 [#allocation2]
      %v1653 = vld [vmem:[%s1652] ss:$2 sm:$0xff]
      %s1654 = scalar_lea.vmem %s1536, 336 [#allocation2]
      %v1655 = vld [vmem:[%s1654] ss:$2 sm:$0xff]
      %s1656 = scalar_lea.vmem %s1536, 416 [#allocation2]
      %v1657 = vld [vmem:[%s1656] ss:$2 sm:$0xff]
      %s1658 = scalar_lea.vmem %s1536, 496 [#allocation2]
      %v1659 = vld [vmem:[%s1658] ss:$2 sm:$0xff]
      %s1660 = scalar_lea.vmem %s1536, 576 [#allocation2]
      %v1661 = vld [vmem:[%s1660] ss:$2 sm:$0xff]
      %v1662 = vpack.c.bf16 %v1649, %v1647
      %v1663 = vpack.c.bf16 %v1653, %v1651
      %v1664 = vpack.c.bf16 %v1657, %v1655
      %v1665 = vpack.c.bf16 %v1661, %v1659
      %v1666 = vld [vmem:[%s2 + $0x1c] sm:$0xf]
      %v1668 = vsel %vm442, %v1662, 0
      %v1671 = vsel %vm442, %v1663, 0
      %v1674 = vsel %vm442, %v1664, 0
      %v1677 = vsel %vm442, %v1665, 0
      %v1680 = vsel %vm951, %v1666, 0
      %1682 = vmatprep.subr.bf16.mxu0 0
      %1683 = vmatpush1.bf16.msra.mxu0 0
      %1684 = vmatprep.subr.bf16.mxu0 0
      %1685 = vmatpush1.bf16.msra.mxu0 0
      %1686 = vmatprep.subr.bf16.mxu0 0
      %1687 = vmatpush1.bf16.msra.mxu0 0
      %1688 = vmatprep.subr.bf16.mxu0 0
      %1689 = vmatpush1.bf16.msra.mxu0 0
      %1690 = vmatprep.subr.bf16.mxu0 0
      %1691 = vmatpush1.bf16.msra.mxu0 0
      %1692 = vmatprep.subr.bf16.mxu0 0
      %1693 = vmatpush1.bf16.msra.mxu0 0
      %1694 = vmatprep.subr.bf16.mxu0 0
      %1695 = vmatpush1.bf16.msra.mxu0 0
      %1696 = vmatprep.subr.bf16.mxu0 0
      %1697 = vmatpush1.bf16.msra.mxu0 %v1680
      %1698 = vmatprep.subr.bf16.mxu0 0
      %1699 = vmatpush2.bf16.msra.mxu0 0
      %1700 = vmatprep.subr.bf16.mxu0 0
      %1701 = vmatpush2.bf16.msra.mxu0 0
      %1702 = vmatprep.subr.bf16.mxu0 0
      %1703 = vmatpush2.bf16.msra.mxu0 0
      %1704 = vmatprep.subr.bf16.mxu0 0
      %1705 = vmatpush2.bf16.msra.mxu0 0
      %1706 = vmatprep.subr.bf16.mxu0 0
      %1707 = vmatpush2.bf16.msra.mxu0 0
      %1708 = vmatprep.subr.bf16.mxu0 0
      %1709 = vmatpush2.bf16.msra.mxu0 0
      %1710 = vmatprep.subr.bf16.mxu0 0
      %1711 = vmatpush2.bf16.msra.mxu0 0
      %1712 = vmatprep.subr.bf16.mxu0 0
      %1713 = vmatpush2.bf16.msra.mxu0 0
      %1714 = vmatprep.mubr.bf16.mxu0 0
      %1715 = vmatmul.mubr.bf16.gmra.mxu0 %v1668
      %v1716 = vpop.f32.mrf.mxu0
      %v1717 = vadd.f32 0.0, %v1716
      %v1718 = vpop.f32.mrf.mxu0
      %v1719 = vpop.f32.mrf.mxu0
      %v1720 = vadd.f32 0.0, %v1719
      %v1721 = vpop.f32.mrf.mxu0
      %1722 = vmatprep.mubr.bf16.mxu0 0
      %1723 = vmatmul.mubr.bf16.gmra.mxu0 %v1671
      %v1724 = vpop.f32.mrf.mxu0
      %v1725 = vadd.f32 0.0, %v1724
      %v1726 = vpop.f32.mrf.mxu0
      %v1727 = vpop.f32.mrf.mxu0
      %v1728 = vadd.f32 0.0, %v1727
      %v1729 = vpop.f32.mrf.mxu0
      %1730 = vmatprep.mubr.bf16.mxu0 0
      %1731 = vmatmul.mubr.bf16.gmra.mxu0 %v1674
      %v1732 = vpop.f32.mrf.mxu0
      %v1733 = vadd.f32 0.0, %v1732
      %v1734 = vpop.f32.mrf.mxu0
      %v1735 = vpop.f32.mrf.mxu0
      %v1736 = vadd.f32 0.0, %v1735
      %v1737 = vpop.f32.mrf.mxu0
      %1738 = vmatprep.mubr.bf16.mxu0 0
      %1739 = vmatmul.mubr.bf16.gmra.mxu0 %v1677
      %v1740 = vpop.f32.mrf.mxu0
      %v1741 = vadd.f32 0.0, %v1740
      %v1742 = vpop.f32.mrf.mxu0
      %v1743 = vpop.f32.mrf.mxu0
      %v1744 = vadd.f32 0.0, %v1743
      %v1745 = vpop.f32.mrf.mxu0
      %1746 = vdwg.mxu0
      %v1747 = vadd.f32 %v1638, %v1717
      %v1748 = vadd.f32 %v1639, %v1720
      %v1749 = vadd.f32 %v1640, %v1725
      %v1750 = vadd.f32 %v1641, %v1728
      %v1751 = vadd.f32 %v1642, %v1733
      %v1752 = vadd.f32 %v1643, %v1736
      %v1753 = vadd.f32 %v1644, %v1741
      %v1754 = vadd.f32 %v1645, %v1744
      %s1755 = scalar_lea.vmem %s1536, 17 [#allocation2]
      %v1756 = vld [vmem:[%s1755] ss:$2 sm:$0xff]
      %s1757 = scalar_lea.vmem %s1536, 97 [#allocation2]
      %v1758 = vld [vmem:[%s1757] ss:$2 sm:$0xff]
      %s1759 = scalar_lea.vmem %s1536, 177 [#allocation2]
      %v1760 = vld [vmem:[%s1759] ss:$2 sm:$0xff]
      %s1761 = scalar_lea.vmem %s1536, 257 [#allocation2]
      %v1762 = vld [vmem:[%s1761] ss:$2 sm:$0xff]
      %s1763 = scalar_lea.vmem %s1536, 337 [#allocation2]
      %v1764 = vld [vmem:[%s1763] ss:$2 sm:$0xff]
      %s1765 = scalar_lea.vmem %s1536, 417 [#allocation2]
      %v1766 = vld [vmem:[%s1765] ss:$2 sm:$0xff]
      %s1767 = scalar_lea.vmem %s1536, 497 [#allocation2]
      %v1768 = vld [vmem:[%s1767] ss:$2 sm:$0xff]
      %s1769 = scalar_lea.vmem %s1536, 577 [#allocation2]
      %v1770 = vld [vmem:[%s1769] ss:$2 sm:$0xff]
      %v1771 = vpack.c.bf16 %v1758, %v1756
      %v1772 = vpack.c.bf16 %v1762, %v1760
      %v1773 = vpack.c.bf16 %v1766, %v1764
      %v1774 = vpack.c.bf16 %v1770, %v1768
      %v1775 = vld [vmem:[%s2 + $0x20] sm:$0xf]
      %v1777 = vsel %vm442, %v1771, 0
      %v1780 = vsel %vm442, %v1772, 0
      %v1783 = vsel %vm442, %v1773, 0
      %v1786 = vsel %vm442, %v1774, 0
      %v1789 = vsel %vm951, %v1775, 0
      %1791 = vmatprep.subr.bf16.mxu0 0
      %1792 = vmatpush1.bf16.msra.mxu0 0
      %1793 = vmatprep.subr.bf16.mxu0 0
      %1794 = vmatpush1.bf16.msra.mxu0 0
      %1795 = vmatprep.subr.bf16.mxu0 0
      %1796 = vmatpush1.bf16.msra.mxu0 0
      %1797 = vmatprep.subr.bf16.mxu0 0
      %1798 = vmatpush1.bf16.msra.mxu0 0
      %1799 = vmatprep.subr.bf16.mxu0 0
      %1800 = vmatpush1.bf16.msra.mxu0 0
      %1801 = vmatprep.subr.bf16.mxu0 0
      %1802 = vmatpush1.bf16.msra.mxu0 0
      %1803 = vmatprep.subr.bf16.mxu0 0
      %1804 = vmatpush1.bf16.msra.mxu0 0
      %1805 = vmatprep.subr.bf16.mxu0 0
      %1806 = vmatpush1.bf16.msra.mxu0 %v1789
      %1807 = vmatprep.subr.bf16.mxu0 0
      %1808 = vmatpush2.bf16.msra.mxu0 0
      %1809 = vmatprep.subr.bf16.mxu0 0
      %1810 = vmatpush2.bf16.msra.mxu0 0
      %1811 = vmatprep.subr.bf16.mxu0 0
      %1812 = vmatpush2.bf16.msra.mxu0 0
      %1813 = vmatprep.subr.bf16.mxu0 0
      %1814 = vmatpush2.bf16.msra.mxu0 0
      %1815 = vmatprep.subr.bf16.mxu0 0
      %1816 = vmatpush2.bf16.msra.mxu0 0
      %1817 = vmatprep.subr.bf16.mxu0 0
      %1818 = vmatpush2.bf16.msra.mxu0 0
      %1819 = vmatprep.subr.bf16.mxu0 0
      %1820 = vmatpush2.bf16.msra.mxu0 0
      %1821 = vmatprep.subr.bf16.mxu0 0
      %1822 = vmatpush2.bf16.msra.mxu0 0
      %1823 = vmatprep.mubr.bf16.mxu0 0
      %1824 = vmatmul.mubr.bf16.gmra.mxu0 %v1777
      %v1825 = vpop.f32.mrf.mxu0
      %v1826 = vadd.f32 0.0, %v1825
      %v1827 = vpop.f32.mrf.mxu0
      %v1828 = vpop.f32.mrf.mxu0
      %v1829 = vadd.f32 0.0, %v1828
      %v1830 = vpop.f32.mrf.mxu0
      %1831 = vmatprep.mubr.bf16.mxu0 0
      %1832 = vmatmul.mubr.bf16.gmra.mxu0 %v1780
      %v1833 = vpop.f32.mrf.mxu0
      %v1834 = vadd.f32 0.0, %v1833
      %v1835 = vpop.f32.mrf.mxu0
      %v1836 = vpop.f32.mrf.mxu0
      %v1837 = vadd.f32 0.0, %v1836
      %v1838 = vpop.f32.mrf.mxu0
      %1839 = vmatprep.mubr.bf16.mxu0 0
      %1840 = vmatmul.mubr.bf16.gmra.mxu0 %v1783
      %v1841 = vpop.f32.mrf.mxu0
      %v1842 = vadd.f32 0.0, %v1841
      %v1843 = vpop.f32.mrf.mxu0
      %v1844 = vpop.f32.mrf.mxu0
      %v1845 = vadd.f32 0.0, %v1844
      %v1846 = vpop.f32.mrf.mxu0
      %1847 = vmatprep.mubr.bf16.mxu0 0
      %1848 = vmatmul.mubr.bf16.gmra.mxu0 %v1786
      %v1849 = vpop.f32.mrf.mxu0
      %v1850 = vadd.f32 0.0, %v1849
      %v1851 = vpop.f32.mrf.mxu0
      %v1852 = vpop.f32.mrf.mxu0
      %v1853 = vadd.f32 0.0, %v1852
      %v1854 = vpop.f32.mrf.mxu0
      %1855 = vdwg.mxu0
      %v1856 = vadd.f32 %v1747, %v1826
      %v1857 = vadd.f32 %v1748, %v1829
      %v1858 = vadd.f32 %v1749, %v1834
      %v1859 = vadd.f32 %v1750, %v1837
      %v1860 = vadd.f32 %v1751, %v1842
      %v1861 = vadd.f32 %v1752, %v1845
      %v1862 = vadd.f32 %v1753, %v1850
      %v1863 = vadd.f32 %v1754, %v1853
      %v1864 = vld [vmem:[%s7] sm:$0x1]
      %v1866 = vlaneseq
      %v1867 = vshrl.u32 %v1866, 7
      %v1868 = vsub.s32 0, %v1867
      %v1869 = vrot.slane %v1864, %v1868
      %v1871 = vmul.f32 %v1856, %v1869
      %v1872 = vmul.f32 %v1857, %v1869
      %v1873 = vmul.f32 %v1858, %v1869
      %v1874 = vmul.f32 %v1859, %v1869
      %v1875 = vmul.f32 %v1860, %v1869
      %v1876 = vmul.f32 %v1861, %v1869
      %v1877 = vmul.f32 %v1862, %v1869
      %v1878 = vmul.f32 %v1863, %v1869
      %v1879 = vld [vmem:[%s8] sm:$0x1]
      %v1881 = vlaneseq
      %v1882 = vshrl.u32 %v1881, 7
      %v1883 = vsub.s32 0, %v1882
      %v1884 = vrot.slane %v1879, %v1883
      %v1886 = vadd.f32 %v1871, %v1884
      %v1887 = vadd.f32 %v1872, %v1884
      %v1888 = vadd.f32 %v1873, %v1884
      %v1889 = vadd.f32 %v1874, %v1884
      %v1890 = vadd.f32 %v1875, %v1884
      %v1891 = vadd.f32 %v1876, %v1884
      %v1892 = vadd.f32 %v1877, %v1884
      %v1893 = vadd.f32 %v1878, %v1884
      %v1894 = vmax.f32 %v1886, 0.0
      %v1895 = vmax.f32 %v1887, 0.0
      %v1896 = vmax.f32 %v1888, 0.0
      %v1897 = vmax.f32 %v1889, 0.0
      %v1898 = vmax.f32 %v1890, 0.0
      %v1899 = vmax.f32 %v1891, 0.0
      %v1900 = vmax.f32 %v1892, 0.0
      %v1901 = vmax.f32 %v1893, 0.0
      %v1902 = vpack.c.bf16 %v1895, %v1894
      %v1903 = vpack.c.bf16 %v1897, %v1896
      %v1904 = vpack.c.bf16 %v1899, %v1898
      %v1905 = vpack.c.bf16 %v1901, %v1900
      %v1906 = vld [vmem:[%s3] sm:$0xf]
      %v1908 = vsel %vm442, %v1902, 0
      %v1911 = vsel %vm442, %v1903, 0
      %v1914 = vsel %vm442, %v1904, 0
      %v1917 = vsel %vm442, %v1905, 0
      %v1920 = vsel %vm951, %v1906, 0
      %1922 = vmatprep.subr.bf16.mxu0 0
      %1923 = vmatpush1.bf16.msra.mxu0 0
      %1924 = vmatprep.subr.bf16.mxu0 0
      %1925 = vmatpush1.bf16.msra.mxu0 0
      %1926 = vmatprep.subr.bf16.mxu0 0
      %1927 = vmatpush1.bf16.msra.mxu0 0
      %1928 = vmatprep.subr.bf16.mxu0 0
      %1929 = vmatpush1.bf16.msra.mxu0 0
      %1930 = vmatprep.subr.bf16.mxu0 0
      %1931 = vmatpush1.bf16.msra.mxu0 0
      %1932 = vmatprep.subr.bf16.mxu0 0
      %1933 = vmatpush1.bf16.msra.mxu0 0
      %1934 = vmatprep.subr.bf16.mxu0 0
      %1935 = vmatpush1.bf16.msra.mxu0 0
      %1936 = vmatprep.subr.bf16.mxu0 0
      %1937 = vmatpush1.bf16.msra.mxu0 %v1920
      %1938 = vmatprep.subr.bf16.mxu0 0
      %1939 = vmatpush2.bf16.msra.mxu0 0
      %1940 = vmatprep.subr.bf16.mxu0 0
      %1941 = vmatpush2.bf16.msra.mxu0 0
      %1942 = vmatprep.subr.bf16.mxu0 0
      %1943 = vmatpush2.bf16.msra.mxu0 0
      %1944 = vmatprep.subr.bf16.mxu0 0
      %1945 = vmatpush2.bf16.msra.mxu0 0
      %1946 = vmatprep.subr.bf16.mxu0 0
      %1947 = vmatpush2.bf16.msra.mxu0 0
      %1948 = vmatprep.subr.bf16.mxu0 0
      %1949 = vmatpush2.bf16.msra.mxu0 0
      %1950 = vmatprep.subr.bf16.mxu0 0
      %1951 = vmatpush2.bf16.msra.mxu0 0
      %1952 = vmatprep.subr.bf16.mxu0 0
      %1953 = vmatpush2.bf16.msra.mxu0 0
      %1954 = vmatprep.mubr.bf16.mxu0 0
      %1955 = vmatmul.mubr.bf16.gmra.mxu0 %v1908
      %v1956 = vpop.f32.mrf.mxu0
      %v1957 = vadd.f32 0.0, %v1956
      %v1958 = vpop.f32.mrf.mxu0
      %v1959 = vpop.f32.mrf.mxu0
      %v1960 = vadd.f32 0.0, %v1959
      %v1961 = vpop.f32.mrf.mxu0
      %1962 = vmatprep.mubr.bf16.mxu0 0
      %1963 = vmatmul.mubr.bf16.gmra.mxu0 %v1911
      %v1964 = vpop.f32.mrf.mxu0
      %v1965 = vadd.f32 0.0, %v1964
      %v1966 = vpop.f32.mrf.mxu0
      %v1967 = vpop.f32.mrf.mxu0
      %v1968 = vadd.f32 0.0, %v1967
      %v1969 = vpop.f32.mrf.mxu0
      %1970 = vmatprep.mubr.bf16.mxu0 0
      %1971 = vmatmul.mubr.bf16.gmra.mxu0 %v1914
      %v1972 = vpop.f32.mrf.mxu0
      %v1973 = vadd.f32 0.0, %v1972
      %v1974 = vpop.f32.mrf.mxu0
      %v1975 = vpop.f32.mrf.mxu0
      %v1976 = vadd.f32 0.0, %v1975
      %v1977 = vpop.f32.mrf.mxu0
      %1978 = vmatprep.mubr.bf16.mxu0 0
      %1979 = vmatmul.mubr.bf16.gmra.mxu0 %v1917
      %v1980 = vpop.f32.mrf.mxu0
      %v1981 = vadd.f32 0.0, %v1980
      %v1982 = vpop.f32.mrf.mxu0
      %v1983 = vpop.f32.mrf.mxu0
      %v1984 = vadd.f32 0.0, %v1983
      %v1985 = vpop.f32.mrf.mxu0
      %1986 = vdwg.mxu0
      %v1987 = vld [vmem:[%s9] sm:$0x1]
      %v1989 = vlaneseq
      %v1990 = vshrl.u32 %v1989, 7
      %v1991 = vsub.s32 0, %v1990
      %v1992 = vrot.slane %v1987, %v1991
      %v1994 = vmul.f32 %v1957, %v1992
      %v1995 = vmul.f32 %v1960, %v1992
      %v1996 = vmul.f32 %v1965, %v1992
      %v1997 = vmul.f32 %v1968, %v1992
      %v1998 = vmul.f32 %v1973, %v1992
      %v1999 = vmul.f32 %v1976, %v1992
      %v2000 = vmul.f32 %v1981, %v1992
      %v2001 = vmul.f32 %v1984, %v1992
      %v2002 = vld [vmem:[%s10] sm:$0x1]
      %v2004 = vlaneseq
      %v2005 = vshrl.u32 %v2004, 7
      %v2006 = vsub.s32 0, %v2005
      %v2007 = vrot.slane %v2002, %v2006
      %v2009 = vadd.f32 %v1994, %v2007
      %v2010 = vadd.f32 %v1995, %v2007
      %v2011 = vadd.f32 %v1996, %v2007
      %v2012 = vadd.f32 %v1997, %v2007
      %v2013 = vadd.f32 %v1998, %v2007
      %v2014 = vadd.f32 %v1999, %v2007
      %v2015 = vadd.f32 %v2000, %v2007
      %v2016 = vadd.f32 %v2001, %v2007
      %v2017 = vld [vmem:[%s435] ss:$2 sm:$0xff]
      %s2018 = scalar_lea.vmem %s435, 32
      %v2019 = vld [vmem:[%s2018] ss:$2 sm:$0xff]
      %s2020 = scalar_lea.vmem %s435, 64
      %v2021 = vld [vmem:[%s2020] ss:$2 sm:$0xff]
      %s2022 = scalar_lea.vmem %s435, 96
      %v2023 = vld [vmem:[%s2022] ss:$2 sm:$0xff]
      %s2024 = scalar_lea.vmem %s435, 128
      %v2025 = vld [vmem:[%s2024] ss:$2 sm:$0xff]
      %s2026 = scalar_lea.vmem %s435, 160
      %v2027 = vld [vmem:[%s2026] ss:$2 sm:$0xff]
      %s2028 = scalar_lea.vmem %s435, 192
      %v2029 = vld [vmem:[%s2028] ss:$2 sm:$0xff]
      %s2030 = scalar_lea.vmem %s435, 224
      %v2031 = vld [vmem:[%s2030] ss:$2 sm:$0xff]
      %v2032 = vpack.c.bf16 %v2019, %v2017
      %v2033 = vpack.c.bf16 %v2023, %v2021
      %v2034 = vpack.c.bf16 %v2027, %v2025
      %v2035 = vpack.c.bf16 %v2031, %v2029
      %v2036 = vld [vmem:[%s4] sm:$0xf]
      %v2037 = vld [vmem:[%s4 + $0x4] sm:$0xf]
      %v2040 = vunpack.c.l.b16 %v2036
      %v2041 = vunpack.c.l.b16 %v2037
      %v2042 = vpack.c.b16 %v2041, %v2040
      %v2045 = vsel %vm544, %v2032, 0
      %v2048 = vsel %vm544, %v2033, 0
      %v2051 = vsel %vm544, %v2034, 0
      %v2054 = vsel %vm544, %v2035, 0
      %2056 = vmatprep.subr.bf16.mxu0 0
      %2057 = vmatpush1.bf16.msra.mxu0 0
      %2058 = vmatprep.subr.bf16.mxu0 0
      %2059 = vmatpush1.bf16.msra.mxu0 0
      %2060 = vmatprep.subr.bf16.mxu0 0
      %2061 = vmatpush1.bf16.msra.mxu0 0
      %2062 = vmatprep.subr.bf16.mxu0 0
      %2063 = vmatpush1.bf16.msra.mxu0 0
      %2064 = vmatprep.subr.bf16.mxu0 0
      %2065 = vmatpush1.bf16.msra.mxu0 0
      %2066 = vmatprep.subr.bf16.mxu0 0
      %2067 = vmatpush1.bf16.msra.mxu0 0
      %2068 = vmatprep.subr.bf16.mxu0 0
      %2069 = vmatpush1.bf16.msra.mxu0 0
      %2070 = vmatprep.subr.bf16.mxu0 0
      %2071 = vmatpush1.bf16.msra.mxu0 %v2042
      %2072 = vmatprep.subr.bf16.mxu0 0
      %2073 = vmatpush2.bf16.msra.mxu0 0
      %2074 = vmatprep.subr.bf16.mxu0 0
      %2075 = vmatpush2.bf16.msra.mxu0 0
      %2076 = vmatprep.subr.bf16.mxu0 0
      %2077 = vmatpush2.bf16.msra.mxu0 0
      %2078 = vmatprep.subr.bf16.mxu0 0
      %2079 = vmatpush2.bf16.msra.mxu0 0
      %2080 = vmatprep.subr.bf16.mxu0 0
      %2081 = vmatpush2.bf16.msra.mxu0 0
      %2082 = vmatprep.subr.bf16.mxu0 0
      %2083 = vmatpush2.bf16.msra.mxu0 0
      %2084 = vmatprep.subr.bf16.mxu0 0
      %2085 = vmatpush2.bf16.msra.mxu0 0
      %2086 = vmatprep.subr.bf16.mxu0 0
      %2087 = vmatpush2.bf16.msra.mxu0 0
      %2088 = vmatprep.mubr.bf16.mxu0 0
      %2089 = vmatmul.mubr.bf16.gmra.mxu0 %v2045
      %v2090 = vpop.f32.mrf.mxu0
      %v2091 = vadd.f32 0.0, %v2090
      %v2092 = vpop.f32.mrf.mxu0
      %v2093 = vpop.f32.mrf.mxu0
      %v2094 = vadd.f32 0.0, %v2093
      %v2095 = vpop.f32.mrf.mxu0
      %2096 = vmatprep.mubr.bf16.mxu0 0
      %2097 = vmatmul.mubr.bf16.gmra.mxu0 %v2048
      %v2098 = vpop.f32.mrf.mxu0
      %v2099 = vadd.f32 0.0, %v2098
      %v2100 = vpop.f32.mrf.mxu0
      %v2101 = vpop.f32.mrf.mxu0
      %v2102 = vadd.f32 0.0, %v2101
      %v2103 = vpop.f32.mrf.mxu0
      %2104 = vmatprep.mubr.bf16.mxu0 0
      %2105 = vmatmul.mubr.bf16.gmra.mxu0 %v2051
      %v2106 = vpop.f32.mrf.mxu0
      %v2107 = vadd.f32 0.0, %v2106
      %v2108 = vpop.f32.mrf.mxu0
      %v2109 = vpop.f32.mrf.mxu0
      %v2110 = vadd.f32 0.0, %v2109
      %v2111 = vpop.f32.mrf.mxu0
      %2112 = vmatprep.mubr.bf16.mxu0 0
      %2113 = vmatmul.mubr.bf16.gmra.mxu0 %v2054
      %v2114 = vpop.f32.mrf.mxu0
      %v2115 = vadd.f32 0.0, %v2114
      %v2116 = vpop.f32.mrf.mxu0
      %v2117 = vpop.f32.mrf.mxu0
      %v2118 = vadd.f32 0.0, %v2117
      %v2119 = vpop.f32.mrf.mxu0
      %2120 = vdwg.mxu0
      %v2121 = vld [vmem:[%s11] sm:$0x1]
      %v2123 = vlaneseq
      %v2124 = vshrl.u32 %v2123, 7
      %v2125 = vsub.s32 0, %v2124
      %v2126 = vrot.slane %v2121, %v2125
      %v2128 = vmul.f32 %v2091, %v2126
      %v2129 = vmul.f32 %v2094, %v2126
      %v2130 = vmul.f32 %v2099, %v2126
      %v2131 = vmul.f32 %v2102, %v2126
      %v2132 = vmul.f32 %v2107, %v2126
      %v2133 = vmul.f32 %v2110, %v2126
      %v2134 = vmul.f32 %v2115, %v2126
      %v2135 = vmul.f32 %v2118, %v2126
      %v2136 = vld [vmem:[%s12] sm:$0x1]
      %v2138 = vlaneseq
      %v2139 = vshrl.u32 %v2138, 7
      %v2140 = vsub.s32 0, %v2139
      %v2141 = vrot.slane %v2136, %v2140
      %v2143 = vadd.f32 %v2128, %v2141
      %v2144 = vadd.f32 %v2129, %v2141
      %v2145 = vadd.f32 %v2130, %v2141
      %v2146 = vadd.f32 %v2131, %v2141
      %v2147 = vadd.f32 %v2132, %v2141
      %v2148 = vadd.f32 %v2133, %v2141
      %v2149 = vadd.f32 %v2134, %v2141
      %v2150 = vadd.f32 %v2135, %v2141
      %v2151 = vadd.f32 %v2143, %v2009
      %v2152 = vadd.f32 %v2144, %v2010
      %v2153 = vadd.f32 %v2145, %v2011
      %v2154 = vadd.f32 %v2146, %v2012
      %v2155 = vadd.f32 %v2147, %v2013
      %v2156 = vadd.f32 %v2148, %v2014
      %v2157 = vadd.f32 %v2149, %v2015
      %v2158 = vadd.f32 %v2150, %v2016
      %v2159 = vmax.f32 %v2151, 0.0
      %v2160 = vmax.f32 %v2152, 0.0
      %v2161 = vmax.f32 %v2153, 0.0
      %v2162 = vmax.f32 %v2154, 0.0
      %v2163 = vmax.f32 %v2155, 0.0
      %v2164 = vmax.f32 %v2156, 0.0
      %v2165 = vmax.f32 %v2157, 0.0
      %v2166 = vmax.f32 %v2158, 0.0
      %v2167 = vpack.c.bf16 %v2159, %v2159
      %v2168 = vpack.c.bf16 %v2160, %v2160
      %v2169 = vpack.c.bf16 %v2161, %v2161
      %v2170 = vpack.c.bf16 %v2162, %v2162
      %v2171 = vpack.c.bf16 %v2163, %v2163
      %v2172 = vpack.c.bf16 %v2164, %v2164
      %v2173 = vpack.c.bf16 %v2165, %v2165
      %v2174 = vpack.c.bf16 %v2166, %v2166
      %vm2175 = vcmask 257024
      %2176 = vst.msk [vmem:[%s440] sm:$0xf] %vm2175, %v2167
      %2177 = vst.msk [vmem:[%s440 + $0x4] sm:$0xf] %vm2175, %v2168
      %2178 = vst.msk [vmem:[%s440 + $0x8] sm:$0xf] %vm2175, %v2169
      %2179 = vst.msk [vmem:[%s440 + $0xc] sm:$0xf] %vm2175, %v2170
      %2180 = vst.msk [vmem:[%s440 + $0x10] sm:$0xf] %vm2175, %v2171
      %2181 = vst.msk [vmem:[%s440 + $0x14] sm:$0xf] %vm2175, %v2172
      %2182 = vst.msk [vmem:[%s440 + $0x18] sm:$0xf] %vm2175, %v2173
      %2183 = vst.msk [vmem:[%s440 + $0x1c] sm:$0xf] %vm2175, %v2174
      %p2184 = scmp.lt.s32.totalorder %s24, 1
      %s2185 = scalar_select %p2184, %s24, 1
      %s2186 = smul.addr %s2185, 8
      %s2187 = smul.addr %s2186, 4
      %s2188 = scalar_lea.vmem %s13, %s2187
      // Predicated region
      $region73: #{res_stage.2} parent=71 // pred_check
        %p2189 = pneg %p320
      $region74: #{res_stage.2} parent=71 // pred_check_branch
        %2191 = sbr.rel (%p2189) target = $region76
      $region75: #{res_stage.2} parent=71 // pred_region
        _
      $region76: #{res_stage.2} parent=71 // pred_fallthru
        _
    $region72: #{res_stage.2} parent=5 // pred_fallthru
      _
    %p2192 = scmp.le.s32.totalorder 2, %s19
    // Predicated region
    $region77: #{res_stage.2} parent=5 // pred_check
      %p2193 = pneg %p2192
    $region78: #{res_stage.2} parent=5 // pred_check_branch
      %2195 = sbr.rel (%p2193) target = $region80
    $region79: #{res_stage.2} parent=5 // pred_region
      %s2196 = ssub.s32 %s19, 2
      // Predicated region
      $region81: #{res_stage.2} parent=79 // pred_check
        %p2197 = pneg %p326
      $region82: #{res_stage.2} parent=79 // pred_check_branch
        %2199 = sbr.rel (%p2197) target = $region84
      $region83: #{res_stage.2} parent=79 // pred_region
        %p2200 = scmp.lt.s32.totalorder %s25, 1
        %s2201 = scalar_select %p2200, %s25, 1
        %s2202 = smul.addr %s2201, 8
        %s2203 = smul.addr %s2202, 4
        %s2204 = scalar_lea.vmem %s13, %s2203
      $region84: #{res_stage.2} parent=79 // pred_fallthru
        _
    $region80: #{res_stage.2} parent=5 // pred_fallthru
      _
  $region6: #{res_stage.2} parent=0 // loop_footer
    %s23 = sadd.s32 1, %s19
  $region7: #{res_stage.2} parent=0 // loop_footer_branch
    %18 = sbr.rel target = $region3
  $region8: #{res_stage.2} parent=0 // loop_exit
    _

</llo_original>
